<compile_context>
chip_gen: v5e
topology: v5e:2x2
jax: 0.10.0
libtpu: 0.0.40
codegen_flags: <defaults>
</compile_context>

<pallas_src>
import functools

import jax
import jax.numpy as jnp
from jax.experimental import pallas as pl
from jax.experimental.pallas import tpu as pltpu

_EPS = 1e-5
_LANE = 128


def _round_up(n, m):
    return (n + m - 1) // m * m


def _vmem_limit_bytes():
    """~75% of this chip's VMEM (~48 MiB on v7x, ~96 MiB on v5e/v6e)."""
    try:
        cap = int(pltpu.get_tpu_info().vmem_capacity_bytes)
    except Exception:
        cap = 64 * 1024 * 1024
    return max(32 * 1024 * 1024, min(cap * 3 // 4, 100 * 1024 * 1024))


_VMEM_LIMIT = _vmem_limit_bytes()


# ------------------------------- kernel helpers -------------------------------

def _bn_scale_shift(acc, gamma, beta):
    """Training-mode BatchNorm scale/shift for a (rows, C) f32 matrix.

    Fused single-pass statistics (sum + sum of squares), biased variance, matching
    torch.nn.BatchNorm2d's training-mode forward.
    """
    inv_r = 1.0 / acc.shape[0]
    s1 = jnp.sum(acc, axis=0, keepdims=True)
    s2 = jnp.sum(acc * acc, axis=0, keepdims=True)
    mean = s1 * inv_r
    var = s2 * inv_r - mean * mean
    scale = gamma * jax.lax.rsqrt(var + _EPS)
    shift = beta - mean * scale
    return scale, shift


def _im2col(xh, H, W, k_pad):
    """H-padded (N, H+2, W, C) activation -> (N*H*W, k_pad) patch matrix (same dtype).

    Tap t = kh*3+kw of a row (n,h,w) holds x[n, h+kh-1, w+kw-1, :] (zero outside).
    Taps are packed contiguously along lanes (true K = 9*C); one trailing zero block
    pads K up to k_pad (a multiple of 128) -- no per-tap 128 padding.
    """
    n, _, _, c = xh.shape
    zcol = jnp.zeros_like(xh[:, :, :1, :])
    shifted = (
        jnp.concatenate([zcol, xh[:, :, :W - 1, :]], axis=2),   # needs x[.., w-1, ..]
        xh,                                                      # needs x[.., w,   ..]
        jnp.concatenate([xh[:, :, 1:, :], zcol], axis=2),        # needs x[.., w+1, ..]
    )
    blocks = [shifted[kw][:, kh:kh + H, :, :] for kh in range(3) for kw in range(3)]
    if k_pad > 9 * c:
        blocks.append(jnp.zeros((n, H, W, k_pad - 9 * c), xh.dtype))
    patches = jnp.concatenate(blocks, axis=-1)                   # (N, H, W, k_pad)
    return patches.reshape(n * H * W, k_pad)


def _basic_block_kernel(x_ref, w1c_ref, g1_ref, b1_ref,
                        w2_ref, g2_ref, b2_ref, gsc_ref, bsc_ref,
                        o_ref, h1h_ref, *, proj: bool):
    N, H, W, Cin = x_ref.shape
    Cp = o_ref.shape[-1]                     # lane-padded output channels
    R = N * H * W
    K1 = w1c_ref.shape[0]

    # ---- conv1 (+ fused 1x1 projection shortcut): ONE MXU matmul -------------
    # Cast to bf16 once; conv halo H-pad built in-value (no wrapper HBM pad pass).
    x_bf = x_ref[...].astype(jnp.bfloat16)
    zrow_in = jnp.zeros((N, 1, W, Cin), jnp.bfloat16)
    xh_bf = jnp.concatenate([zrow_in, x_bf, zrow_in], axis=1)    # (N, H+2, W, Cin)

    p1 = _im2col(xh_bf, H, W, K1)                                # (R, K1) bf16
    acc = jnp.dot(p1, w1c_ref[...], preferred_element_type=jnp.float32)
    acc1 = acc[:, :Cp]                                           # conv1 part

    sa, ta = _bn_scale_shift(acc1, g1_ref[...], b1_ref[...])
    h1 = jnp.maximum(acc1 * sa + ta, 0.0).astype(jnp.bfloat16)   # one fused sweep

    # ---- BN1+ReLU output written straight into the zero-haloed bf16 scratch --
    zrow_mid = jnp.zeros((N, 1, W, Cp), jnp.bfloat16)
    h1h_ref[:, 0:1, :, :] = zrow_mid
    h1h_ref[:, H + 1:H + 2, :, :] = zrow_mid
    h1h_ref[:, 1:H + 1, :, :] = h1.reshape(N, H, W, Cp)

    # ---- conv2 ----------------------------------------------------------------
    p2 = _im2col(h1h_ref[...], H, W, w2_ref.shape[0])            # (R, 9*Cp) bf16
    acc2 = jnp.dot(p2, w2_ref[...], preferred_element_type=jnp.float32)
    sb, tb = _bn_scale_shift(acc2, g2_ref[...], b2_ref[...])
    h2 = acc2 * sb + tb

    # ---- shortcut -------------------------------------------------------------
    if proj:
        scc = acc[:, Cp:]                                        # fused 1x1 conv output
        ss, ts = _bn_scale_shift(scc, gsc_ref[...], bsc_ref[...])
        sc = scc * ss + ts
    else:
        sc = x_ref[...].reshape(R, Cin)                          # identity shortcut
        if Cp > Cin:
            sc = jnp.pad(sc, ((0, 0), (0, Cp - Cin)))

    out = jnp.maximum(h2 + sc, 0.0)
    o_ref[...] = out.reshape(N, H, W, Cp).astype(o_ref.dtype)    # lane-dense store


# ------------------------------- wrapper / glue --------------------------------

def _prep_w1_fused(w1, wsc, k1_p, cout_p, proj):
    """conv1 (Cout,Cin,3,3) [+ 1x1 shortcut (Cout,Cin,1,1)] -> (k1_p, {1,2}*cout_p) bf16.

    Tap-major packed K (no per-tap padding); the 1x1 shortcut weight occupies the
    center-tap rows (4*Cin .. 5*Cin) of the second cout_p column block.
    """
    cout, cin = w1.shape[0], w1.shape[1]
    w = jnp.transpose(w1, (2, 3, 1, 0)).reshape(9 * cin, cout)   # rows: (kh,kw,ci)
    w = jnp.pad(w, ((0, k1_p - 9 * cin), (0, cout_p - cout)))
    if proj:
        ws = jnp.transpose(wsc[:, :, 0, 0], (1, 0))              # (Cin, Cout)
        ws = jnp.pad(ws, ((4 * cin, k1_p - 5 * cin), (0, cout_p - cout)))
        w = jnp.concatenate([w, ws], axis=1)                     # (k1_p, 2*cout_p)
    return w.astype(jnp.bfloat16)


def _prep_w2(w2, cout_p):
    """conv2 (Cout,Cout,3,3) -> (9*cout_p, cout_p) bf16 (input channels lane-padded)."""
    cout, cin = w2.shape[0], w2.shape[1]
    w = jnp.transpose(w2, (2, 3, 1, 0))                          # (3,3,Cin,Cout)
    w = jnp.pad(w, ((0, 0), (0, 0), (0, cout_p - cin), (0, cout_p - cout)))
    return w.reshape(9 * cout_p, cout_p).astype(jnp.bfloat16)


def _prep_bn(g, b, c_p):
    c = g.shape[0]
    g = jnp.pad(g, (0, c_p - c), constant_values=1.0).reshape(1, c_p)
    b = jnp.pad(b, (0, c_p - c)).reshape(1, c_p)
    return g.astype(jnp.float32), b.astype(jnp.float32)


def init_params(key, in_planes, planes):
    """Deterministic parameter init mirroring the nn.Module's shapes."""
    k1, k2, k3 = jax.random.split(key, 3)
    return {
        "conv1_w": jax.random.normal(k1, (planes, in_planes, 3, 3), jnp.float32) * 0.1,
        "bn1_g": jnp.ones((planes,), jnp.float32),
        "bn1_b": jnp.zeros((planes,), jnp.float32),
        "conv2_w": jax.random.normal(k2, (planes, planes, 3, 3), jnp.float32) * 0.1,
        "bn2_g": jnp.ones((planes,), jnp.float32),
        "bn2_b": jnp.zeros((planes,), jnp.float32),
        "sc_w": jax.random.normal(k3, (planes, in_planes, 1, 1), jnp.float32) * 0.1,
        "sc_g": jnp.ones((planes,), jnp.float32),
        "sc_b": jnp.zeros((planes,), jnp.float32),
    }


@functools.partial(jax.jit, static_argnames=("stride",))
def basic_block_res_nhwc(x_nhwc, params, stride=1):
    """Fused BasicBlock_res on NHWC activations (channels on lanes)."""
    if stride != 1:
        # TODO(synk): strided conv1 / strided 1x1 shortcut (downsampling blocks).
        raise NotImplementedError("only stride=1 is implemented")

    N, H, W, Cin = x_nhwc.shape
    Cout = params["conv1_w"].shape[0]
    proj = Cin != Cout
    cout_p = _round_up(Cout, _LANE)
    k1_p = _round_up(9 * Cin, _LANE)     # packed-tap K, no per-tap 128 padding

    x = x_nhwc.astype(jnp.float32)
    w1c = _prep_w1_fused(params["conv1_w"], params["sc_w"], k1_p, cout_p, proj)
    w2 = _prep_w2(params["conv2_w"], cout_p)
    g1, b1 = _prep_bn(params["bn1_g"], params["bn1_b"], cout_p)
    g2, b2 = _prep_bn(params["bn2_g"], params["bn2_b"], cout_p)
    gsc, bsc = _prep_bn(params["sc_g"], params["sc_b"], cout_p)

    # TODO(synk): for realistic ResNet shapes on v7x (64 MiB VMEM), split into a
    # row-tiled grid (BlockSpec double-buffering, "parallel" batch/row axis for the
    # two TensorCores) with two-phase BN (per-tile s1/s2 partial sums accumulated
    # over an "arbitrary" axis + a normalize pass) so batch statistics stay global.
    # Here the whole (small) block is VMEM-resident in one invocation, keeping the
    # training-mode BN statistics exact.
    out_nhwc = pl.pallas_call(
        functools.partial(_basic_block_kernel, proj=proj),
        out_shape=jax.ShapeDtypeStruct((N, H, W, cout_p), jnp.float32),
        in_specs=[pl.BlockSpec(memory_space=pltpu.MemorySpace.VMEM)] * 9,
        out_specs=pl.BlockSpec(memory_space=pltpu.MemorySpace.VMEM),
        scratch_shapes=[pltpu.VMEM((N, H + 2, W, cout_p), jnp.bfloat16)],
        compiler_params=pltpu.CompilerParams(vmem_limit_bytes=_VMEM_LIMIT),
    )(x, w1c, g1, b1, w2, g2, b2, gsc, bsc)

    return out_nhwc[:, :, :, :Cout]


def basic_block_res(x_nchw, params, stride=1):
    """NCHW (PyTorch-layout) shim around the NHWC kernel.

    TODO(synk): in a full network keep activations NHWC across blocks to avoid these
    per-block layout transposes (extra XLA HBM passes outside the kernel).
    """
    x_nhwc = jnp.transpose(x_nchw, (0, 2, 3, 1))
    out = basic_block_res_nhwc(x_nhwc, params, stride=stride)
    return jnp.transpose(out, (0, 3, 1, 2)).astype(x_nchw.dtype)


def _reference(x, params):
    """Pure-JAX/XLA reference of the PyTorch forward (training-mode BN)."""
    dn = ("NCHW", "OIHW", "NCHW")

    def bn(y, g, b):
        mean = jnp.mean(y, axis=(0, 2, 3), keepdims=True)
        var = jnp.mean((y - mean) ** 2, axis=(0, 2, 3), keepdims=True)
        return ((y - mean) * jax.lax.rsqrt(var + _EPS)
                * g.reshape(1, -1, 1, 1) + b.reshape(1, -1, 1, 1))

    out = jax.lax.conv_general_dilated(x, params["conv1_w"], (1, 1),
                                       ((1, 1), (1, 1)), dimension_numbers=dn)
    out = jax.nn.relu(bn(out, params["bn1_g"], params["bn1_b"]))
    out = jax.lax.conv_general_dilated(out, params["conv2_w"], (1, 1),
                                       ((1, 1), (1, 1)), dimension_numbers=dn)
    out = bn(out, params["bn2_g"], params["bn2_b"])
    if x.shape[1] != params["conv1_w"].shape[0]:
        sc = jax.lax.conv_general_dilated(x, params["sc_w"], (1, 1),
                                          ((0, 0), (0, 0)), dimension_numbers=dn)
        sc = bn(sc, params["sc_g"], params["sc_b"])
    else:
        sc = x
    return jax.nn.relu(out + sc)


if __name__ == "__main__":
    key = jax.random.PRNGKey(0)
    kx, kp = jax.random.split(key)

    in_planes, planes, stride = 4, 8, 1          # Cin != Cout -> projection shortcut
    x = jax.random.normal(kx, (2, in_planes, 16, 16), jnp.float32)  # NCHW
    params = init_params(kp, in_planes, planes)

    out = basic_block_res(x, params, stride=stride)
    jax.block_until_ready(out)

    assert out.shape == (2, planes, 16, 16)
    assert bool(jnp.all(out >= 0.0))             # final ReLU

    ref = _reference(x, params)
    err = float(jnp.max(jnp.abs(out - ref)))
    assert err < 0.15, f"mismatch vs reference: {err}"  # bf16-matmul tolerance

    print("KERNEL_OK")
</pallas_src>

<mosaic_0001>
module attributes {stable_mosaic.version = 11 : i64} {
  func.func @_basic_block_kernel(%arg0: memref<2x16x16x4xf32, #tpu.memory_space<vmem>>, %arg1: memref<128x256xbf16, #tpu.memory_space<vmem>>, %arg2: memref<1x128xf32, #tpu.memory_space<vmem>>, %arg3: memref<1x128xf32, #tpu.memory_space<vmem>>, %arg4: memref<1152x128xbf16, #tpu.memory_space<vmem>>, %arg5: memref<1x128xf32, #tpu.memory_space<vmem>>, %arg6: memref<1x128xf32, #tpu.memory_space<vmem>>, %arg7: memref<1x128xf32, #tpu.memory_space<vmem>>, %arg8: memref<1x128xf32, #tpu.memory_space<vmem>>, %arg9: memref<2x16x16x128xf32, #tpu.memory_space<vmem>>, %arg10: memref<2x18x16x128xbf16, #tpu.memory_space<vmem>>) attributes {dimension_semantics = [], scalar_prefetch = 0 : i64, scratch_operands = 1 : i64, tpu.core_type = #tpu.core_type<tc>} {
    %c0 = arith.constant 0 : index
    %c0_0 = arith.constant 0 : index
    %c0_1 = arith.constant 0 : index
    %c0_2 = arith.constant 0 : index
    %0 = vector.load %arg0[%c0, %c0_0, %c0_1, %c0_2] : memref<2x16x16x4xf32, #tpu.memory_space<vmem>>, vector<2x16x16x4xf32>
    %1 = arith.truncf %0 : vector<2x16x16x4xf32> to vector<2x16x16x4xbf16>
    %cst = arith.constant 0.000000e+00 : bf16
    %2 = vector.broadcast %cst : bf16 to vector<2x1x16x4xbf16>
    %3 = tpu.concatenate %2, %1, %2 in 1 : vector<2x1x16x4xbf16>, vector<2x16x16x4xbf16>, vector<2x1x16x4xbf16> -> vector<2x18x16x4xbf16>
    %cst_3 = arith.constant 0.000000e+00 : bf16
    %4 = vector.broadcast %cst_3 : bf16 to vector<2x18x1x4xbf16>
    %5 = vector.extract_strided_slice %3 {offsets = [0, 0, 0, 0], sizes = [2, 18, 15, 4], strides = [1, 1, 1, 1]} : vector<2x18x16x4xbf16> to vector<2x18x15x4xbf16>
    %6 = tpu.concatenate %4, %5 in 2 : vector<2x18x1x4xbf16>, vector<2x18x15x4xbf16> -> vector<2x18x16x4xbf16>
    %7 = vector.extract_strided_slice %3 {offsets = [0, 0, 1, 0], sizes = [2, 18, 15, 4], strides = [1, 1, 1, 1]} : vector<2x18x16x4xbf16> to vector<2x18x15x4xbf16>
    %8 = tpu.concatenate %7, %4 in 2 : vector<2x18x15x4xbf16>, vector<2x18x1x4xbf16> -> vector<2x18x16x4xbf16>
    %9 = vector.extract_strided_slice %6 {offsets = [0, 0, 0, 0], sizes = [2, 16, 16, 4], strides = [1, 1, 1, 1]} : vector<2x18x16x4xbf16> to vector<2x16x16x4xbf16>
    %10 = vector.extract_strided_slice %3 {offsets = [0, 0, 0, 0], sizes = [2, 16, 16, 4], strides = [1, 1, 1, 1]} : vector<2x18x16x4xbf16> to vector<2x16x16x4xbf16>
    %11 = vector.extract_strided_slice %8 {offsets = [0, 0, 0, 0], sizes = [2, 16, 16, 4], strides = [1, 1, 1, 1]} : vector<2x18x16x4xbf16> to vector<2x16x16x4xbf16>
    %12 = vector.extract_strided_slice %6 {offsets = [0, 1, 0, 0], sizes = [2, 16, 16, 4], strides = [1, 1, 1, 1]} : vector<2x18x16x4xbf16> to vector<2x16x16x4xbf16>
    %13 = vector.extract_strided_slice %3 {offsets = [0, 1, 0, 0], sizes = [2, 16, 16, 4], strides = [1, 1, 1, 1]} : vector<2x18x16x4xbf16> to vector<2x16x16x4xbf16>
    %14 = vector.extract_strided_slice %8 {offsets = [0, 1, 0, 0], sizes = [2, 16, 16, 4], strides = [1, 1, 1, 1]} : vector<2x18x16x4xbf16> to vector<2x16x16x4xbf16>
    %15 = vector.extract_strided_slice %6 {offsets = [0, 2, 0, 0], sizes = [2, 16, 16, 4], strides = [1, 1, 1, 1]} : vector<2x18x16x4xbf16> to vector<2x16x16x4xbf16>
    %16 = vector.extract_strided_slice %3 {offsets = [0, 2, 0, 0], sizes = [2, 16, 16, 4], strides = [1, 1, 1, 1]} : vector<2x18x16x4xbf16> to vector<2x16x16x4xbf16>
    %17 = vector.extract_strided_slice %8 {offsets = [0, 2, 0, 0], sizes = [2, 16, 16, 4], strides = [1, 1, 1, 1]} : vector<2x18x16x4xbf16> to vector<2x16x16x4xbf16>
    %cst_4 = arith.constant 0.000000e+00 : bf16
    %18 = vector.broadcast %cst_4 : bf16 to vector<2x16x16x92xbf16>
    %19 = tpu.concatenate %9, %10, %11, %12, %13, %14, %15, %16, %17, %18 in 3 : vector<2x16x16x4xbf16>, vector<2x16x16x4xbf16>, vector<2x16x16x4xbf16>, vector<2x16x16x4xbf16>, vector<2x16x16x4xbf16>, vector<2x16x16x4xbf16>, vector<2x16x16x4xbf16>, vector<2x16x16x4xbf16>, vector<2x16x16x4xbf16>, vector<2x16x16x92xbf16> -> vector<2x16x16x128xbf16>
    %20 = vector.shape_cast %19 : vector<2x16x16x128xbf16> to vector<512x128xbf16>
    %c0_5 = arith.constant 0 : index
    %c0_6 = arith.constant 0 : index
    %21 = vector.load %arg1[%c0_5, %c0_6] : memref<128x256xbf16, #tpu.memory_space<vmem>>, vector<128x256xbf16>
    %cst_7 = arith.constant dense<0.000000e+00> : vector<512x256xf32>
    %22 = tpu.matmul %20, %21, %cst_7 {dimension_numbers = #tpu.dot_dimension_numbers<[1], [0], [0], [1], [0, 0, 1, 1], [], []>} : vector<512x128xbf16>, vector<128x256xbf16>, vector<512x256xf32> -> vector<512x256xf32>
    %23 = vector.extract_strided_slice %22 {offsets = [0, 0], sizes = [512, 128], strides = [1, 1]} : vector<512x256xf32> to vector<512x128xf32>
    %c0_8 = arith.constant 0 : index
    %c0_9 = arith.constant 0 : index
    %24 = vector.load %arg2[%c0_8, %c0_9] : memref<1x128xf32, #tpu.memory_space<vmem>>, vector<1x128xf32>
    %c0_10 = arith.constant 0 : index
    %c0_11 = arith.constant 0 : index
    %25 = vector.load %arg3[%c0_10, %c0_11] : memref<1x128xf32, #tpu.memory_space<vmem>>, vector<1x128xf32>
    %cst_12 = arith.constant dense<0.000000e+00> : vector<128xf32>
    %26 = vector.multi_reduction <add>, %23, %cst_12 [0] : vector<512x128xf32> to vector<128xf32>
    %27 = vector.shape_cast %26 : vector<128xf32> to vector<1x128xf32>
    %28 = arith.mulf %23, %23 : vector<512x128xf32>
    %cst_13 = arith.constant dense<0.000000e+00> : vector<128xf32>
    %29 = vector.multi_reduction <add>, %28, %cst_13 [0] : vector<512x128xf32> to vector<128xf32>
    %30 = vector.shape_cast %29 : vector<128xf32> to vector<1x128xf32>
    %cst_14 = arith.constant 0.001953125 : f32
    %31 = vector.broadcast %cst_14 : f32 to vector<1x128xf32>
    %32 = arith.mulf %27, %31 : vector<1x128xf32>
    %cst_15 = arith.constant 0.001953125 : f32
    %33 = vector.broadcast %cst_15 : f32 to vector<1x128xf32>
    %34 = arith.mulf %30, %33 : vector<1x128xf32>
    %35 = arith.mulf %32, %32 : vector<1x128xf32>
    %36 = arith.subf %34, %35 : vector<1x128xf32>
    %cst_16 = arith.constant 9.99999974E-6 : f32
    %37 = vector.broadcast %cst_16 : f32 to vector<1x128xf32>
    %38 = arith.addf %36, %37 : vector<1x128xf32>
    %39 = math.rsqrt %38 : vector<1x128xf32>
    %40 = arith.mulf %24, %39 : vector<1x128xf32>
    %41 = arith.mulf %32, %40 : vector<1x128xf32>
    %42 = arith.subf %25, %41 : vector<1x128xf32>
    %43 = vector.broadcast %40 : vector<1x128xf32> to vector<512x128xf32>
    %44 = arith.mulf %23, %43 : vector<512x128xf32>
    %45 = vector.broadcast %42 : vector<1x128xf32> to vector<512x128xf32>
    %46 = arith.addf %44, %45 : vector<512x128xf32>
    %cst_17 = arith.constant 0.000000e+00 : f32
    %47 = vector.broadcast %cst_17 : f32 to vector<512x128xf32>
    %48 = arith.maximumf %46, %47 : vector<512x128xf32>
    %49 = arith.truncf %48 : vector<512x128xf32> to vector<512x128xbf16>
    %cst_18 = arith.constant 0.000000e+00 : bf16
    %50 = vector.broadcast %cst_18 : bf16 to vector<2x1x16x128xbf16>
    %c0_19 = arith.constant 0 : index
    %c0_20 = arith.constant 0 : index
    %c0_21 = arith.constant 0 : index
    %c0_22 = arith.constant 0 : index
    %51 = vector.load %arg10[%c0_19, %c0_20, %c0_21, %c0_22] : memref<2x18x16x128xbf16, #tpu.memory_space<vmem>>, vector<2x1x16x128xbf16>
    tpu.vector_store %arg10[%c0_19, %c0_20, %c0_21, %c0_22], %50 {strides = array<i32>} : memref<2x18x16x128xbf16, #tpu.memory_space<vmem>>, vector<2x1x16x128xbf16>,
    %c0_23 = arith.constant 0 : index
    %c17 = arith.constant 17 : index
    %c0_24 = arith.constant 0 : index
    %c0_25 = arith.constant 0 : index
    %52 = vector.load %arg10[%c0_23, %c17, %c0_24, %c0_25] : memref<2x18x16x128xbf16, #tpu.memory_space<vmem>>, vector<2x1x16x128xbf16>
    tpu.vector_store %arg10[%c0_23, %c17, %c0_24, %c0_25], %50 {strides = array<i32>} : memref<2x18x16x128xbf16, #tpu.memory_space<vmem>>, vector<2x1x16x128xbf16>,
    %53 = vector.shape_cast %49 : vector<512x128xbf16> to vector<2x16x16x128xbf16>
    %c0_26 = arith.constant 0 : index
    %c1 = arith.constant 1 : index
    %c0_27 = arith.constant 0 : index
    %c0_28 = arith.constant 0 : index
    %54 = vector.load %arg10[%c0_26, %c1, %c0_27, %c0_28] : memref<2x18x16x128xbf16, #tpu.memory_space<vmem>>, vector<2x16x16x128xbf16>
    tpu.vector_store %arg10[%c0_26, %c1, %c0_27, %c0_28], %53 {strides = array<i32>} : memref<2x18x16x128xbf16, #tpu.memory_space<vmem>>, vector<2x16x16x128xbf16>,
    %c0_29 = arith.constant 0 : index
    %c0_30 = arith.constant 0 : index
    %c0_31 = arith.constant 0 : index
    %c0_32 = arith.constant 0 : index
    %55 = vector.load %arg10[%c0_29, %c0_30, %c0_31, %c0_32] : memref<2x18x16x128xbf16, #tpu.memory_space<vmem>>, vector<2x18x16x128xbf16>
    %cst_33 = arith.constant 0.000000e+00 : bf16
    %56 = vector.broadcast %cst_33 : bf16 to vector<2x18x1x128xbf16>
    %57 = vector.extract_strided_slice %55 {offsets = [0, 0, 0, 0], sizes = [2, 18, 15, 128], strides = [1, 1, 1, 1]} : vector<2x18x16x128xbf16> to vector<2x18x15x128xbf16>
    %58 = tpu.concatenate %56, %57 in 2 : vector<2x18x1x128xbf16>, vector<2x18x15x128xbf16> -> vector<2x18x16x128xbf16>
    %59 = vector.extract_strided_slice %55 {offsets = [0, 0, 1, 0], sizes = [2, 18, 15, 128], strides = [1, 1, 1, 1]} : vector<2x18x16x128xbf16> to vector<2x18x15x128xbf16>
    %60 = tpu.concatenate %59, %56 in 2 : vector<2x18x15x128xbf16>, vector<2x18x1x128xbf16> -> vector<2x18x16x128xbf16>
    %61 = vector.extract_strided_slice %58 {offsets = [0, 0, 0, 0], sizes = [2, 16, 16, 128], strides = [1, 1, 1, 1]} : vector<2x18x16x128xbf16> to vector<2x16x16x128xbf16>
    %62 = vector.extract_strided_slice %55 {offsets = [0, 0, 0, 0], sizes = [2, 16, 16, 128], strides = [1, 1, 1, 1]} : vector<2x18x16x128xbf16> to vector<2x16x16x128xbf16>
    %63 = vector.extract_strided_slice %60 {offsets = [0, 0, 0, 0], sizes = [2, 16, 16, 128], strides = [1, 1, 1, 1]} : vector<2x18x16x128xbf16> to vector<2x16x16x128xbf16>
    %64 = vector.extract_strided_slice %58 {offsets = [0, 1, 0, 0], sizes = [2, 16, 16, 128], strides = [1, 1, 1, 1]} : vector<2x18x16x128xbf16> to vector<2x16x16x128xbf16>
    %65 = vector.extract_strided_slice %55 {offsets = [0, 1, 0, 0], sizes = [2, 16, 16, 128], strides = [1, 1, 1, 1]} : vector<2x18x16x128xbf16> to vector<2x16x16x128xbf16>
    %66 = vector.extract_strided_slice %60 {offsets = [0, 1, 0, 0], sizes = [2, 16, 16, 128], strides = [1, 1, 1, 1]} : vector<2x18x16x128xbf16> to vector<2x16x16x128xbf16>
    %67 = vector.extract_strided_slice %58 {offsets = [0, 2, 0, 0], sizes = [2, 16, 16, 128], strides = [1, 1, 1, 1]} : vector<2x18x16x128xbf16> to vector<2x16x16x128xbf16>
    %68 = vector.extract_strided_slice %55 {offsets = [0, 2, 0, 0], sizes = [2, 16, 16, 128], strides = [1, 1, 1, 1]} : vector<2x18x16x128xbf16> to vector<2x16x16x128xbf16>
    %69 = vector.extract_strided_slice %60 {offsets = [0, 2, 0, 0], sizes = [2, 16, 16, 128], strides = [1, 1, 1, 1]} : vector<2x18x16x128xbf16> to vector<2x16x16x128xbf16>
    %70 = tpu.concatenate %61, %62, %63, %64, %65, %66, %67, %68, %69 in 3 : vector<2x16x16x128xbf16>, vector<2x16x16x128xbf16>, vector<2x16x16x128xbf16>, vector<2x16x16x128xbf16>, vector<2x16x16x128xbf16>, vector<2x16x16x128xbf16>, vector<2x16x16x128xbf16>, vector<2x16x16x128xbf16>, vector<2x16x16x128xbf16> -> vector<2x16x16x1152xbf16>
    %71 = vector.shape_cast %70 : vector<2x16x16x1152xbf16> to vector<512x1152xbf16>
    %c0_34 = arith.constant 0 : index
    %c0_35 = arith.constant 0 : index
    %72 = vector.load %arg4[%c0_34, %c0_35] : memref<1152x128xbf16, #tpu.memory_space<vmem>>, vector<1152x128xbf16>
    %cst_36 = arith.constant dense<0.000000e+00> : vector<512x128xf32>
    %73 = tpu.matmul %71, %72, %cst_36 {dimension_numbers = #tpu.dot_dimension_numbers<[1], [0], [0], [1], [0, 0, 1, 1], [], []>} : vector<512x1152xbf16>, vector<1152x128xbf16>, vector<512x128xf32> -> vector<512x128xf32>
    %c0_37 = arith.constant 0 : index
    %c0_38 = arith.constant 0 : index
    %74 = vector.load %arg5[%c0_37, %c0_38] : memref<1x128xf32, #tpu.memory_space<vmem>>, vector<1x128xf32>
    %c0_39 = arith.constant 0 : index
    %c0_40 = arith.constant 0 : index
    %75 = vector.load %arg6[%c0_39, %c0_40] : memref<1x128xf32, #tpu.memory_space<vmem>>, vector<1x128xf32>
    %cst_41 = arith.constant dense<0.000000e+00> : vector<128xf32>
    %76 = vector.multi_reduction <add>, %73, %cst_41 [0] : vector<512x128xf32> to vector<128xf32>
    %77 = vector.shape_cast %76 : vector<128xf32> to vector<1x128xf32>
    %78 = arith.mulf %73, %73 : vector<512x128xf32>
    %cst_42 = arith.constant dense<0.000000e+00> : vector<128xf32>
    %79 = vector.multi_reduction <add>, %78, %cst_42 [0] : vector<512x128xf32> to vector<128xf32>
    %80 = vector.shape_cast %79 : vector<128xf32> to vector<1x128xf32>
    %cst_43 = arith.constant 0.001953125 : f32
    %81 = vector.broadcast %cst_43 : f32 to vector<1x128xf32>
    %82 = arith.mulf %77, %81 : vector<1x128xf32>
    %cst_44 = arith.constant 0.001953125 : f32
    %83 = vector.broadcast %cst_44 : f32 to vector<1x128xf32>
    %84 = arith.mulf %80, %83 : vector<1x128xf32>
    %85 = arith.mulf %82, %82 : vector<1x128xf32>
    %86 = arith.subf %84, %85 : vector<1x128xf32>
    %cst_45 = arith.constant 9.99999974E-6 : f32
    %87 = vector.broadcast %cst_45 : f32 to vector<1x128xf32>
    %88 = arith.addf %86, %87 : vector<1x128xf32>
    %89 = math.rsqrt %88 : vector<1x128xf32>
    %90 = arith.mulf %74, %89 : vector<1x128xf32>
    %91 = arith.mulf %82, %90 : vector<1x128xf32>
    %92 = arith.subf %75, %91 : vector<1x128xf32>
    %93 = vector.broadcast %90 : vector<1x128xf32> to vector<512x128xf32>
    %94 = arith.mulf %73, %93 : vector<512x128xf32>
    %95 = vector.broadcast %92 : vector<1x128xf32> to vector<512x128xf32>
    %96 = arith.addf %94, %95 : vector<512x128xf32>
    %97 = vector.extract_strided_slice %22 {offsets = [0, 128], sizes = [512, 128], strides = [1, 1]} : vector<512x256xf32> to vector<512x128xf32>
    %c0_46 = arith.constant 0 : index
    %c0_47 = arith.constant 0 : index
    %98 = vector.load %arg7[%c0_46, %c0_47] : memref<1x128xf32, #tpu.memory_space<vmem>>, vector<1x128xf32>
    %c0_48 = arith.constant 0 : index
    %c0_49 = arith.constant 0 : index
    %99 = vector.load %arg8[%c0_48, %c0_49] : memref<1x128xf32, #tpu.memory_space<vmem>>, vector<1x128xf32>
    %cst_50 = arith.constant dense<0.000000e+00> : vector<128xf32>
    %100 = vector.multi_reduction <add>, %97, %cst_50 [0] : vector<512x128xf32> to vector<128xf32>
    %101 = vector.shape_cast %100 : vector<128xf32> to vector<1x128xf32>
    %102 = arith.mulf %97, %97 : vector<512x128xf32>
    %cst_51 = arith.constant dense<0.000000e+00> : vector<128xf32>
    %103 = vector.multi_reduction <add>, %102, %cst_51 [0] : vector<512x128xf32> to vector<128xf32>
    %104 = vector.shape_cast %103 : vector<128xf32> to vector<1x128xf32>
    %cst_52 = arith.constant 0.001953125 : f32
    %105 = vector.broadcast %cst_52 : f32 to vector<1x128xf32>
    %106 = arith.mulf %101, %105 : vector<1x128xf32>
    %cst_53 = arith.constant 0.001953125 : f32
    %107 = vector.broadcast %cst_53 : f32 to vector<1x128xf32>
    %108 = arith.mulf %104, %107 : vector<1x128xf32>
    %109 = arith.mulf %106, %106 : vector<1x128xf32>
    %110 = arith.subf %108, %109 : vector<1x128xf32>
    %cst_54 = arith.constant 9.99999974E-6 : f32
    %111 = vector.broadcast %cst_54 : f32 to vector<1x128xf32>
    %112 = arith.addf %110, %111 : vector<1x128xf32>
    %113 = math.rsqrt %112 : vector<1x128xf32>
    %114 = arith.mulf %98, %113 : vector<1x128xf32>
    %115 = arith.mulf %106, %114 : vector<1x128xf32>
    %116 = arith.subf %99, %115 : vector<1x128xf32>
    %117 = vector.broadcast %114 : vector<1x128xf32> to vector<512x128xf32>
    %118 = arith.mulf %97, %117 : vector<512x128xf32>
    %119 = vector.broadcast %116 : vector<1x128xf32> to vector<512x128xf32>
    %120 = arith.addf %118, %119 : vector<512x128xf32>
    %121 = arith.addf %96, %120 : vector<512x128xf32>
    %cst_55 = arith.constant 0.000000e+00 : f32
    %122 = vector.broadcast %cst_55 : f32 to vector<512x128xf32>
    %123 = arith.maximumf %121, %122 : vector<512x128xf32>
    %124 = vector.shape_cast %123 : vector<512x128xf32> to vector<2x16x16x128xf32>
    %c0_56 = arith.constant 0 : index
    %c0_57 = arith.constant 0 : index
    %c0_58 = arith.constant 0 : index
    %c0_59 = arith.constant 0 : index
    %125 = vector.load %arg9[%c0_56, %c0_57, %c0_58, %c0_59] : memref<2x16x16x128xf32, #tpu.memory_space<vmem>>, vector<2x16x16x128xf32>
    tpu.vector_store %arg9[%c0_56, %c0_57, %c0_58, %c0_59], %124 {strides = array<i32>} : memref<2x16x16x128xf32, #tpu.memory_space<vmem>>, vector<2x16x16x128xf32>,
    return
  }
}

</mosaic_0001>

<llo_original>
// kernel: basic_block_res_nhwc.1
$region0: #{basic_block_res_nhwc.1}
  #allocation0 [shape = 'u32[]', space=smem, size = 0x4, offset = 0x4, fixed_abs, tag = 'smem constant byte address 0x4 - core index']
  #allocation1 [shape = 'u32[72,128]{1,0:T(1,128)}', space=vmem, size = 0x9000, scoped, tag = 'internal scratch']
  #allocation2 [shape = 'bf16[2,18,16,128]{3,2,1,0:T(8,128)(2,1)}', space=vmem, size = 0x24000, scoped, tag = 'scratch operand']
  %s0 = inlined_call_operand.vmem [shape: f32[2,16,16,4], index: 0, kind: input, shape index: {}]
  %s1 = inlined_call_operand.vmem [shape: bf16[128,256], index: 1, kind: input, shape index: {}]
  %s2 = inlined_call_operand.vmem [shape: f32[1,128], index: 2, kind: input, shape index: {}]
  %s3 = inlined_call_operand.vmem [shape: f32[1,128], index: 3, kind: input, shape index: {}]
  %s4 = inlined_call_operand.vmem [shape: bf16[1152,128], index: 4, kind: input, shape index: {}]
  %s5 = inlined_call_operand.vmem [shape: f32[1,128], index: 5, kind: input, shape index: {}]
  %s6 = inlined_call_operand.vmem [shape: f32[1,128], index: 6, kind: input, shape index: {}]
  %s7 = inlined_call_operand.vmem [shape: f32[1,128], index: 7, kind: input, shape index: {}]
  %s8 = inlined_call_operand.vmem [shape: f32[1,128], index: 8, kind: input, shape index: {}]
  %s9 = inlined_call_operand.vmem [shape: f32[2,16,16,128], index: 9, kind: output, shape index: {}]
  %s10 = sld [smem:[#allocation0]]
  $region46: #{basic_block_res_nhwc.1} parent=0
    _
  %s12 = ssub.s32 1, %s10
  %s13 = scalar_select 0, %s12, %s10
  // Predicated region
  $region2: #{basic_block_res_nhwc.1} parent=0 // pred_check
    _
  $region3: #{basic_block_res_nhwc.1} parent=0 // pred_check_branch
    %15 = sbr.rel (0) target = $region5
  $region4: #{basic_block_res_nhwc.1} parent=0 // pred_region
    _
  $region5: #{basic_block_res_nhwc.1} parent=0 // pred_fallthru
    _
  // Predicated region
  $region6: #{basic_block_res_nhwc.1} parent=0 // pred_check
    _
  $region7: #{basic_block_res_nhwc.1} parent=0 // pred_check_branch
    %17 = sbr.rel (0) target = $region9
  $region8: #{basic_block_res_nhwc.1} parent=0 // pred_region
    _
  $region9: #{basic_block_res_nhwc.1} parent=0 // pred_fallthru
    _
  // Predicated region
  $region10: #{basic_block_res_nhwc.1} parent=0 // pred_check
    _
  $region11: #{basic_block_res_nhwc.1} parent=0 // pred_check_branch
    %19 = sbr.rel (0) target = $region13
  $region12: #{basic_block_res_nhwc.1} parent=0 // pred_region
    _
  $region13: #{basic_block_res_nhwc.1} parent=0 // pred_fallthru
    _
  // Predicated region
  $region14: #{basic_block_res_nhwc.1} parent=0 // pred_check
    _
  $region15: #{basic_block_res_nhwc.1} parent=0 // pred_check_branch
    %21 = sbr.rel (0) target = $region17
  $region16: #{basic_block_res_nhwc.1} parent=0 // pred_region
    _
  $region17: #{basic_block_res_nhwc.1} parent=0 // pred_fallthru
    _
  // Predicated region
  $region18: #{basic_block_res_nhwc.1} parent=0 // pred_check
    _
  $region19: #{basic_block_res_nhwc.1} parent=0 // pred_check_branch
    %23 = sbr.rel (0) target = $region21
  $region20: #{basic_block_res_nhwc.1} parent=0 // pred_region
    _
  $region21: #{basic_block_res_nhwc.1} parent=0 // pred_fallthru
    _
  // Predicated region
  $region22: #{basic_block_res_nhwc.1} parent=0 // pred_check
    _
  $region23: #{basic_block_res_nhwc.1} parent=0 // pred_check_branch
    %25 = sbr.rel (0) target = $region25
  $region24: #{basic_block_res_nhwc.1} parent=0 // pred_region
    _
  $region25: #{basic_block_res_nhwc.1} parent=0 // pred_fallthru
    _
  // Predicated region
  $region26: #{basic_block_res_nhwc.1} parent=0 // pred_check
    _
  $region27: #{basic_block_res_nhwc.1} parent=0 // pred_check_branch
    %27 = sbr.rel (0) target = $region29
  $region28: #{basic_block_res_nhwc.1} parent=0 // pred_region
    _
  $region29: #{basic_block_res_nhwc.1} parent=0 // pred_fallthru
    _
  // Predicated region
  $region30: #{basic_block_res_nhwc.1} parent=0 // pred_check
    _
  $region31: #{basic_block_res_nhwc.1} parent=0 // pred_check_branch
    %29 = sbr.rel (0) target = $region33
  $region32: #{basic_block_res_nhwc.1} parent=0 // pred_region
    _
  $region33: #{basic_block_res_nhwc.1} parent=0 // pred_fallthru
    _
  // Predicated region
  $region34: #{basic_block_res_nhwc.1} parent=0 // pred_check
    _
  $region35: #{basic_block_res_nhwc.1} parent=0 // pred_check_branch
    %31 = sbr.rel (0) target = $region37
  $region36: #{basic_block_res_nhwc.1} parent=0 // pred_region
    _
  $region37: #{basic_block_res_nhwc.1} parent=0 // pred_fallthru
    _
  %v33 = vld [vmem:[%s0] sm:$0xff]
  %v34 = vld [vmem:[%s0 + $0x8] sm:$0xff]
  %v35 = vld [vmem:[%s0 + $0x10] sm:$0xff]
  %v36 = vld [vmem:[%s0 + $0x18] sm:$0xff]
  %v37 = vld [vmem:[%s0 + $0x20] sm:$0xff]
  %v38 = vld [vmem:[%s0 + $0x28] sm:$0xff]
  %v39 = vld [vmem:[%s0 + $0x30] sm:$0xff]
  %v40 = vld [vmem:[%s0 + $0x38] sm:$0xff]
  %v41 = vld [vmem:[%s0 + $0x40] sm:$0xff]
  %v42 = vld [vmem:[%s0 + $0x48] sm:$0xff]
  %v43 = vld [vmem:[%s0 + $0x50] sm:$0xff]
  %v44 = vld [vmem:[%s0 + $0x58] sm:$0xff]
  %v45 = vld [vmem:[%s0 + $0x60] sm:$0xff]
  %v46 = vld [vmem:[%s0 + $0x68] sm:$0xff]
  %v47 = vld [vmem:[%s0 + $0x70] sm:$0xff]
  %v48 = vld [vmem:[%s0 + $0x78] sm:$0xff]
  %v49 = vld [vmem:[%s0 + $0x80] sm:$0xff]
  %v50 = vld [vmem:[%s0 + $0x88] sm:$0xff]
  %v51 = vld [vmem:[%s0 + $0x90] sm:$0xff]
  %v52 = vld [vmem:[%s0 + $0x98] sm:$0xff]
  %v53 = vld [vmem:[%s0 + $0xa0] sm:$0xff]
  %v54 = vld [vmem:[%s0 + $0xa8] sm:$0xff]
  %v55 = vld [vmem:[%s0 + $0xb0] sm:$0xff]
  %v56 = vld [vmem:[%s0 + $0xb8] sm:$0xff]
  %v57 = vld [vmem:[%s0 + $0xc0] sm:$0xff]
  %v58 = vld [vmem:[%s0 + $0xc8] sm:$0xff]
  %v59 = vld [vmem:[%s0 + $0xd0] sm:$0xff]
  %v60 = vld [vmem:[%s0 + $0xd8] sm:$0xff]
  %v61 = vld [vmem:[%s0 + $0xe0] sm:$0xff]
  %v62 = vld [vmem:[%s0 + $0xe8] sm:$0xff]
  %v63 = vld [vmem:[%s0 + $0xf0] sm:$0xff]
  %v64 = vld [vmem:[%s0 + $0xf8] sm:$0xff]
  %v65 = vld [vmem:[%s0 + $0x100] sm:$0xff]
  %v66 = vld [vmem:[%s0 + $0x108] sm:$0xff]
  %v67 = vld [vmem:[%s0 + $0x110] sm:$0xff]
  %v68 = vld [vmem:[%s0 + $0x118] sm:$0xff]
  %v69 = vld [vmem:[%s0 + $0x120] sm:$0xff]
  %v70 = vld [vmem:[%s0 + $0x128] sm:$0xff]
  %v71 = vld [vmem:[%s0 + $0x130] sm:$0xff]
  %v72 = vld [vmem:[%s0 + $0x138] sm:$0xff]
  %v73 = vld [vmem:[%s0 + $0x140] sm:$0xff]
  %v74 = vld [vmem:[%s0 + $0x148] sm:$0xff]
  %v75 = vld [vmem:[%s0 + $0x150] sm:$0xff]
  %v76 = vld [vmem:[%s0 + $0x158] sm:$0xff]
  %v77 = vld [vmem:[%s0 + $0x160] sm:$0xff]
  %v78 = vld [vmem:[%s0 + $0x168] sm:$0xff]
  %v79 = vld [vmem:[%s0 + $0x170] sm:$0xff]
  %v80 = vld [vmem:[%s0 + $0x178] sm:$0xff]
  %v81 = vld [vmem:[%s0 + $0x180] sm:$0xff]
  %v82 = vld [vmem:[%s0 + $0x188] sm:$0xff]
  %v83 = vld [vmem:[%s0 + $0x190] sm:$0xff]
  %v84 = vld [vmem:[%s0 + $0x198] sm:$0xff]
  %v85 = vld [vmem:[%s0 + $0x1a0] sm:$0xff]
  %v86 = vld [vmem:[%s0 + $0x1a8] sm:$0xff]
  %v87 = vld [vmem:[%s0 + $0x1b0] sm:$0xff]
  %v88 = vld [vmem:[%s0 + $0x1b8] sm:$0xff]
  %v89 = vld [vmem:[%s0 + $0x1c0] sm:$0xff]
  %v90 = vld [vmem:[%s0 + $0x1c8] sm:$0xff]
  %v91 = vld [vmem:[%s0 + $0x1d0] sm:$0xff]
  %v92 = vld [vmem:[%s0 + $0x1d8] sm:$0xff]
  %v93 = vld [vmem:[%s0 + $0x1e0] sm:$0xff]
  %v94 = vld [vmem:[%s0 + $0x1e8] sm:$0xff]
  %v95 = vld [vmem:[%s0 + $0x1f0] sm:$0xff]
  %v96 = vld [vmem:[%s0 + $0x1f8] sm:$0xff]
  %v97 = vpack.c.bf16 %v33, %v33
  %v98 = vpack.c.bf16 %v34, %v34
  %v99 = vpack.c.bf16 %v35, %v35
  %v100 = vpack.c.bf16 %v36, %v36
  %v101 = vpack.c.bf16 %v37, %v37
  %v102 = vpack.c.bf16 %v38, %v38
  %v103 = vpack.c.bf16 %v39, %v39
  %v104 = vpack.c.bf16 %v40, %v40
  %v105 = vpack.c.bf16 %v41, %v41
  %v106 = vpack.c.bf16 %v42, %v42
  %v107 = vpack.c.bf16 %v43, %v43
  %v108 = vpack.c.bf16 %v44, %v44
  %v109 = vpack.c.bf16 %v45, %v45
  %v110 = vpack.c.bf16 %v46, %v46
  %v111 = vpack.c.bf16 %v47, %v47
  %v112 = vpack.c.bf16 %v48, %v48
  %v113 = vpack.c.bf16 %v49, %v49
  %v114 = vpack.c.bf16 %v50, %v50
  %v115 = vpack.c.bf16 %v51, %v51
  %v116 = vpack.c.bf16 %v52, %v52
  %v117 = vpack.c.bf16 %v53, %v53
  %v118 = vpack.c.bf16 %v54, %v54
  %v119 = vpack.c.bf16 %v55, %v55
  %v120 = vpack.c.bf16 %v56, %v56
  %v121 = vpack.c.bf16 %v57, %v57
  %v122 = vpack.c.bf16 %v58, %v58
  %v123 = vpack.c.bf16 %v59, %v59
  %v124 = vpack.c.bf16 %v60, %v60
  %v125 = vpack.c.bf16 %v61, %v61
  %v126 = vpack.c.bf16 %v62, %v62
  %v127 = vpack.c.bf16 %v63, %v63
  %v128 = vpack.c.bf16 %v64, %v64
  %v129 = vpack.c.bf16 %v65, %v65
  %v130 = vpack.c.bf16 %v66, %v66
  %v131 = vpack.c.bf16 %v67, %v67
  %v132 = vpack.c.bf16 %v68, %v68
  %v133 = vpack.c.bf16 %v69, %v69
  %v134 = vpack.c.bf16 %v70, %v70
  %v135 = vpack.c.bf16 %v71, %v71
  %v136 = vpack.c.bf16 %v72, %v72
  %v137 = vpack.c.bf16 %v73, %v73
  %v138 = vpack.c.bf16 %v74, %v74
  %v139 = vpack.c.bf16 %v75, %v75
  %v140 = vpack.c.bf16 %v76, %v76
  %v141 = vpack.c.bf16 %v77, %v77
  %v142 = vpack.c.bf16 %v78, %v78
  %v143 = vpack.c.bf16 %v79, %v79
  %v144 = vpack.c.bf16 %v80, %v80
  %v145 = vpack.c.bf16 %v81, %v81
  %v146 = vpack.c.bf16 %v82, %v82
  %v147 = vpack.c.bf16 %v83, %v83
  %v148 = vpack.c.bf16 %v84, %v84
  %v149 = vpack.c.bf16 %v85, %v85
  %v150 = vpack.c.bf16 %v86, %v86
  %v151 = vpack.c.bf16 %v87, %v87
  %v152 = vpack.c.bf16 %v88, %v88
  %v153 = vpack.c.bf16 %v89, %v89
  %v154 = vpack.c.bf16 %v90, %v90
  %v155 = vpack.c.bf16 %v91, %v91
  %v156 = vpack.c.bf16 %v92, %v92
  %v157 = vpack.c.bf16 %v93, %v93
  %v158 = vpack.c.bf16 %v94, %v94
  %v159 = vpack.c.bf16 %v95, %v95
  %v160 = vpack.c.bf16 %v96, %v96
  %v225 = vunpack.c.l.b16 %v97
  %v226 = vunpack.c.l.b16 %v98
  %v227 = vunpack.c.l.b16 %v99
  %v228 = vunpack.c.l.b16 %v100
  %v229 = vunpack.c.l.b16 %v101
  %v230 = vunpack.c.l.b16 %v102
  %v231 = vunpack.c.l.b16 %v103
  %v232 = vunpack.c.l.b16 %v104
  %v233 = vunpack.c.l.b16 %v105
  %v234 = vunpack.c.l.b16 %v106
  %v235 = vunpack.c.l.b16 %v107
  %v236 = vunpack.c.l.b16 %v108
  %v237 = vunpack.c.l.b16 %v109
  %v238 = vunpack.c.l.b16 %v110
  %v239 = vunpack.c.l.b16 %v111
  %v240 = vunpack.c.l.b16 %v112
  %v241 = vunpack.c.l.b16 %v113
  %v242 = vunpack.c.l.b16 %v114
  %v243 = vunpack.c.l.b16 %v115
  %v244 = vunpack.c.l.b16 %v116
  %v245 = vunpack.c.l.b16 %v117
  %v246 = vunpack.c.l.b16 %v118
  %v247 = vunpack.c.l.b16 %v119
  %v248 = vunpack.c.l.b16 %v120
  %v249 = vunpack.c.l.b16 %v121
  %v250 = vunpack.c.l.b16 %v122
  %v251 = vunpack.c.l.b16 %v123
  %v252 = vunpack.c.l.b16 %v124
  %v253 = vunpack.c.l.b16 %v125
  %v254 = vunpack.c.l.b16 %v126
  %v255 = vunpack.c.l.b16 %v127
  %v256 = vunpack.c.l.b16 %v128
  %v257 = vunpack.c.l.b16 %v129
  %v258 = vunpack.c.l.b16 %v130
  %v259 = vunpack.c.l.b16 %v131
  %v260 = vunpack.c.l.b16 %v132
  %v261 = vunpack.c.l.b16 %v133
  %v262 = vunpack.c.l.b16 %v134
  %v263 = vunpack.c.l.b16 %v135
  %v264 = vunpack.c.l.b16 %v136
  %v265 = vunpack.c.l.b16 %v137
  %v266 = vunpack.c.l.b16 %v138
  %v267 = vunpack.c.l.b16 %v139
  %v268 = vunpack.c.l.b16 %v140
  %v269 = vunpack.c.l.b16 %v141
  %v270 = vunpack.c.l.b16 %v142
  %v271 = vunpack.c.l.b16 %v143
  %v272 = vunpack.c.l.b16 %v144
  %v273 = vunpack.c.l.b16 %v145
  %v274 = vunpack.c.l.b16 %v146
  %v275 = vunpack.c.l.b16 %v147
  %v276 = vunpack.c.l.b16 %v148
  %v277 = vunpack.c.l.b16 %v149
  %v278 = vunpack.c.l.b16 %v150
  %v279 = vunpack.c.l.b16 %v151
  %v280 = vunpack.c.l.b16 %v152
  %v281 = vunpack.c.l.b16 %v153
  %v282 = vunpack.c.l.b16 %v154
  %v283 = vunpack.c.l.b16 %v155
  %v284 = vunpack.c.l.b16 %v156
  %v285 = vunpack.c.l.b16 %v157
  %v286 = vunpack.c.l.b16 %v158
  %v287 = vunpack.c.l.b16 %v159
  %v288 = vunpack.c.l.b16 %v160
  %v289 = vpack.c.b16 %v226, %v225
  %v290 = vpack.c.b16 %v228, %v227
  %v291 = vpack.c.b16 %v230, %v229
  %v292 = vpack.c.b16 %v232, %v231
  %v293 = vpack.c.b16 %v234, %v233
  %v294 = vpack.c.b16 %v236, %v235
  %v295 = vpack.c.b16 %v238, %v237
  %v296 = vpack.c.b16 %v240, %v239
  %v297 = vpack.c.b16 %v242, %v241
  %v298 = vpack.c.b16 %v244, %v243
  %v299 = vpack.c.b16 %v246, %v245
  %v300 = vpack.c.b16 %v248, %v247
  %v301 = vpack.c.b16 %v250, %v249
  %v302 = vpack.c.b16 %v252, %v251
  %v303 = vpack.c.b16 %v254, %v253
  %v304 = vpack.c.b16 %v256, %v255
  %v305 = vpack.c.b16 %v258, %v257
  %v306 = vpack.c.b16 %v260, %v259
  %v307 = vpack.c.b16 %v262, %v261
  %v308 = vpack.c.b16 %v264, %v263
  %v309 = vpack.c.b16 %v266, %v265
  %v310 = vpack.c.b16 %v268, %v267
  %v311 = vpack.c.b16 %v270, %v269
  %v312 = vpack.c.b16 %v272, %v271
  %v313 = vpack.c.b16 %v274, %v273
  %v314 = vpack.c.b16 %v276, %v275
  %v315 = vpack.c.b16 %v278, %v277
  %v316 = vpack.c.b16 %v280, %v279
  %v317 = vpack.c.b16 %v282, %v281
  %v318 = vpack.c.b16 %v284, %v283
  %v319 = vpack.c.b16 %v286, %v285
  %v320 = vpack.c.b16 %v288, %v287
  %v322 = vshrl.u32 0, 16
  %v324 = vrot.slane %v322, 7
  %v325 = vshll.u32 0, 16
  %v327 = vor.u32 %v324, %v325
  %v329 = vshrl.u32 %v289, 16
  %v331 = vrot.slane %v329, 7
  %v332 = vshll.u32 %v289, 16
  %v334 = vor.u32 %v331, %v332
  %v336 = vshrl.u32 %v290, 16
  %v338 = vrot.slane %v336, 7
  %v339 = vshll.u32 %v290, 16
  %v341 = vor.u32 %v338, %v339
  %v343 = vshrl.u32 %v291, 16
  %v345 = vrot.slane %v343, 7
  %v346 = vshll.u32 %v291, 16
  %v348 = vor.u32 %v345, %v346
  %v350 = vshrl.u32 %v292, 16
  %v352 = vrot.slane %v350, 7
  %v353 = vshll.u32 %v292, 16
  %v355 = vor.u32 %v352, %v353
  %v357 = vshrl.u32 %v293, 16
  %v359 = vrot.slane %v357, 7
  %v360 = vshll.u32 %v293, 16
  %v362 = vor.u32 %v359, %v360
  %v364 = vshrl.u32 %v294, 16
  %v366 = vrot.slane %v364, 7
  %v367 = vshll.u32 %v294, 16
  %v369 = vor.u32 %v366, %v367
  %v371 = vshrl.u32 %v295, 16
  %v373 = vrot.slane %v371, 7
  %v374 = vshll.u32 %v295, 16
  %v376 = vor.u32 %v373, %v374
  %v378 = vshrl.u32 %v296, 16
  %v380 = vrot.slane %v378, 7
  %v381 = vshll.u32 %v296, 16
  %v383 = vor.u32 %v380, %v381
  %v385 = vshrl.u32 %v297, 16
  %v387 = vrot.slane %v385, 7
  %v388 = vshll.u32 %v297, 16
  %v390 = vor.u32 %v387, %v388
  %v392 = vshrl.u32 %v298, 16
  %v394 = vrot.slane %v392, 7
  %v395 = vshll.u32 %v298, 16
  %v397 = vor.u32 %v394, %v395
  %v399 = vshrl.u32 %v299, 16
  %v401 = vrot.slane %v399, 7
  %v402 = vshll.u32 %v299, 16
  %v404 = vor.u32 %v401, %v402
  %v406 = vshrl.u32 %v300, 16
  %v408 = vrot.slane %v406, 7
  %v409 = vshll.u32 %v300, 16
  %v411 = vor.u32 %v408, %v409
  %v413 = vshrl.u32 %v301, 16
  %v415 = vrot.slane %v413, 7
  %v416 = vshll.u32 %v301, 16
  %v418 = vor.u32 %v415, %v416
  %v420 = vshrl.u32 %v302, 16
  %v422 = vrot.slane %v420, 7
  %v423 = vshll.u32 %v302, 16
  %v425 = vor.u32 %v422, %v423
  %v427 = vshrl.u32 %v303, 16
  %v429 = vrot.slane %v427, 7
  %v430 = vshll.u32 %v303, 16
  %v432 = vor.u32 %v429, %v430
  %v434 = vshrl.u32 %v304, 16
  %v436 = vrot.slane %v434, 7
  %v437 = vshll.u32 %v304, 16
  %v439 = vor.u32 %v436, %v437
  %v441 = vshrl.u32 %v305, 16
  %v443 = vrot.slane %v441, 7
  %v444 = vshll.u32 %v305, 16
  %v446 = vor.u32 %v443, %v444
  %v448 = vshrl.u32 %v306, 16
  %v450 = vrot.slane %v448, 7
  %v451 = vshll.u32 %v306, 16
  %v453 = vor.u32 %v450, %v451
  %v455 = vshrl.u32 %v307, 16
  %v457 = vrot.slane %v455, 7
  %v458 = vshll.u32 %v307, 16
  %v460 = vor.u32 %v457, %v458
  %v462 = vshrl.u32 %v308, 16
  %v464 = vrot.slane %v462, 7
  %v465 = vshll.u32 %v308, 16
  %v467 = vor.u32 %v464, %v465
  %v469 = vshrl.u32 %v309, 16
  %v471 = vrot.slane %v469, 7
  %v472 = vshll.u32 %v309, 16
  %v474 = vor.u32 %v471, %v472
  %v476 = vshrl.u32 %v310, 16
  %v478 = vrot.slane %v476, 7
  %v479 = vshll.u32 %v310, 16
  %v481 = vor.u32 %v478, %v479
  %v483 = vshrl.u32 %v311, 16
  %v485 = vrot.slane %v483, 7
  %v486 = vshll.u32 %v311, 16
  %v488 = vor.u32 %v485, %v486
  %v490 = vshrl.u32 %v312, 16
  %v492 = vrot.slane %v490, 7
  %v493 = vshll.u32 %v312, 16
  %v495 = vor.u32 %v492, %v493
  %v497 = vshrl.u32 %v313, 16
  %v499 = vrot.slane %v497, 7
  %v500 = vshll.u32 %v313, 16
  %v502 = vor.u32 %v499, %v500
  %v504 = vshrl.u32 %v314, 16
  %v506 = vrot.slane %v504, 7
  %v507 = vshll.u32 %v314, 16
  %v509 = vor.u32 %v506, %v507
  %v511 = vshrl.u32 %v315, 16
  %v513 = vrot.slane %v511, 7
  %v514 = vshll.u32 %v315, 16
  %v516 = vor.u32 %v513, %v514
  %v518 = vshrl.u32 %v316, 16
  %v520 = vrot.slane %v518, 7
  %v521 = vshll.u32 %v316, 16
  %v523 = vor.u32 %v520, %v521
  %v525 = vshrl.u32 %v317, 16
  %v527 = vrot.slane %v525, 7
  %v528 = vshll.u32 %v317, 16
  %v530 = vor.u32 %v527, %v528
  %v532 = vshrl.u32 %v318, 16
  %v534 = vrot.slane %v532, 7
  %v535 = vshll.u32 %v318, 16
  %v537 = vor.u32 %v534, %v535
  %v539 = vshrl.u32 %v319, 16
  %v541 = vrot.slane %v539, 7
  %v542 = vshll.u32 %v319, 16
  %v544 = vor.u32 %v541, %v542
  %v546 = vshrl.u32 %v320, 16
  %v548 = vrot.slane %v546, 7
  %v549 = vshll.u32 %v320, 16
  %v551 = vor.u32 %v548, %v549
  %vm585 = vcmask 1040384
  %vm586 = vsmask.f32 256
  %vm587 = vmand %vm585, %vm586
  %v588 = vsel %vm587, 0, %v327
  %v589 = vsel %vm587, 0, %v334
  %v590 = vsel %vm587, 0, %v341
  %v591 = vsel %vm587, 0, %v348
  %v592 = vsel %vm587, 0, %v355
  %v593 = vsel %vm587, 0, %v362
  %v594 = vsel %vm587, 0, %v369
  %v595 = vsel %vm587, 0, %v376
  %v596 = vsel %vm587, 0, %v383
  %v597 = vsel %vm587, 0, %v390
  %v598 = vsel %vm587, 0, %v397
  %v599 = vsel %vm587, 0, %v404
  %v600 = vsel %vm587, 0, %v411
  %v601 = vsel %vm587, 0, %v418
  %v602 = vsel %vm587, 0, %v425
  %v603 = vsel %vm587, 0, %v432
  %v604 = vsel %vm587, 0, %v439
  %v605 = vsel %vm587, 0, %v446
  %v606 = vsel %vm587, 0, %v453
  %v607 = vsel %vm587, 0, %v460
  %v608 = vsel %vm587, 0, %v467
  %v609 = vsel %vm587, 0, %v474
  %v610 = vsel %vm587, 0, %v481
  %v611 = vsel %vm587, 0, %v488
  %v612 = vsel %vm587, 0, %v495
  %v613 = vsel %vm587, 0, %v502
  %v614 = vsel %vm587, 0, %v509
  %v615 = vsel %vm587, 0, %v516
  %v616 = vsel %vm587, 0, %v523
  %v617 = vsel %vm587, 0, %v530
  %v618 = vsel %vm587, 0, %v537
  %v619 = vsel %vm587, 0, %v544
  %v620 = vsel %vm587, 0, %v551
  %v621 = vrot.slane %v325, 1
  %v622 = vor.u32 %v322, %v621
  %v623 = vrot.slane %v332, 1
  %v624 = vor.u32 %v329, %v623
  %v625 = vrot.slane %v339, 1
  %v626 = vor.u32 %v336, %v625
  %v627 = vrot.slane %v346, 1
  %v628 = vor.u32 %v343, %v627
  %v629 = vrot.slane %v353, 1
  %v630 = vor.u32 %v350, %v629
  %v631 = vrot.slane %v360, 1
  %v632 = vor.u32 %v357, %v631
  %v633 = vrot.slane %v367, 1
  %v634 = vor.u32 %v364, %v633
  %v635 = vrot.slane %v374, 1
  %v636 = vor.u32 %v371, %v635
  %v637 = vrot.slane %v381, 1
  %v638 = vor.u32 %v378, %v637
  %v639 = vrot.slane %v388, 1
  %v640 = vor.u32 %v385, %v639
  %v641 = vrot.slane %v395, 1
  %v642 = vor.u32 %v392, %v641
  %v643 = vrot.slane %v402, 1
  %v644 = vor.u32 %v399, %v643
  %v645 = vrot.slane %v409, 1
  %v646 = vor.u32 %v406, %v645
  %v647 = vrot.slane %v416, 1
  %v648 = vor.u32 %v413, %v647
  %v649 = vrot.slane %v423, 1
  %v650 = vor.u32 %v420, %v649
  %v651 = vrot.slane %v430, 1
  %v652 = vor.u32 %v427, %v651
  %v653 = vrot.slane %v437, 1
  %v654 = vor.u32 %v434, %v653
  %v655 = vrot.slane %v444, 1
  %v656 = vor.u32 %v441, %v655
  %v657 = vrot.slane %v451, 1
  %v658 = vor.u32 %v448, %v657
  %v659 = vrot.slane %v458, 1
  %v660 = vor.u32 %v455, %v659
  %v661 = vrot.slane %v465, 1
  %v662 = vor.u32 %v462, %v661
  %v663 = vrot.slane %v472, 1
  %v664 = vor.u32 %v469, %v663
  %v665 = vrot.slane %v479, 1
  %v666 = vor.u32 %v476, %v665
  %v667 = vrot.slane %v486, 1
  %v668 = vor.u32 %v483, %v667
  %v669 = vrot.slane %v493, 1
  %v670 = vor.u32 %v490, %v669
  %v671 = vrot.slane %v500, 1
  %v672 = vor.u32 %v497, %v671
  %v673 = vrot.slane %v507, 1
  %v674 = vor.u32 %v504, %v673
  %v675 = vrot.slane %v514, 1
  %v676 = vor.u32 %v511, %v675
  %v677 = vrot.slane %v521, 1
  %v678 = vor.u32 %v518, %v677
  %v679 = vrot.slane %v528, 1
  %v680 = vor.u32 %v525, %v679
  %v681 = vrot.slane %v535, 1
  %v682 = vor.u32 %v532, %v681
  %v683 = vrot.slane %v542, 1
  %v684 = vor.u32 %v539, %v683
  %v685 = vrot.slane %v549, 1
  %v686 = vor.u32 %v546, %v685
  %vm720 = vcmask 1047552
  %vm721 = vsmask.f32 7424
  %vm722 = vmand %vm720, %vm721
  %v723 = vsel %vm722, %v622, 0
  %v724 = vsel %vm722, %v624, 0
  %v725 = vsel %vm722, %v626, 0
  %v726 = vsel %vm722, %v628, 0
  %v727 = vsel %vm722, %v630, 0
  %v728 = vsel %vm722, %v632, 0
  %v729 = vsel %vm722, %v634, 0
  %v730 = vsel %vm722, %v636, 0
  %v731 = vsel %vm722, %v638, 0
  %v732 = vsel %vm722, %v640, 0
  %v733 = vsel %vm722, %v642, 0
  %v734 = vsel %vm722, %v644, 0
  %v735 = vsel %vm722, %v646, 0
  %v736 = vsel %vm722, %v648, 0
  %v737 = vsel %vm722, %v650, 0
  %v738 = vsel %vm722, %v652, 0
  %v739 = vsel %vm722, %v654, 0
  %v740 = vsel %vm722, %v656, 0
  %v741 = vsel %vm722, %v658, 0
  %v742 = vsel %vm722, %v660, 0
  %v743 = vsel %vm722, %v662, 0
  %v744 = vsel %vm722, %v664, 0
  %v745 = vsel %vm722, %v666, 0
  %v746 = vsel %vm722, %v668, 0
  %v747 = vsel %vm722, %v670, 0
  %v748 = vsel %vm722, %v672, 0
  %v749 = vsel %vm722, %v674, 0
  %v750 = vsel %vm722, %v676, 0
  %v751 = vsel %vm722, %v678, 0
  %v752 = vsel %vm722, %v680, 0
  %v753 = vsel %vm722, %v682, 0
  %v754 = vsel %vm722, %v684, 0
  %v755 = vsel %vm722, %v686, 0
  %757 = vrot.lane.b32.xlu0 0, 4
  %v758 = vpop.permute.xlu0 %757
  %759 = vrot.lane.b32.xlu0 %v289, 4
  %v760 = vpop.permute.xlu0 %759
  %761 = vrot.lane.b32.xlu0 %v290, 4
  %v762 = vpop.permute.xlu0 %761
  %763 = vrot.lane.b32.xlu0 %v291, 4
  %v764 = vpop.permute.xlu0 %763
  %765 = vrot.lane.b32.xlu0 %v292, 4
  %v766 = vpop.permute.xlu0 %765
  %767 = vrot.lane.b32.xlu0 %v293, 4
  %v768 = vpop.permute.xlu0 %767
  %769 = vrot.lane.b32.xlu0 %v294, 4
  %v770 = vpop.permute.xlu0 %769
  %771 = vrot.lane.b32.xlu0 %v295, 4
  %v772 = vpop.permute.xlu0 %771
  %773 = vrot.lane.b32.xlu0 %v296, 4
  %v774 = vpop.permute.xlu0 %773
  %775 = vrot.lane.b32.xlu0 %v297, 4
  %v776 = vpop.permute.xlu0 %775
  %777 = vrot.lane.b32.xlu0 %v298, 4
  %v778 = vpop.permute.xlu0 %777
  %779 = vrot.lane.b32.xlu0 %v299, 4
  %v780 = vpop.permute.xlu0 %779
  %781 = vrot.lane.b32.xlu0 %v300, 4
  %v782 = vpop.permute.xlu0 %781
  %783 = vrot.lane.b32.xlu0 %v301, 4
  %v784 = vpop.permute.xlu0 %783
  %785 = vrot.lane.b32.xlu0 %v302, 4
  %v786 = vpop.permute.xlu0 %785
  %787 = vrot.lane.b32.xlu0 %v303, 4
  %v788 = vpop.permute.xlu0 %787
  %789 = vrot.lane.b32.xlu0 %v305, 4
  %v790 = vpop.permute.xlu0 %789
  %791 = vrot.lane.b32.xlu0 %v306, 4
  %v792 = vpop.permute.xlu0 %791
  %793 = vrot.lane.b32.xlu0 %v307, 4
  %v794 = vpop.permute.xlu0 %793
  %795 = vrot.lane.b32.xlu0 %v308, 4
  %v796 = vpop.permute.xlu0 %795
  %797 = vrot.lane.b32.xlu0 %v309, 4
  %v798 = vpop.permute.xlu0 %797
  %799 = vrot.lane.b32.xlu0 %v310, 4
  %v800 = vpop.permute.xlu0 %799
  %801 = vrot.lane.b32.xlu0 %v311, 4
  %v802 = vpop.permute.xlu0 %801
  %803 = vrot.lane.b32.xlu0 %v312, 4
  %v804 = vpop.permute.xlu0 %803
  %805 = vrot.lane.b32.xlu0 %v313, 4
  %v806 = vpop.permute.xlu0 %805
  %807 = vrot.lane.b32.xlu0 %v314, 4
  %v808 = vpop.permute.xlu0 %807
  %809 = vrot.lane.b32.xlu0 %v315, 4
  %v810 = vpop.permute.xlu0 %809
  %811 = vrot.lane.b32.xlu0 %v316, 4
  %v812 = vpop.permute.xlu0 %811
  %813 = vrot.lane.b32.xlu0 %v317, 4
  %v814 = vpop.permute.xlu0 %813
  %815 = vrot.lane.b32.xlu0 %v318, 4
  %v816 = vpop.permute.xlu0 %815
  %817 = vrot.lane.b32.xlu0 %v319, 4
  %v818 = vpop.permute.xlu0 %817
  %850 = vrot.lane.b32.xlu0 %v723, 8
  %v851 = vpop.permute.xlu0 %850
  %852 = vrot.lane.b32.xlu0 %v724, 8
  %v853 = vpop.permute.xlu0 %852
  %854 = vrot.lane.b32.xlu0 %v725, 8
  %v855 = vpop.permute.xlu0 %854
  %856 = vrot.lane.b32.xlu0 %v726, 8
  %v857 = vpop.permute.xlu0 %856
  %858 = vrot.lane.b32.xlu0 %v727, 8
  %v859 = vpop.permute.xlu0 %858
  %860 = vrot.lane.b32.xlu0 %v728, 8
  %v861 = vpop.permute.xlu0 %860
  %862 = vrot.lane.b32.xlu0 %v729, 8
  %v863 = vpop.permute.xlu0 %862
  %864 = vrot.lane.b32.xlu0 %v730, 8
  %v865 = vpop.permute.xlu0 %864
  %866 = vrot.lane.b32.xlu0 %v731, 8
  %v867 = vpop.permute.xlu0 %866
  %868 = vrot.lane.b32.xlu0 %v732, 8
  %v869 = vpop.permute.xlu0 %868
  %870 = vrot.lane.b32.xlu0 %v733, 8
  %v871 = vpop.permute.xlu0 %870
  %872 = vrot.lane.b32.xlu0 %v734, 8
  %v873 = vpop.permute.xlu0 %872
  %874 = vrot.lane.b32.xlu0 %v735, 8
  %v875 = vpop.permute.xlu0 %874
  %876 = vrot.lane.b32.xlu0 %v736, 8
  %v877 = vpop.permute.xlu0 %876
  %878 = vrot.lane.b32.xlu0 %v737, 8
  %v879 = vpop.permute.xlu0 %878
  %880 = vrot.lane.b32.xlu0 %v738, 8
  %v881 = vpop.permute.xlu0 %880
  %882 = vrot.lane.b32.xlu0 %v740, 8
  %v883 = vpop.permute.xlu0 %882
  %884 = vrot.lane.b32.xlu0 %v741, 8
  %v885 = vpop.permute.xlu0 %884
  %886 = vrot.lane.b32.xlu0 %v742, 8
  %v887 = vpop.permute.xlu0 %886
  %888 = vrot.lane.b32.xlu0 %v743, 8
  %v889 = vpop.permute.xlu0 %888
  %890 = vrot.lane.b32.xlu0 %v744, 8
  %v891 = vpop.permute.xlu0 %890
  %892 = vrot.lane.b32.xlu0 %v745, 8
  %v893 = vpop.permute.xlu0 %892
  %894 = vrot.lane.b32.xlu0 %v746, 8
  %v895 = vpop.permute.xlu0 %894
  %896 = vrot.lane.b32.xlu0 %v747, 8
  %v897 = vpop.permute.xlu0 %896
  %898 = vrot.lane.b32.xlu0 %v748, 8
  %v899 = vpop.permute.xlu0 %898
  %900 = vrot.lane.b32.xlu0 %v749, 8
  %v901 = vpop.permute.xlu0 %900
  %902 = vrot.lane.b32.xlu0 %v750, 8
  %v903 = vpop.permute.xlu0 %902
  %904 = vrot.lane.b32.xlu0 %v751, 8
  %v905 = vpop.permute.xlu0 %904
  %906 = vrot.lane.b32.xlu0 %v752, 8
  %v907 = vpop.permute.xlu0 %906
  %908 = vrot.lane.b32.xlu0 %v753, 8
  %v909 = vpop.permute.xlu0 %908
  %910 = vrot.lane.b32.xlu0 %v754, 8
  %v911 = vpop.permute.xlu0 %910
  %944 = vrot.lane.b32.xlu0 %v589, 12
  %v945 = vpop.permute.xlu0 %944
  %946 = vrot.lane.b32.xlu0 %v590, 12
  %v947 = vpop.permute.xlu0 %946
  %948 = vrot.lane.b32.xlu0 %v591, 12
  %v949 = vpop.permute.xlu0 %948
  %950 = vrot.lane.b32.xlu0 %v592, 12
  %v951 = vpop.permute.xlu0 %950
  %952 = vrot.lane.b32.xlu0 %v593, 12
  %v953 = vpop.permute.xlu0 %952
  %954 = vrot.lane.b32.xlu0 %v594, 12
  %v955 = vpop.permute.xlu0 %954
  %956 = vrot.lane.b32.xlu0 %v595, 12
  %v957 = vpop.permute.xlu0 %956
  %958 = vrot.lane.b32.xlu0 %v596, 12
  %v959 = vpop.permute.xlu0 %958
  %960 = vrot.lane.b32.xlu0 %v597, 12
  %v961 = vpop.permute.xlu0 %960
  %962 = vrot.lane.b32.xlu0 %v598, 12
  %v963 = vpop.permute.xlu0 %962
  %964 = vrot.lane.b32.xlu0 %v599, 12
  %v965 = vpop.permute.xlu0 %964
  %966 = vrot.lane.b32.xlu0 %v600, 12
  %v967 = vpop.permute.xlu0 %966
  %968 = vrot.lane.b32.xlu0 %v601, 12
  %v969 = vpop.permute.xlu0 %968
  %970 = vrot.lane.b32.xlu0 %v602, 12
  %v971 = vpop.permute.xlu0 %970
  %972 = vrot.lane.b32.xlu0 %v603, 12
  %v973 = vpop.permute.xlu0 %972
  %974 = vrot.lane.b32.xlu0 %v604, 12
  %v975 = vpop.permute.xlu0 %974
  %976 = vrot.lane.b32.xlu0 %v605, 12
  %v977 = vpop.permute.xlu0 %976
  %978 = vrot.lane.b32.xlu0 %v606, 12
  %v979 = vpop.permute.xlu0 %978
  %980 = vrot.lane.b32.xlu0 %v607, 12
  %v981 = vpop.permute.xlu0 %980
  %982 = vrot.lane.b32.xlu0 %v608, 12
  %v983 = vpop.permute.xlu0 %982
  %984 = vrot.lane.b32.xlu0 %v609, 12
  %v985 = vpop.permute.xlu0 %984
  %986 = vrot.lane.b32.xlu0 %v610, 12
  %v987 = vpop.permute.xlu0 %986
  %988 = vrot.lane.b32.xlu0 %v611, 12
  %v989 = vpop.permute.xlu0 %988
  %990 = vrot.lane.b32.xlu0 %v612, 12
  %v991 = vpop.permute.xlu0 %990
  %992 = vrot.lane.b32.xlu0 %v613, 12
  %v993 = vpop.permute.xlu0 %992
  %994 = vrot.lane.b32.xlu0 %v614, 12
  %v995 = vpop.permute.xlu0 %994
  %996 = vrot.lane.b32.xlu0 %v615, 12
  %v997 = vpop.permute.xlu0 %996
  %998 = vrot.lane.b32.xlu0 %v616, 12
  %v999 = vpop.permute.xlu0 %998
  %1000 = vrot.lane.b32.xlu0 %v617, 12
  %v1001 = vpop.permute.xlu0 %1000
  %1002 = vrot.lane.b32.xlu0 %v618, 12
  %v1003 = vpop.permute.xlu0 %1002
  %1004 = vrot.lane.b32.xlu0 %v619, 12
  %v1005 = vpop.permute.xlu0 %1004
  %1006 = vrot.lane.b32.xlu0 %v620, 12
  %v1007 = vpop.permute.xlu0 %1006
  %1008 = vrot.lane.b32.xlu0 %v289, 16
  %v1009 = vpop.permute.xlu0 %1008
  %1010 = vrot.lane.b32.xlu0 %v290, 16
  %v1011 = vpop.permute.xlu0 %1010
  %1012 = vrot.lane.b32.xlu0 %v291, 16
  %v1013 = vpop.permute.xlu0 %1012
  %1014 = vrot.lane.b32.xlu0 %v292, 16
  %v1015 = vpop.permute.xlu0 %1014
  %1016 = vrot.lane.b32.xlu0 %v293, 16
  %v1017 = vpop.permute.xlu0 %1016
  %1018 = vrot.lane.b32.xlu0 %v294, 16
  %v1019 = vpop.permute.xlu0 %1018
  %1020 = vrot.lane.b32.xlu0 %v295, 16
  %v1021 = vpop.permute.xlu0 %1020
  %1022 = vrot.lane.b32.xlu0 %v296, 16
  %v1023 = vpop.permute.xlu0 %1022
  %1024 = vrot.lane.b32.xlu0 %v297, 16
  %v1025 = vpop.permute.xlu0 %1024
  %1026 = vrot.lane.b32.xlu0 %v298, 16
  %v1027 = vpop.permute.xlu0 %1026
  %1028 = vrot.lane.b32.xlu0 %v299, 16
  %v1029 = vpop.permute.xlu0 %1028
  %1030 = vrot.lane.b32.xlu0 %v300, 16
  %v1031 = vpop.permute.xlu0 %1030
  %1032 = vrot.lane.b32.xlu0 %v301, 16
  %v1033 = vpop.permute.xlu0 %1032
  %1034 = vrot.lane.b32.xlu0 %v302, 16
  %v1035 = vpop.permute.xlu0 %1034
  %1036 = vrot.lane.b32.xlu0 %v303, 16
  %v1037 = vpop.permute.xlu0 %1036
  %1038 = vrot.lane.b32.xlu0 %v304, 16
  %v1039 = vpop.permute.xlu0 %1038
  %1040 = vrot.lane.b32.xlu0 %v305, 16
  %v1041 = vpop.permute.xlu0 %1040
  %1042 = vrot.lane.b32.xlu0 %v306, 16
  %v1043 = vpop.permute.xlu0 %1042
  %1044 = vrot.lane.b32.xlu0 %v307, 16
  %v1045 = vpop.permute.xlu0 %1044
  %1046 = vrot.lane.b32.xlu0 %v308, 16
  %v1047 = vpop.permute.xlu0 %1046
  %1048 = vrot.lane.b32.xlu0 %v309, 16
  %v1049 = vpop.permute.xlu0 %1048
  %1050 = vrot.lane.b32.xlu0 %v310, 16
  %v1051 = vpop.permute.xlu0 %1050
  %1052 = vrot.lane.b32.xlu0 %v311, 16
  %v1053 = vpop.permute.xlu0 %1052
  %1054 = vrot.lane.b32.xlu0 %v312, 16
  %v1055 = vpop.permute.xlu0 %1054
  %1056 = vrot.lane.b32.xlu0 %v313, 16
  %v1057 = vpop.permute.xlu0 %1056
  %1058 = vrot.lane.b32.xlu0 %v314, 16
  %v1059 = vpop.permute.xlu0 %1058
  %1060 = vrot.lane.b32.xlu0 %v315, 16
  %v1061 = vpop.permute.xlu0 %1060
  %1062 = vrot.lane.b32.xlu0 %v316, 16
  %v1063 = vpop.permute.xlu0 %1062
  %1064 = vrot.lane.b32.xlu0 %v317, 16
  %v1065 = vpop.permute.xlu0 %1064
  %1066 = vrot.lane.b32.xlu0 %v318, 16
  %v1067 = vpop.permute.xlu0 %1066
  %1068 = vrot.lane.b32.xlu0 %v319, 16
  %v1069 = vpop.permute.xlu0 %1068
  %1070 = vrot.lane.b32.xlu0 %v320, 16
  %v1071 = vpop.permute.xlu0 %1070
  %1074 = vrot.lane.b32.xlu0 %v724, 20
  %v1075 = vpop.permute.xlu0 %1074
  %1076 = vrot.lane.b32.xlu0 %v725, 20
  %v1077 = vpop.permute.xlu0 %1076
  %1078 = vrot.lane.b32.xlu0 %v726, 20
  %v1079 = vpop.permute.xlu0 %1078
  %1080 = vrot.lane.b32.xlu0 %v727, 20
  %v1081 = vpop.permute.xlu0 %1080
  %1082 = vrot.lane.b32.xlu0 %v728, 20
  %v1083 = vpop.permute.xlu0 %1082
  %1084 = vrot.lane.b32.xlu0 %v729, 20
  %v1085 = vpop.permute.xlu0 %1084
  %1086 = vrot.lane.b32.xlu0 %v730, 20
  %v1087 = vpop.permute.xlu0 %1086
  %1088 = vrot.lane.b32.xlu0 %v731, 20
  %v1089 = vpop.permute.xlu0 %1088
  %1090 = vrot.lane.b32.xlu0 %v732, 20
  %v1091 = vpop.permute.xlu0 %1090
  %1092 = vrot.lane.b32.xlu0 %v733, 20
  %v1093 = vpop.permute.xlu0 %1092
  %1094 = vrot.lane.b32.xlu0 %v734, 20
  %v1095 = vpop.permute.xlu0 %1094
  %1096 = vrot.lane.b32.xlu0 %v735, 20
  %v1097 = vpop.permute.xlu0 %1096
  %1098 = vrot.lane.b32.xlu0 %v736, 20
  %v1099 = vpop.permute.xlu0 %1098
  %1100 = vrot.lane.b32.xlu0 %v737, 20
  %v1101 = vpop.permute.xlu0 %1100
  %1102 = vrot.lane.b32.xlu0 %v738, 20
  %v1103 = vpop.permute.xlu0 %1102
  %1104 = vrot.lane.b32.xlu0 %v739, 20
  %v1105 = vpop.permute.xlu0 %1104
  %1106 = vrot.lane.b32.xlu0 %v740, 20
  %v1107 = vpop.permute.xlu0 %1106
  %1108 = vrot.lane.b32.xlu0 %v741, 20
  %v1109 = vpop.permute.xlu0 %1108
  %1110 = vrot.lane.b32.xlu0 %v742, 20
  %v1111 = vpop.permute.xlu0 %1110
  %1112 = vrot.lane.b32.xlu0 %v743, 20
  %v1113 = vpop.permute.xlu0 %1112
  %1114 = vrot.lane.b32.xlu0 %v744, 20
  %v1115 = vpop.permute.xlu0 %1114
  %1116 = vrot.lane.b32.xlu0 %v745, 20
  %v1117 = vpop.permute.xlu0 %1116
  %1118 = vrot.lane.b32.xlu0 %v746, 20
  %v1119 = vpop.permute.xlu0 %1118
  %1120 = vrot.lane.b32.xlu0 %v747, 20
  %v1121 = vpop.permute.xlu0 %1120
  %1122 = vrot.lane.b32.xlu0 %v748, 20
  %v1123 = vpop.permute.xlu0 %1122
  %1124 = vrot.lane.b32.xlu0 %v749, 20
  %v1125 = vpop.permute.xlu0 %1124
  %1126 = vrot.lane.b32.xlu0 %v750, 20
  %v1127 = vpop.permute.xlu0 %1126
  %1128 = vrot.lane.b32.xlu0 %v751, 20
  %v1129 = vpop.permute.xlu0 %1128
  %1130 = vrot.lane.b32.xlu0 %v752, 20
  %v1131 = vpop.permute.xlu0 %1130
  %1132 = vrot.lane.b32.xlu0 %v753, 20
  %v1133 = vpop.permute.xlu0 %1132
  %1134 = vrot.lane.b32.xlu0 %v754, 20
  %v1135 = vpop.permute.xlu0 %1134
  %1136 = vrot.lane.b32.xlu0 %v755, 20
  %v1137 = vpop.permute.xlu0 %1136
  %1139 = vrot.lane.b32.xlu0 %v590, 24
  %v1140 = vpop.permute.xlu0 %1139
  %1141 = vrot.lane.b32.xlu0 %v591, 24
  %v1142 = vpop.permute.xlu0 %1141
  %1143 = vrot.lane.b32.xlu0 %v592, 24
  %v1144 = vpop.permute.xlu0 %1143
  %1145 = vrot.lane.b32.xlu0 %v593, 24
  %v1146 = vpop.permute.xlu0 %1145
  %1147 = vrot.lane.b32.xlu0 %v594, 24
  %v1148 = vpop.permute.xlu0 %1147
  %1149 = vrot.lane.b32.xlu0 %v595, 24
  %v1150 = vpop.permute.xlu0 %1149
  %1151 = vrot.lane.b32.xlu0 %v596, 24
  %v1152 = vpop.permute.xlu0 %1151
  %1153 = vrot.lane.b32.xlu0 %v597, 24
  %v1154 = vpop.permute.xlu0 %1153
  %1155 = vrot.lane.b32.xlu0 %v598, 24
  %v1156 = vpop.permute.xlu0 %1155
  %1157 = vrot.lane.b32.xlu0 %v599, 24
  %v1158 = vpop.permute.xlu0 %1157
  %1159 = vrot.lane.b32.xlu0 %v600, 24
  %v1160 = vpop.permute.xlu0 %1159
  %1161 = vrot.lane.b32.xlu0 %v601, 24
  %v1162 = vpop.permute.xlu0 %1161
  %1163 = vrot.lane.b32.xlu0 %v602, 24
  %v1164 = vpop.permute.xlu0 %1163
  %1165 = vrot.lane.b32.xlu0 %v603, 24
  %v1166 = vpop.permute.xlu0 %1165
  %1167 = vrot.lane.b32.xlu0 %v604, 24
  %v1168 = vpop.permute.xlu0 %1167
  %1169 = vrot.lane.b32.xlu0 %v588, 24
  %v1170 = vpop.permute.xlu0 %1169
  %1171 = vrot.lane.b32.xlu0 %v606, 24
  %v1172 = vpop.permute.xlu0 %1171
  %1173 = vrot.lane.b32.xlu0 %v607, 24
  %v1174 = vpop.permute.xlu0 %1173
  %1175 = vrot.lane.b32.xlu0 %v608, 24
  %v1176 = vpop.permute.xlu0 %1175
  %1177 = vrot.lane.b32.xlu0 %v609, 24
  %v1178 = vpop.permute.xlu0 %1177
  %1179 = vrot.lane.b32.xlu0 %v610, 24
  %v1180 = vpop.permute.xlu0 %1179
  %1181 = vrot.lane.b32.xlu0 %v611, 24
  %v1182 = vpop.permute.xlu0 %1181
  %1183 = vrot.lane.b32.xlu0 %v612, 24
  %v1184 = vpop.permute.xlu0 %1183
  %1185 = vrot.lane.b32.xlu0 %v613, 24
  %v1186 = vpop.permute.xlu0 %1185
  %1187 = vrot.lane.b32.xlu0 %v614, 24
  %v1188 = vpop.permute.xlu0 %1187
  %1189 = vrot.lane.b32.xlu0 %v615, 24
  %v1190 = vpop.permute.xlu0 %1189
  %1191 = vrot.lane.b32.xlu0 %v616, 24
  %v1192 = vpop.permute.xlu0 %1191
  %1193 = vrot.lane.b32.xlu0 %v617, 24
  %v1194 = vpop.permute.xlu0 %1193
  %1195 = vrot.lane.b32.xlu0 %v618, 24
  %v1196 = vpop.permute.xlu0 %1195
  %1197 = vrot.lane.b32.xlu0 %v619, 24
  %v1198 = vpop.permute.xlu0 %1197
  %1199 = vrot.lane.b32.xlu0 %v620, 24
  %v1200 = vpop.permute.xlu0 %1199
  %1201 = vrot.lane.b32.xlu0 %v290, 28
  %v1202 = vpop.permute.xlu0 %1201
  %1203 = vrot.lane.b32.xlu0 %v291, 28
  %v1204 = vpop.permute.xlu0 %1203
  %1205 = vrot.lane.b32.xlu0 %v292, 28
  %v1206 = vpop.permute.xlu0 %1205
  %1207 = vrot.lane.b32.xlu0 %v293, 28
  %v1208 = vpop.permute.xlu0 %1207
  %1209 = vrot.lane.b32.xlu0 %v294, 28
  %v1210 = vpop.permute.xlu0 %1209
  %1211 = vrot.lane.b32.xlu0 %v295, 28
  %v1212 = vpop.permute.xlu0 %1211
  %1213 = vrot.lane.b32.xlu0 %v296, 28
  %v1214 = vpop.permute.xlu0 %1213
  %1215 = vrot.lane.b32.xlu0 %v297, 28
  %v1216 = vpop.permute.xlu0 %1215
  %1217 = vrot.lane.b32.xlu0 %v298, 28
  %v1218 = vpop.permute.xlu0 %1217
  %1219 = vrot.lane.b32.xlu0 %v299, 28
  %v1220 = vpop.permute.xlu0 %1219
  %1221 = vrot.lane.b32.xlu0 %v300, 28
  %v1222 = vpop.permute.xlu0 %1221
  %1223 = vrot.lane.b32.xlu0 %v301, 28
  %v1224 = vpop.permute.xlu0 %1223
  %1225 = vrot.lane.b32.xlu0 %v302, 28
  %v1226 = vpop.permute.xlu0 %1225
  %1227 = vrot.lane.b32.xlu0 %v303, 28
  %v1228 = vpop.permute.xlu0 %1227
  %1229 = vrot.lane.b32.xlu0 %v304, 28
  %v1230 = vpop.permute.xlu0 %1229
  %1231 = vrot.lane.b32.xlu0 0, 28
  %v1232 = vpop.permute.xlu0 %1231
  %1233 = vrot.lane.b32.xlu0 %v306, 28
  %v1234 = vpop.permute.xlu0 %1233
  %1235 = vrot.lane.b32.xlu0 %v307, 28
  %v1236 = vpop.permute.xlu0 %1235
  %1237 = vrot.lane.b32.xlu0 %v308, 28
  %v1238 = vpop.permute.xlu0 %1237
  %1239 = vrot.lane.b32.xlu0 %v309, 28
  %v1240 = vpop.permute.xlu0 %1239
  %1241 = vrot.lane.b32.xlu0 %v310, 28
  %v1242 = vpop.permute.xlu0 %1241
  %1243 = vrot.lane.b32.xlu0 %v311, 28
  %v1244 = vpop.permute.xlu0 %1243
  %1245 = vrot.lane.b32.xlu0 %v312, 28
  %v1246 = vpop.permute.xlu0 %1245
  %1247 = vrot.lane.b32.xlu0 %v313, 28
  %v1248 = vpop.permute.xlu0 %1247
  %1249 = vrot.lane.b32.xlu0 %v314, 28
  %v1250 = vpop.permute.xlu0 %1249
  %1251 = vrot.lane.b32.xlu0 %v315, 28
  %v1252 = vpop.permute.xlu0 %1251
  %1253 = vrot.lane.b32.xlu0 %v316, 28
  %v1254 = vpop.permute.xlu0 %1253
  %1255 = vrot.lane.b32.xlu0 %v317, 28
  %v1256 = vpop.permute.xlu0 %1255
  %1257 = vrot.lane.b32.xlu0 %v318, 28
  %v1258 = vpop.permute.xlu0 %1257
  %1259 = vrot.lane.b32.xlu0 %v319, 28
  %v1260 = vpop.permute.xlu0 %1259
  %1261 = vrot.lane.b32.xlu0 %v320, 28
  %v1262 = vpop.permute.xlu0 %1261
  %1263 = vrot.lane.b32.xlu0 %v725, 32
  %v1264 = vpop.permute.xlu0 %1263
  %1265 = vrot.lane.b32.xlu0 %v726, 32
  %v1266 = vpop.permute.xlu0 %1265
  %1267 = vrot.lane.b32.xlu0 %v727, 32
  %v1268 = vpop.permute.xlu0 %1267
  %1269 = vrot.lane.b32.xlu0 %v728, 32
  %v1270 = vpop.permute.xlu0 %1269
  %1271 = vrot.lane.b32.xlu0 %v729, 32
  %v1272 = vpop.permute.xlu0 %1271
  %1273 = vrot.lane.b32.xlu0 %v730, 32
  %v1274 = vpop.permute.xlu0 %1273
  %1275 = vrot.lane.b32.xlu0 %v731, 32
  %v1276 = vpop.permute.xlu0 %1275
  %1277 = vrot.lane.b32.xlu0 %v732, 32
  %v1278 = vpop.permute.xlu0 %1277
  %1279 = vrot.lane.b32.xlu0 %v733, 32
  %v1280 = vpop.permute.xlu0 %1279
  %1281 = vrot.lane.b32.xlu0 %v734, 32
  %v1282 = vpop.permute.xlu0 %1281
  %1283 = vrot.lane.b32.xlu0 %v735, 32
  %v1284 = vpop.permute.xlu0 %1283
  %1285 = vrot.lane.b32.xlu0 %v736, 32
  %v1286 = vpop.permute.xlu0 %1285
  %1287 = vrot.lane.b32.xlu0 %v737, 32
  %v1288 = vpop.permute.xlu0 %1287
  %1289 = vrot.lane.b32.xlu0 %v738, 32
  %v1290 = vpop.permute.xlu0 %1289
  %1291 = vrot.lane.b32.xlu0 %v739, 32
  %v1292 = vpop.permute.xlu0 %1291
  %1293 = vrot.lane.b32.xlu0 %v723, 32
  %v1294 = vpop.permute.xlu0 %1293
  %1295 = vrot.lane.b32.xlu0 %v741, 32
  %v1296 = vpop.permute.xlu0 %1295
  %1297 = vrot.lane.b32.xlu0 %v742, 32
  %v1298 = vpop.permute.xlu0 %1297
  %1299 = vrot.lane.b32.xlu0 %v743, 32
  %v1300 = vpop.permute.xlu0 %1299
  %1301 = vrot.lane.b32.xlu0 %v744, 32
  %v1302 = vpop.permute.xlu0 %1301
  %1303 = vrot.lane.b32.xlu0 %v745, 32
  %v1304 = vpop.permute.xlu0 %1303
  %1305 = vrot.lane.b32.xlu0 %v746, 32
  %v1306 = vpop.permute.xlu0 %1305
  %1307 = vrot.lane.b32.xlu0 %v747, 32
  %v1308 = vpop.permute.xlu0 %1307
  %1309 = vrot.lane.b32.xlu0 %v748, 32
  %v1310 = vpop.permute.xlu0 %1309
  %1311 = vrot.lane.b32.xlu0 %v749, 32
  %v1312 = vpop.permute.xlu0 %1311
  %1313 = vrot.lane.b32.xlu0 %v750, 32
  %v1314 = vpop.permute.xlu0 %1313
  %1315 = vrot.lane.b32.xlu0 %v751, 32
  %v1316 = vpop.permute.xlu0 %1315
  %1317 = vrot.lane.b32.xlu0 %v752, 32
  %v1318 = vpop.permute.xlu0 %1317
  %1319 = vrot.lane.b32.xlu0 %v753, 32
  %v1320 = vpop.permute.xlu0 %1319
  %1321 = vrot.lane.b32.xlu0 %v754, 32
  %v1322 = vpop.permute.xlu0 %1321
  %1323 = vrot.lane.b32.xlu0 %v755, 32
  %v1324 = vpop.permute.xlu0 %1323
  %vm1325 = vcmask 31744
  %v1328 = vsel %vm1325, %v588, %v758
  %v1331 = vsel %vm1325, %v589, %v760
  %v1334 = vsel %vm1325, %v590, %v762
  %v1337 = vsel %vm1325, %v591, %v764
  %v1340 = vsel %vm1325, %v592, %v766
  %v1343 = vsel %vm1325, %v593, %v768
  %v1346 = vsel %vm1325, %v594, %v770
  %v1349 = vsel %vm1325, %v595, %v772
  %v1352 = vsel %vm1325, %v596, %v774
  %v1355 = vsel %vm1325, %v597, %v776
  %v1358 = vsel %vm1325, %v598, %v778
  %v1361 = vsel %vm1325, %v599, %v780
  %v1364 = vsel %vm1325, %v600, %v782
  %v1367 = vsel %vm1325, %v601, %v784
  %v1370 = vsel %vm1325, %v602, %v786
  %v1373 = vsel %vm1325, %v603, %v788
  %v1376 = vsel %vm1325, %v605, %v790
  %v1379 = vsel %vm1325, %v606, %v792
  %v1382 = vsel %vm1325, %v607, %v794
  %v1385 = vsel %vm1325, %v608, %v796
  %v1388 = vsel %vm1325, %v609, %v798
  %v1391 = vsel %vm1325, %v610, %v800
  %v1394 = vsel %vm1325, %v611, %v802
  %v1397 = vsel %vm1325, %v612, %v804
  %v1400 = vsel %vm1325, %v613, %v806
  %v1403 = vsel %vm1325, %v614, %v808
  %v1406 = vsel %vm1325, %v615, %v810
  %v1409 = vsel %vm1325, %v616, %v812
  %v1412 = vsel %vm1325, %v617, %v814
  %v1415 = vsel %vm1325, %v618, %v816
  %v1418 = vsel %vm1325, %v619, %v818
  %vm1419 = vcmask 64512
  %v1421 = vsel %vm1419, %v1328, %v851
  %v1423 = vsel %vm1419, %v1331, %v853
  %v1425 = vsel %vm1419, %v1334, %v855
  %v1427 = vsel %vm1419, %v1337, %v857
  %v1429 = vsel %vm1419, %v1340, %v859
  %v1431 = vsel %vm1419, %v1343, %v861
  %v1433 = vsel %vm1419, %v1346, %v863
  %v1435 = vsel %vm1419, %v1349, %v865
  %v1437 = vsel %vm1419, %v1352, %v867
  %v1439 = vsel %vm1419, %v1355, %v869
  %v1441 = vsel %vm1419, %v1358, %v871
  %v1443 = vsel %vm1419, %v1361, %v873
  %v1445 = vsel %vm1419, %v1364, %v875
  %v1447 = vsel %vm1419, %v1367, %v877
  %v1449 = vsel %vm1419, %v1370, %v879
  %v1451 = vsel %vm1419, %v1373, %v881
  %v1453 = vsel %vm1419, %v1376, %v883
  %v1455 = vsel %vm1419, %v1379, %v885
  %v1457 = vsel %vm1419, %v1382, %v887
  %v1459 = vsel %vm1419, %v1385, %v889
  %v1461 = vsel %vm1419, %v1388, %v891
  %v1463 = vsel %vm1419, %v1391, %v893
  %v1465 = vsel %vm1419, %v1394, %v895
  %v1467 = vsel %vm1419, %v1397, %v897
  %v1469 = vsel %vm1419, %v1400, %v899
  %v1471 = vsel %vm1419, %v1403, %v901
  %v1473 = vsel %vm1419, %v1406, %v903
  %v1475 = vsel %vm1419, %v1409, %v905
  %v1477 = vsel %vm1419, %v1412, %v907
  %v1479 = vsel %vm1419, %v1415, %v909
  %v1481 = vsel %vm1419, %v1418, %v911
  %vm1482 = vcmask 97280
  %v1484 = vsel %vm1482, %v1421, %v945
  %v1486 = vsel %vm1482, %v1423, %v947
  %v1488 = vsel %vm1482, %v1425, %v949
  %v1490 = vsel %vm1482, %v1427, %v951
  %v1492 = vsel %vm1482, %v1429, %v953
  %v1494 = vsel %vm1482, %v1431, %v955
  %v1496 = vsel %vm1482, %v1433, %v957
  %v1498 = vsel %vm1482, %v1435, %v959
  %v1500 = vsel %vm1482, %v1437, %v961
  %v1502 = vsel %vm1482, %v1439, %v963
  %v1504 = vsel %vm1482, %v1441, %v965
  %v1506 = vsel %vm1482, %v1443, %v967
  %v1508 = vsel %vm1482, %v1445, %v969
  %v1510 = vsel %vm1482, %v1447, %v971
  %v1512 = vsel %vm1482, %v1449, %v973
  %v1514 = vsel %vm1482, %v1451, %v975
  %v1516 = vsel %vm1482, %v1421, %v977
  %v1518 = vsel %vm1482, %v1453, %v979
  %v1520 = vsel %vm1482, %v1455, %v981
  %v1522 = vsel %vm1482, %v1457, %v983
  %v1524 = vsel %vm1482, %v1459, %v985
  %v1526 = vsel %vm1482, %v1461, %v987
  %v1528 = vsel %vm1482, %v1463, %v989
  %v1530 = vsel %vm1482, %v1465, %v991
  %v1532 = vsel %vm1482, %v1467, %v993
  %v1534 = vsel %vm1482, %v1469, %v995
  %v1536 = vsel %vm1482, %v1471, %v997
  %v1538 = vsel %vm1482, %v1473, %v999
  %v1540 = vsel %vm1482, %v1475, %v1001
  %v1542 = vsel %vm1482, %v1477, %v1003
  %v1544 = vsel %vm1482, %v1479, %v1005
  %v1546 = vsel %vm1482, %v1481, %v1007
  %vm1547 = vcmask 130048
  %v1549 = vsel %vm1547, %v1484, %v1009
  %v1551 = vsel %vm1547, %v1486, %v1011
  %v1553 = vsel %vm1547, %v1488, %v1013
  %v1555 = vsel %vm1547, %v1490, %v1015
  %v1557 = vsel %vm1547, %v1492, %v1017
  %v1559 = vsel %vm1547, %v1494, %v1019
  %v1561 = vsel %vm1547, %v1496, %v1021
  %v1563 = vsel %vm1547, %v1498, %v1023
  %v1565 = vsel %vm1547, %v1500, %v1025
  %v1567 = vsel %vm1547, %v1502, %v1027
  %v1569 = vsel %vm1547, %v1504, %v1029
  %v1571 = vsel %vm1547, %v1506, %v1031
  %v1573 = vsel %vm1547, %v1508, %v1033
  %v1575 = vsel %vm1547, %v1510, %v1035
  %v1577 = vsel %vm1547, %v1512, %v1037
  %v1579 = vsel %vm1547, %v1514, %v1039
  %v1581 = vsel %vm1547, %v1516, %v1041
  %v1583 = vsel %vm1547, %v1518, %v1043
  %v1585 = vsel %vm1547, %v1520, %v1045
  %v1587 = vsel %vm1547, %v1522, %v1047
  %v1589 = vsel %vm1547, %v1524, %v1049
  %v1591 = vsel %vm1547, %v1526, %v1051
  %v1593 = vsel %vm1547, %v1528, %v1053
  %v1595 = vsel %vm1547, %v1530, %v1055
  %v1597 = vsel %vm1547, %v1532, %v1057
  %v1599 = vsel %vm1547, %v1534, %v1059
  %v1601 = vsel %vm1547, %v1536, %v1061
  %v1603 = vsel %vm1547, %v1538, %v1063
  %v1605 = vsel %vm1547, %v1540, %v1065
  %v1607 = vsel %vm1547, %v1542, %v1067
  %v1609 = vsel %vm1547, %v1544, %v1069
  %v1611 = vsel %vm1547, %v1546, %v1071
  %vm1612 = vcmask 162816
  %v1614 = vsel %vm1612, %v1549, %v1075
  %v1616 = vsel %vm1612, %v1551, %v1077
  %v1618 = vsel %vm1612, %v1553, %v1079
  %v1620 = vsel %vm1612, %v1555, %v1081
  %v1622 = vsel %vm1612, %v1557, %v1083
  %v1624 = vsel %vm1612, %v1559, %v1085
  %v1626 = vsel %vm1612, %v1561, %v1087
  %v1628 = vsel %vm1612, %v1563, %v1089
  %v1630 = vsel %vm1612, %v1565, %v1091
  %v1632 = vsel %vm1612, %v1567, %v1093
  %v1634 = vsel %vm1612, %v1569, %v1095
  %v1636 = vsel %vm1612, %v1571, %v1097
  %v1638 = vsel %vm1612, %v1573, %v1099
  %v1640 = vsel %vm1612, %v1575, %v1101
  %v1642 = vsel %vm1612, %v1577, %v1103
  %v1644 = vsel %vm1612, %v1579, %v1105
  %v1646 = vsel %vm1612, %v1581, %v1107
  %v1648 = vsel %vm1612, %v1583, %v1109
  %v1650 = vsel %vm1612, %v1585, %v1111
  %v1652 = vsel %vm1612, %v1587, %v1113
  %v1654 = vsel %vm1612, %v1589, %v1115
  %v1656 = vsel %vm1612, %v1591, %v1117
  %v1658 = vsel %vm1612, %v1593, %v1119
  %v1660 = vsel %vm1612, %v1595, %v1121
  %v1662 = vsel %vm1612, %v1597, %v1123
  %v1664 = vsel %vm1612, %v1599, %v1125
  %v1666 = vsel %vm1612, %v1601, %v1127
  %v1668 = vsel %vm1612, %v1603, %v1129
  %v1670 = vsel %vm1612, %v1605, %v1131
  %v1672 = vsel %vm1612, %v1607, %v1133
  %v1674 = vsel %vm1612, %v1609, %v1135
  %v1676 = vsel %vm1612, %v1611, %v1137
  %vm1677 = vcmask 195584
  %v1679 = vsel %vm1677, %v1614, %v1140
  %v1681 = vsel %vm1677, %v1616, %v1142
  %v1683 = vsel %vm1677, %v1618, %v1144
  %v1685 = vsel %vm1677, %v1620, %v1146
  %v1687 = vsel %vm1677, %v1622, %v1148
  %v1689 = vsel %vm1677, %v1624, %v1150
  %v1691 = vsel %vm1677, %v1626, %v1152
  %v1693 = vsel %vm1677, %v1628, %v1154
  %v1695 = vsel %vm1677, %v1630, %v1156
  %v1697 = vsel %vm1677, %v1632, %v1158
  %v1699 = vsel %vm1677, %v1634, %v1160
  %v1701 = vsel %vm1677, %v1636, %v1162
  %v1703 = vsel %vm1677, %v1638, %v1164
  %v1705 = vsel %vm1677, %v1640, %v1166
  %v1707 = vsel %vm1677, %v1642, %v1168
  %v1709 = vsel %vm1677, %v1644, %v1170
  %v1711 = vsel %vm1677, %v1646, %v1172
  %v1713 = vsel %vm1677, %v1648, %v1174
  %v1715 = vsel %vm1677, %v1650, %v1176
  %v1717 = vsel %vm1677, %v1652, %v1178
  %v1719 = vsel %vm1677, %v1654, %v1180
  %v1721 = vsel %vm1677, %v1656, %v1182
  %v1723 = vsel %vm1677, %v1658, %v1184
  %v1725 = vsel %vm1677, %v1660, %v1186
  %v1727 = vsel %vm1677, %v1662, %v1188
  %v1729 = vsel %vm1677, %v1664, %v1190
  %v1731 = vsel %vm1677, %v1666, %v1192
  %v1733 = vsel %vm1677, %v1668, %v1194
  %v1735 = vsel %vm1677, %v1670, %v1196
  %v1737 = vsel %vm1677, %v1672, %v1198
  %v1739 = vsel %vm1677, %v1674, %v1200
  %v1740 = vsel %vm1677, %v1676, %v1170
  %vm1741 = vcmask 228352
  %v1743 = vsel %vm1741, %v1679, %v1202
  %v1745 = vsel %vm1741, %v1681, %v1204
  %v1747 = vsel %vm1741, %v1683, %v1206
  %v1749 = vsel %vm1741, %v1685, %v1208
  %v1751 = vsel %vm1741, %v1687, %v1210
  %v1753 = vsel %vm1741, %v1689, %v1212
  %v1755 = vsel %vm1741, %v1691, %v1214
  %v1757 = vsel %vm1741, %v1693, %v1216
  %v1759 = vsel %vm1741, %v1695, %v1218
  %v1761 = vsel %vm1741, %v1697, %v1220
  %v1763 = vsel %vm1741, %v1699, %v1222
  %v1765 = vsel %vm1741, %v1701, %v1224
  %v1767 = vsel %vm1741, %v1703, %v1226
  %v1769 = vsel %vm1741, %v1705, %v1228
  %v1771 = vsel %vm1741, %v1707, %v1230
  %v1773 = vsel %vm1741, %v1709, %v1232
  %v1775 = vsel %vm1741, %v1711, %v1234
  %v1777 = vsel %vm1741, %v1713, %v1236
  %v1779 = vsel %vm1741, %v1715, %v1238
  %v1781 = vsel %vm1741, %v1717, %v1240
  %v1783 = vsel %vm1741, %v1719, %v1242
  %v1785 = vsel %vm1741, %v1721, %v1244
  %v1787 = vsel %vm1741, %v1723, %v1246
  %v1789 = vsel %vm1741, %v1725, %v1248
  %v1791 = vsel %vm1741, %v1727, %v1250
  %v1793 = vsel %vm1741, %v1729, %v1252
  %v1795 = vsel %vm1741, %v1731, %v1254
  %v1797 = vsel %vm1741, %v1733, %v1256
  %v1799 = vsel %vm1741, %v1735, %v1258
  %v1801 = vsel %vm1741, %v1737, %v1260
  %v1803 = vsel %vm1741, %v1739, %v1262
  %v1804 = vsel %vm1741, %v1740, %v1232
  %vm1805 = vcmask 261120
  %v1807 = vsel %vm1805, %v1743, %v1264
  %v1809 = vsel %vm1805, %v1745, %v1266
  %v1811 = vsel %vm1805, %v1747, %v1268
  %v1813 = vsel %vm1805, %v1749, %v1270
  %v1815 = vsel %vm1805, %v1751, %v1272
  %v1817 = vsel %vm1805, %v1753, %v1274
  %v1819 = vsel %vm1805, %v1755, %v1276
  %v1821 = vsel %vm1805, %v1757, %v1278
  %v1823 = vsel %vm1805, %v1759, %v1280
  %v1825 = vsel %vm1805, %v1761, %v1282
  %v1827 = vsel %vm1805, %v1763, %v1284
  %v1829 = vsel %vm1805, %v1765, %v1286
  %v1831 = vsel %vm1805, %v1767, %v1288
  %v1833 = vsel %vm1805, %v1769, %v1290
  %v1835 = vsel %vm1805, %v1771, %v1292
  %v1837 = vsel %vm1805, %v1773, %v1294
  %v1839 = vsel %vm1805, %v1775, %v1296
  %v1841 = vsel %vm1805, %v1777, %v1298
  %v1843 = vsel %vm1805, %v1779, %v1300
  %v1845 = vsel %vm1805, %v1781, %v1302
  %v1847 = vsel %vm1805, %v1783, %v1304
  %v1849 = vsel %vm1805, %v1785, %v1306
  %v1851 = vsel %vm1805, %v1787, %v1308
  %v1853 = vsel %vm1805, %v1789, %v1310
  %v1855 = vsel %vm1805, %v1791, %v1312
  %v1857 = vsel %vm1805, %v1793, %v1314
  %v1859 = vsel %vm1805, %v1795, %v1316
  %v1861 = vsel %vm1805, %v1797, %v1318
  %v1863 = vsel %vm1805, %v1799, %v1320
  %v1865 = vsel %vm1805, %v1801, %v1322
  %v1867 = vsel %vm1805, %v1803, %v1324
  %v1868 = vsel %vm1805, %v1804, %v1294
  %vm1869 = vcmask 293888
  %v1870 = vsel %vm1869, %v1807, 0
  %v1872 = vsel %vm1869, %v1809, 0
  %v1874 = vsel %vm1869, %v1811, 0
  %v1876 = vsel %vm1869, %v1813, 0
  %v1878 = vsel %vm1869, %v1815, 0
  %v1880 = vsel %vm1869, %v1817, 0
  %v1882 = vsel %vm1869, %v1819, 0
  %v1884 = vsel %vm1869, %v1821, 0
  %v1886 = vsel %vm1869, %v1823, 0
  %v1888 = vsel %vm1869, %v1825, 0
  %v1890 = vsel %vm1869, %v1827, 0
  %v1892 = vsel %vm1869, %v1829, 0
  %v1894 = vsel %vm1869, %v1831, 0
  %v1896 = vsel %vm1869, %v1833, 0
  %v1898 = vsel %vm1869, %v1835, 0
  %v1900 = vsel %vm1869, %v1837, 0
  %v1902 = vsel %vm1869, %v1839, 0
  %v1904 = vsel %vm1869, %v1841, 0
  %v1906 = vsel %vm1869, %v1843, 0
  %v1908 = vsel %vm1869, %v1845, 0
  %v1910 = vsel %vm1869, %v1847, 0
  %v1912 = vsel %vm1869, %v1849, 0
  %v1914 = vsel %vm1869, %v1851, 0
  %v1916 = vsel %vm1869, %v1853, 0
  %v1918 = vsel %vm1869, %v1855, 0
  %v1920 = vsel %vm1869, %v1857, 0
  %v1922 = vsel %vm1869, %v1859, 0
  %v1924 = vsel %vm1869, %v1861, 0
  %v1926 = vsel %vm1869, %v1863, 0
  %v1928 = vsel %vm1869, %v1865, 0
  %v1930 = vsel %vm1869, %v1867, 0
  %v1932 = vsel %vm1869, %v1868, 0
  %v1934 = vld [vmem:[%s1] sm:$0xff]
  %v1935 = vld [vmem:[%s1 + $0x8] sm:$0xff]
  %v1936 = vld [vmem:[%s1 + $0x10] sm:$0xff]
  %v1937 = vld [vmem:[%s1 + $0x18] sm:$0xff]
  %v1938 = vld [vmem:[%s1 + $0x20] sm:$0xff]
  %v1939 = vld [vmem:[%s1 + $0x28] sm:$0xff]
  %v1940 = vld [vmem:[%s1 + $0x30] sm:$0xff]
  %v1941 = vld [vmem:[%s1 + $0x38] sm:$0xff]
  %v1942 = vld [vmem:[%s1 + $0x40] sm:$0xff]
  %v1943 = vld [vmem:[%s1 + $0x48] sm:$0xff]
  %v1944 = vld [vmem:[%s1 + $0x50] sm:$0xff]
  %v1945 = vld [vmem:[%s1 + $0x58] sm:$0xff]
  %v1946 = vld [vmem:[%s1 + $0x60] sm:$0xff]
  %v1947 = vld [vmem:[%s1 + $0x68] sm:$0xff]
  %v1948 = vld [vmem:[%s1 + $0x70] sm:$0xff]
  %v1949 = vld [vmem:[%s1 + $0x78] sm:$0xff]
  %v1966 = vunpack.c.l.b16 %v1934
  %v1967 = vunpack.c.h.b16 %v1934
  %v1968 = vunpack.c.l.b16 %v1935
  %v1969 = vunpack.c.h.b16 %v1935
  %v1970 = vunpack.c.l.b16 %v1936
  %v1971 = vunpack.c.h.b16 %v1936
  %v1972 = vunpack.c.l.b16 %v1937
  %v1973 = vunpack.c.h.b16 %v1937
  %v1974 = vunpack.c.l.b16 %v1938
  %v1975 = vunpack.c.h.b16 %v1938
  %v1976 = vunpack.c.l.b16 %v1939
  %v1977 = vunpack.c.h.b16 %v1939
  %v1978 = vunpack.c.l.b16 %v1940
  %v1979 = vunpack.c.h.b16 %v1940
  %v1980 = vunpack.c.l.b16 %v1941
  %v1981 = vunpack.c.h.b16 %v1941
  %v1982 = vunpack.c.l.b16 %v1942
  %v1983 = vunpack.c.h.b16 %v1942
  %v1984 = vunpack.c.l.b16 %v1943
  %v1985 = vunpack.c.h.b16 %v1943
  %v1986 = vunpack.c.l.b16 %v1944
  %v1987 = vunpack.c.h.b16 %v1944
  %v1988 = vunpack.c.l.b16 %v1945
  %v1989 = vunpack.c.h.b16 %v1945
  %v1990 = vunpack.c.l.b16 %v1946
  %v1991 = vunpack.c.h.b16 %v1946
  %v1992 = vunpack.c.l.b16 %v1947
  %v1993 = vunpack.c.h.b16 %v1947
  %v1994 = vunpack.c.l.b16 %v1948
  %v1995 = vunpack.c.h.b16 %v1948
  %v1996 = vunpack.c.l.b16 %v1949
  %v1997 = vunpack.c.h.b16 %v1949
  %v1998 = vpack.c.b16 %v1968, %v1966
  %v1999 = vpack.c.b16 %v1969, %v1967
  %v2000 = vpack.c.b16 %v1972, %v1970
  %v2001 = vpack.c.b16 %v1973, %v1971
  %v2002 = vpack.c.b16 %v1976, %v1974
  %v2003 = vpack.c.b16 %v1977, %v1975
  %v2004 = vpack.c.b16 %v1980, %v1978
  %v2005 = vpack.c.b16 %v1981, %v1979
  %v2006 = vpack.c.b16 %v1984, %v1982
  %v2007 = vpack.c.b16 %v1985, %v1983
  %v2008 = vpack.c.b16 %v1988, %v1986
  %v2009 = vpack.c.b16 %v1989, %v1987
  %v2010 = vpack.c.b16 %v1992, %v1990
  %v2011 = vpack.c.b16 %v1993, %v1991
  %v2012 = vpack.c.b16 %v1996, %v1994
  %v2013 = vpack.c.b16 %v1997, %v1995
  %2030 = vmatpush.bf16.msra.mxu0 %v2012
  %2031 = vmatpush.bf16.msra.mxu0 %v2010
  %2032 = vmatpush.bf16.msra.mxu0 %v2008
  %2033 = vmatpush.bf16.msra.mxu0 %v2006
  %2034 = vmatpush.bf16.msra.mxu0 %v2004
  %2035 = vmatpush.bf16.msra.mxu0 %v2002
  %2036 = vmatpush.bf16.msra.mxu0 %v2000
  %2037 = vmatpush.bf16.msra.mxu0 %v1998
  %2038 = vmatmul.bf16.gmra.mxu0 %v1870
  %v2039 = vpop.f32.mrf.mxu0
  %v2040 = vadd.f32 0.0, %v2039
  %v2041 = vpop.f32.mrf.mxu0
  %v2042 = vadd.f32 0.0, %v2041
  %2043 = vmatmul.bf16.gmra.mxu0 %v1872
  %v2044 = vpop.f32.mrf.mxu0
  %v2045 = vadd.f32 0.0, %v2044
  %v2046 = vpop.f32.mrf.mxu0
  %v2047 = vadd.f32 0.0, %v2046
  %2048 = vmatmul.bf16.gmra.mxu0 %v1874
  %v2049 = vpop.f32.mrf.mxu0
  %v2050 = vadd.f32 0.0, %v2049
  %v2051 = vpop.f32.mrf.mxu0
  %v2052 = vadd.f32 0.0, %v2051
  %2053 = vmatmul.bf16.gmra.mxu0 %v1876
  %v2054 = vpop.f32.mrf.mxu0
  %v2055 = vadd.f32 0.0, %v2054
  %v2056 = vpop.f32.mrf.mxu0
  %v2057 = vadd.f32 0.0, %v2056
  %2058 = vmatmul.bf16.gmra.mxu0 %v1878
  %v2059 = vpop.f32.mrf.mxu0
  %v2060 = vadd.f32 0.0, %v2059
  %v2061 = vpop.f32.mrf.mxu0
  %v2062 = vadd.f32 0.0, %v2061
  %2063 = vmatmul.bf16.gmra.mxu0 %v1880
  %v2064 = vpop.f32.mrf.mxu0
  %v2065 = vadd.f32 0.0, %v2064
  %v2066 = vpop.f32.mrf.mxu0
  %v2067 = vadd.f32 0.0, %v2066
  %2068 = vmatmul.bf16.gmra.mxu0 %v1882
  %v2069 = vpop.f32.mrf.mxu0
  %v2070 = vadd.f32 0.0, %v2069
  %v2071 = vpop.f32.mrf.mxu0
  %v2072 = vadd.f32 0.0, %v2071
  %2073 = vmatmul.bf16.gmra.mxu0 %v1884
  %v2074 = vpop.f32.mrf.mxu0
  %v2075 = vadd.f32 0.0, %v2074
  %v2076 = vpop.f32.mrf.mxu0
  %v2077 = vadd.f32 0.0, %v2076
  %2078 = vmatmul.bf16.gmra.mxu0 %v1886
  %v2079 = vpop.f32.mrf.mxu0
  %v2080 = vadd.f32 0.0, %v2079
  %v2081 = vpop.f32.mrf.mxu0
  %v2082 = vadd.f32 0.0, %v2081
  %2083 = vmatmul.bf16.gmra.mxu0 %v1888
  %v2084 = vpop.f32.mrf.mxu0
  %v2085 = vadd.f32 0.0, %v2084
  %v2086 = vpop.f32.mrf.mxu0
  %v2087 = vadd.f32 0.0, %v2086
  %2088 = vmatmul.bf16.gmra.mxu0 %v1890
  %v2089 = vpop.f32.mrf.mxu0
  %v2090 = vadd.f32 0.0, %v2089
  %v2091 = vpop.f32.mrf.mxu0
  %v2092 = vadd.f32 0.0, %v2091
  %2093 = vmatmul.bf16.gmra.mxu0 %v1892
  %v2094 = vpop.f32.mrf.mxu0
  %v2095 = vadd.f32 0.0, %v2094
  %v2096 = vpop.f32.mrf.mxu0
  %v2097 = vadd.f32 0.0, %v2096
  %2098 = vmatmul.bf16.gmra.mxu0 %v1894
  %v2099 = vpop.f32.mrf.mxu0
  %v2100 = vadd.f32 0.0, %v2099
  %v2101 = vpop.f32.mrf.mxu0
  %v2102 = vadd.f32 0.0, %v2101
  %2103 = vmatmul.bf16.gmra.mxu0 %v1896
  %v2104 = vpop.f32.mrf.mxu0
  %v2105 = vadd.f32 0.0, %v2104
  %v2106 = vpop.f32.mrf.mxu0
  %v2107 = vadd.f32 0.0, %v2106
  %2108 = vmatmul.bf16.gmra.mxu0 %v1898
  %v2109 = vpop.f32.mrf.mxu0
  %v2110 = vadd.f32 0.0, %v2109
  %v2111 = vpop.f32.mrf.mxu0
  %v2112 = vadd.f32 0.0, %v2111
  %2113 = vmatmul.bf16.gmra.mxu0 %v1900
  %v2114 = vpop.f32.mrf.mxu0
  %v2115 = vadd.f32 0.0, %v2114
  %v2116 = vpop.f32.mrf.mxu0
  %v2117 = vadd.f32 0.0, %v2116
  %2118 = vmatmul.bf16.gmra.mxu0 %v1902
  %v2119 = vpop.f32.mrf.mxu0
  %v2120 = vadd.f32 0.0, %v2119
  %v2121 = vpop.f32.mrf.mxu0
  %v2122 = vadd.f32 0.0, %v2121
  %2123 = vmatmul.bf16.gmra.mxu0 %v1904
  %v2124 = vpop.f32.mrf.mxu0
  %v2125 = vadd.f32 0.0, %v2124
  %v2126 = vpop.f32.mrf.mxu0
  %v2127 = vadd.f32 0.0, %v2126
  %2128 = vmatmul.bf16.gmra.mxu0 %v1906
  %v2129 = vpop.f32.mrf.mxu0
  %v2130 = vadd.f32 0.0, %v2129
  %v2131 = vpop.f32.mrf.mxu0
  %v2132 = vadd.f32 0.0, %v2131
  %2133 = vmatmul.bf16.gmra.mxu0 %v1908
  %v2134 = vpop.f32.mrf.mxu0
  %v2135 = vadd.f32 0.0, %v2134
  %v2136 = vpop.f32.mrf.mxu0
  %v2137 = vadd.f32 0.0, %v2136
  %2138 = vmatmul.bf16.gmra.mxu0 %v1910
  %v2139 = vpop.f32.mrf.mxu0
  %v2140 = vadd.f32 0.0, %v2139
  %v2141 = vpop.f32.mrf.mxu0
  %v2142 = vadd.f32 0.0, %v2141
  %2143 = vmatmul.bf16.gmra.mxu0 %v1912
  %v2144 = vpop.f32.mrf.mxu0
  %v2145 = vadd.f32 0.0, %v2144
  %v2146 = vpop.f32.mrf.mxu0
  %v2147 = vadd.f32 0.0, %v2146
  %2148 = vmatmul.bf16.gmra.mxu0 %v1914
  %v2149 = vpop.f32.mrf.mxu0
  %v2150 = vadd.f32 0.0, %v2149
  %v2151 = vpop.f32.mrf.mxu0
  %v2152 = vadd.f32 0.0, %v2151
  %2153 = vmatmul.bf16.gmra.mxu0 %v1916
  %v2154 = vpop.f32.mrf.mxu0
  %v2155 = vadd.f32 0.0, %v2154
  %v2156 = vpop.f32.mrf.mxu0
  %v2157 = vadd.f32 0.0, %v2156
  %2158 = vmatmul.bf16.gmra.mxu0 %v1918
  %v2159 = vpop.f32.mrf.mxu0
  %v2160 = vadd.f32 0.0, %v2159
  %v2161 = vpop.f32.mrf.mxu0
  %v2162 = vadd.f32 0.0, %v2161
  %2163 = vmatmul.bf16.gmra.mxu0 %v1920
  %v2164 = vpop.f32.mrf.mxu0
  %v2165 = vadd.f32 0.0, %v2164
  %v2166 = vpop.f32.mrf.mxu0
  %v2167 = vadd.f32 0.0, %v2166
  %2168 = vmatmul.bf16.gmra.mxu0 %v1922
  %v2169 = vpop.f32.mrf.mxu0
  %v2170 = vadd.f32 0.0, %v2169
  %v2171 = vpop.f32.mrf.mxu0
  %v2172 = vadd.f32 0.0, %v2171
  %2173 = vmatmul.bf16.gmra.mxu0 %v1924
  %v2174 = vpop.f32.mrf.mxu0
  %v2175 = vadd.f32 0.0, %v2174
  %v2176 = vpop.f32.mrf.mxu0
  %v2177 = vadd.f32 0.0, %v2176
  %2178 = vmatmul.bf16.gmra.mxu0 %v1926
  %v2179 = vpop.f32.mrf.mxu0
  %v2180 = vadd.f32 0.0, %v2179
  %v2181 = vpop.f32.mrf.mxu0
  %v2182 = vadd.f32 0.0, %v2181
  %2183 = vmatmul.bf16.gmra.mxu0 %v1928
  %v2184 = vpop.f32.mrf.mxu0
  %v2185 = vadd.f32 0.0, %v2184
  %v2186 = vpop.f32.mrf.mxu0
  %v2187 = vadd.f32 0.0, %v2186
  %2188 = vmatmul.bf16.gmra.mxu0 %v1930
  %v2189 = vpop.f32.mrf.mxu0
  %v2190 = vadd.f32 0.0, %v2189
  %v2191 = vpop.f32.mrf.mxu0
  %v2192 = vadd.f32 0.0, %v2191
  %2193 = vmatmul.bf16.gmra.mxu0 %v1932
  %v2194 = vpop.f32.mrf.mxu0
  %v2195 = vadd.f32 0.0, %v2194
  %v2196 = vpop.f32.mrf.mxu0
  %v2197 = vadd.f32 0.0, %v2196
  %2198 = vdwg.mxu0
  %2199 = vmatpush.bf16.msra.mxu0 %v2013
  %2200 = vmatpush.bf16.msra.mxu0 %v2011
  %2201 = vmatpush.bf16.msra.mxu0 %v2009
  %2202 = vmatpush.bf16.msra.mxu0 %v2007
  %2203 = vmatpush.bf16.msra.mxu0 %v2005
  %2204 = vmatpush.bf16.msra.mxu0 %v2003
  %2205 = vmatpush.bf16.msra.mxu0 %v2001
  %2206 = vmatpush.bf16.msra.mxu0 %v1999
  %2207 = vmatmul.bf16.gmra.mxu0 %v1870
  %v2208 = vpop.f32.mrf.mxu0
  %v2209 = vadd.f32 0.0, %v2208
  %v2210 = vpop.f32.mrf.mxu0
  %v2211 = vadd.f32 0.0, %v2210
  %2212 = vmatmul.bf16.gmra.mxu0 %v1872
  %v2213 = vpop.f32.mrf.mxu0
  %v2214 = vadd.f32 0.0, %v2213
  %v2215 = vpop.f32.mrf.mxu0
  %v2216 = vadd.f32 0.0, %v2215
  %2217 = vmatmul.bf16.gmra.mxu0 %v1874
  %v2218 = vpop.f32.mrf.mxu0
  %v2219 = vadd.f32 0.0, %v2218
  %v2220 = vpop.f32.mrf.mxu0
  %v2221 = vadd.f32 0.0, %v2220
  %2222 = vmatmul.bf16.gmra.mxu0 %v1876
  %v2223 = vpop.f32.mrf.mxu0
  %v2224 = vadd.f32 0.0, %v2223
  %v2225 = vpop.f32.mrf.mxu0
  %v2226 = vadd.f32 0.0, %v2225
  %2227 = vmatmul.bf16.gmra.mxu0 %v1878
  %v2228 = vpop.f32.mrf.mxu0
  %v2229 = vadd.f32 0.0, %v2228
  %v2230 = vpop.f32.mrf.mxu0
  %v2231 = vadd.f32 0.0, %v2230
  %2232 = vmatmul.bf16.gmra.mxu0 %v1880
  %v2233 = vpop.f32.mrf.mxu0
  %v2234 = vadd.f32 0.0, %v2233
  %v2235 = vpop.f32.mrf.mxu0
  %v2236 = vadd.f32 0.0, %v2235
  %2237 = vmatmul.bf16.gmra.mxu0 %v1882
  %v2238 = vpop.f32.mrf.mxu0
  %v2239 = vadd.f32 0.0, %v2238
  %v2240 = vpop.f32.mrf.mxu0
  %v2241 = vadd.f32 0.0, %v2240
  %2242 = vmatmul.bf16.gmra.mxu0 %v1884
  %v2243 = vpop.f32.mrf.mxu0
  %v2244 = vadd.f32 0.0, %v2243
  %v2245 = vpop.f32.mrf.mxu0
  %v2246 = vadd.f32 0.0, %v2245
  %2247 = vmatmul.bf16.gmra.mxu0 %v1886
  %v2248 = vpop.f32.mrf.mxu0
  %v2249 = vadd.f32 0.0, %v2248
  %v2250 = vpop.f32.mrf.mxu0
  %v2251 = vadd.f32 0.0, %v2250
  %2252 = vmatmul.bf16.gmra.mxu0 %v1888
  %v2253 = vpop.f32.mrf.mxu0
  %v2254 = vadd.f32 0.0, %v2253
  %v2255 = vpop.f32.mrf.mxu0
  %v2256 = vadd.f32 0.0, %v2255
  %2257 = vmatmul.bf16.gmra.mxu0 %v1890
  %v2258 = vpop.f32.mrf.mxu0
  %v2259 = vadd.f32 0.0, %v2258
  %v2260 = vpop.f32.mrf.mxu0
  %v2261 = vadd.f32 0.0, %v2260
  %2262 = vmatmul.bf16.gmra.mxu0 %v1892
  %v2263 = vpop.f32.mrf.mxu0
  %v2264 = vadd.f32 0.0, %v2263
  %v2265 = vpop.f32.mrf.mxu0
  %v2266 = vadd.f32 0.0, %v2265
  %2267 = vmatmul.bf16.gmra.mxu0 %v1894
  %v2268 = vpop.f32.mrf.mxu0
  %v2269 = vadd.f32 0.0, %v2268
  %v2270 = vpop.f32.mrf.mxu0
  %v2271 = vadd.f32 0.0, %v2270
  %2272 = vmatmul.bf16.gmra.mxu0 %v1896
  %v2273 = vpop.f32.mrf.mxu0
  %v2274 = vadd.f32 0.0, %v2273
  %v2275 = vpop.f32.mrf.mxu0
  %v2276 = vadd.f32 0.0, %v2275
  %2277 = vmatmul.bf16.gmra.mxu0 %v1898
  %v2278 = vpop.f32.mrf.mxu0
  %v2279 = vadd.f32 0.0, %v2278
  %v2280 = vpop.f32.mrf.mxu0
  %v2281 = vadd.f32 0.0, %v2280
  %2282 = vmatmul.bf16.gmra.mxu0 %v1900
  %v2283 = vpop.f32.mrf.mxu0
  %v2284 = vadd.f32 0.0, %v2283
  %v2285 = vpop.f32.mrf.mxu0
  %v2286 = vadd.f32 0.0, %v2285
  %2287 = vmatmul.bf16.gmra.mxu0 %v1902
  %v2288 = vpop.f32.mrf.mxu0
  %v2289 = vadd.f32 0.0, %v2288
  %v2290 = vpop.f32.mrf.mxu0
  %v2291 = vadd.f32 0.0, %v2290
  %2292 = vmatmul.bf16.gmra.mxu0 %v1904
  %v2293 = vpop.f32.mrf.mxu0
  %v2294 = vadd.f32 0.0, %v2293
  %v2295 = vpop.f32.mrf.mxu0
  %v2296 = vadd.f32 0.0, %v2295
  %2297 = vmatmul.bf16.gmra.mxu0 %v1906
  %v2298 = vpop.f32.mrf.mxu0
  %v2299 = vadd.f32 0.0, %v2298
  %v2300 = vpop.f32.mrf.mxu0
  %v2301 = vadd.f32 0.0, %v2300
  %2302 = vmatmul.bf16.gmra.mxu0 %v1908
  %v2303 = vpop.f32.mrf.mxu0
  %v2304 = vadd.f32 0.0, %v2303
  %v2305 = vpop.f32.mrf.mxu0
  %v2306 = vadd.f32 0.0, %v2305
  %2307 = vmatmul.bf16.gmra.mxu0 %v1910
  %v2308 = vpop.f32.mrf.mxu0
  %v2309 = vadd.f32 0.0, %v2308
  %v2310 = vpop.f32.mrf.mxu0
  %v2311 = vadd.f32 0.0, %v2310
  %2312 = vmatmul.bf16.gmra.mxu0 %v1912
  %v2313 = vpop.f32.mrf.mxu0
  %v2314 = vadd.f32 0.0, %v2313
  %v2315 = vpop.f32.mrf.mxu0
  %v2316 = vadd.f32 0.0, %v2315
  %2317 = vmatmul.bf16.gmra.mxu0 %v1914
  %v2318 = vpop.f32.mrf.mxu0
  %v2319 = vadd.f32 0.0, %v2318
  %v2320 = vpop.f32.mrf.mxu0
  %v2321 = vadd.f32 0.0, %v2320
  %2322 = vmatmul.bf16.gmra.mxu0 %v1916
  %v2323 = vpop.f32.mrf.mxu0
  %v2324 = vadd.f32 0.0, %v2323
  %v2325 = vpop.f32.mrf.mxu0
  %v2326 = vadd.f32 0.0, %v2325
  %2327 = vmatmul.bf16.gmra.mxu0 %v1918
  %v2328 = vpop.f32.mrf.mxu0
  %v2329 = vadd.f32 0.0, %v2328
  %v2330 = vpop.f32.mrf.mxu0
  %v2331 = vadd.f32 0.0, %v2330
  %2332 = vmatmul.bf16.gmra.mxu0 %v1920
  %v2333 = vpop.f32.mrf.mxu0
  %v2334 = vadd.f32 0.0, %v2333
  %v2335 = vpop.f32.mrf.mxu0
  %v2336 = vadd.f32 0.0, %v2335
  %2337 = vmatmul.bf16.gmra.mxu0 %v1922
  %v2338 = vpop.f32.mrf.mxu0
  %v2339 = vadd.f32 0.0, %v2338
  %v2340 = vpop.f32.mrf.mxu0
  %v2341 = vadd.f32 0.0, %v2340
  %2342 = vmatmul.bf16.gmra.mxu0 %v1924
  %v2343 = vpop.f32.mrf.mxu0
  %v2344 = vadd.f32 0.0, %v2343
  %v2345 = vpop.f32.mrf.mxu0
  %v2346 = vadd.f32 0.0, %v2345
  %2347 = vmatmul.bf16.gmra.mxu0 %v1926
  %v2348 = vpop.f32.mrf.mxu0
  %v2349 = vadd.f32 0.0, %v2348
  %v2350 = vpop.f32.mrf.mxu0
  %v2351 = vadd.f32 0.0, %v2350
  %2352 = vmatmul.bf16.gmra.mxu0 %v1928
  %v2353 = vpop.f32.mrf.mxu0
  %v2354 = vadd.f32 0.0, %v2353
  %v2355 = vpop.f32.mrf.mxu0
  %v2356 = vadd.f32 0.0, %v2355
  %2357 = vmatmul.bf16.gmra.mxu0 %v1930
  %v2358 = vpop.f32.mrf.mxu0
  %v2359 = vadd.f32 0.0, %v2358
  %v2360 = vpop.f32.mrf.mxu0
  %v2361 = vadd.f32 0.0, %v2360
  %2362 = vmatmul.bf16.gmra.mxu0 %v1932
  %v2363 = vpop.f32.mrf.mxu0
  %v2364 = vadd.f32 0.0, %v2363
  %v2365 = vpop.f32.mrf.mxu0
  %v2366 = vadd.f32 0.0, %v2365
  %2367 = vdwg.mxu0
  %v2368 = vld [vmem:[%s2] sm:$0x1]
  %v2369 = vld [vmem:[%s3] sm:$0x1]
  %v2370 = vadd.f32 %v2040, %v2042
  %v2371 = vadd.f32 %v2370, %v2045
  %v2372 = vadd.f32 %v2371, %v2047
  %v2373 = vadd.f32 %v2372, %v2050
  %v2374 = vadd.f32 %v2373, %v2052
  %v2375 = vadd.f32 %v2374, %v2055
  %v2376 = vadd.f32 %v2375, %v2057
  %v2377 = vadd.f32 %v2376, %v2060
  %v2378 = vadd.f32 %v2377, %v2062
  %v2379 = vadd.f32 %v2378, %v2065
  %v2380 = vadd.f32 %v2379, %v2067
  %v2381 = vadd.f32 %v2380, %v2070
  %v2382 = vadd.f32 %v2381, %v2072
  %v2383 = vadd.f32 %v2382, %v2075
  %v2384 = vadd.f32 %v2383, %v2077
  %v2385 = vadd.f32 %v2384, %v2080
  %v2386 = vadd.f32 %v2385, %v2082
  %v2387 = vadd.f32 %v2386, %v2085
  %v2388 = vadd.f32 %v2387, %v2087
  %v2389 = vadd.f32 %v2388, %v2090
  %v2390 = vadd.f32 %v2389, %v2092
  %v2391 = vadd.f32 %v2390, %v2095
  %v2392 = vadd.f32 %v2391, %v2097
  %v2393 = vadd.f32 %v2392, %v2100
  %v2394 = vadd.f32 %v2393, %v2102
  %v2395 = vadd.f32 %v2394, %v2105
  %v2396 = vadd.f32 %v2395, %v2107
  %v2397 = vadd.f32 %v2396, %v2110
  %v2398 = vadd.f32 %v2397, %v2112
  %v2399 = vadd.f32 %v2398, %v2115
  %v2400 = vadd.f32 %v2399, %v2117
  %v2401 = vadd.f32 %v2400, %v2120
  %v2402 = vadd.f32 %v2401, %v2122
  %v2403 = vadd.f32 %v2402, %v2125
  %v2404 = vadd.f32 %v2403, %v2127
  %v2405 = vadd.f32 %v2404, %v2130
  %v2406 = vadd.f32 %v2405, %v2132
  %v2407 = vadd.f32 %v2406, %v2135
  %v2408 = vadd.f32 %v2407, %v2137
  %v2409 = vadd.f32 %v2408, %v2140
  %v2410 = vadd.f32 %v2409, %v2142
  %v2411 = vadd.f32 %v2410, %v2145
  %v2412 = vadd.f32 %v2411, %v2147
  %v2413 = vadd.f32 %v2412, %v2150
  %v2414 = vadd.f32 %v2413, %v2152
  %v2415 = vadd.f32 %v2414, %v2155
  %v2416 = vadd.f32 %v2415, %v2157
  %v2417 = vadd.f32 %v2416, %v2160
  %v2418 = vadd.f32 %v2417, %v2162
  %v2419 = vadd.f32 %v2418, %v2165
  %v2420 = vadd.f32 %v2419, %v2167
  %v2421 = vadd.f32 %v2420, %v2170
  %v2422 = vadd.f32 %v2421, %v2172
  %v2423 = vadd.f32 %v2422, %v2175
  %v2424 = vadd.f32 %v2423, %v2177
  %v2425 = vadd.f32 %v2424, %v2180
  %v2426 = vadd.f32 %v2425, %v2182
  %v2427 = vadd.f32 %v2426, %v2185
  %v2428 = vadd.f32 %v2427, %v2187
  %v2429 = vadd.f32 %v2428, %v2190
  %v2430 = vadd.f32 %v2429, %v2192
  %v2431 = vadd.f32 %v2430, %v2195
  %v2432 = vadd.f32 %v2431, %v2197
  %v2433 = vrot.slane %v2432, 4
  %v2434 = vadd.f32 %v2432, %v2433
  %v2435 = vrot.slane %v2434, 2
  %v2436 = vadd.f32 %v2434, %v2435
  %v2437 = vrot.slane %v2436, 1
  %v2438 = vadd.f32 %v2436, %v2437
  %v2439 = vmul.f32 %v2040, %v2040
  %v2440 = vmul.f32 %v2042, %v2042
  %v2441 = vmul.f32 %v2045, %v2045
  %v2442 = vmul.f32 %v2047, %v2047
  %v2443 = vmul.f32 %v2050, %v2050
  %v2444 = vmul.f32 %v2052, %v2052
  %v2445 = vmul.f32 %v2055, %v2055
  %v2446 = vmul.f32 %v2057, %v2057
  %v2447 = vmul.f32 %v2060, %v2060
  %v2448 = vmul.f32 %v2062, %v2062
  %v2449 = vmul.f32 %v2065, %v2065
  %v2450 = vmul.f32 %v2067, %v2067
  %v2451 = vmul.f32 %v2070, %v2070
  %v2452 = vmul.f32 %v2072, %v2072
  %v2453 = vmul.f32 %v2075, %v2075
  %v2454 = vmul.f32 %v2077, %v2077
  %v2455 = vmul.f32 %v2080, %v2080
  %v2456 = vmul.f32 %v2082, %v2082
  %v2457 = vmul.f32 %v2085, %v2085
  %v2458 = vmul.f32 %v2087, %v2087
  %v2459 = vmul.f32 %v2090, %v2090
  %v2460 = vmul.f32 %v2092, %v2092
  %v2461 = vmul.f32 %v2095, %v2095
  %v2462 = vmul.f32 %v2097, %v2097
  %v2463 = vmul.f32 %v2100, %v2100
  %v2464 = vmul.f32 %v2102, %v2102
  %v2465 = vmul.f32 %v2105, %v2105
  %v2466 = vmul.f32 %v2107, %v2107
  %v2467 = vmul.f32 %v2110, %v2110
  %v2468 = vmul.f32 %v2112, %v2112
  %v2469 = vmul.f32 %v2115, %v2115
  %v2470 = vmul.f32 %v2117, %v2117
  %v2471 = vmul.f32 %v2120, %v2120
  %v2472 = vmul.f32 %v2122, %v2122
  %v2473 = vmul.f32 %v2125, %v2125
  %v2474 = vmul.f32 %v2127, %v2127
  %v2475 = vmul.f32 %v2130, %v2130
  %v2476 = vmul.f32 %v2132, %v2132
  %v2477 = vmul.f32 %v2135, %v2135
  %v2478 = vmul.f32 %v2137, %v2137
  %v2479 = vmul.f32 %v2140, %v2140
  %v2480 = vmul.f32 %v2142, %v2142
  %v2481 = vmul.f32 %v2145, %v2145
  %v2482 = vmul.f32 %v2147, %v2147
  %v2483 = vmul.f32 %v2150, %v2150
  %v2484 = vmul.f32 %v2152, %v2152
  %v2485 = vmul.f32 %v2155, %v2155
  %v2486 = vmul.f32 %v2157, %v2157
  %v2487 = vmul.f32 %v2160, %v2160
  %v2488 = vmul.f32 %v2162, %v2162
  %v2489 = vmul.f32 %v2165, %v2165
  %v2490 = vmul.f32 %v2167, %v2167
  %v2491 = vmul.f32 %v2170, %v2170
  %v2492 = vmul.f32 %v2172, %v2172
  %v2493 = vmul.f32 %v2175, %v2175
  %v2494 = vmul.f32 %v2177, %v2177
  %v2495 = vmul.f32 %v2180, %v2180
  %v2496 = vmul.f32 %v2182, %v2182
  %v2497 = vmul.f32 %v2185, %v2185
  %v2498 = vmul.f32 %v2187, %v2187
  %v2499 = vmul.f32 %v2190, %v2190
  %v2500 = vmul.f32 %v2192, %v2192
  %v2501 = vmul.f32 %v2195, %v2195
  %v2502 = vmul.f32 %v2197, %v2197
  %v2503 = vadd.f32 %v2439, %v2440
  %v2504 = vadd.f32 %v2503, %v2441
  %v2505 = vadd.f32 %v2504, %v2442
  %v2506 = vadd.f32 %v2505, %v2443
  %v2507 = vadd.f32 %v2506, %v2444
  %v2508 = vadd.f32 %v2507, %v2445
  %v2509 = vadd.f32 %v2508, %v2446
  %v2510 = vadd.f32 %v2509, %v2447
  %v2511 = vadd.f32 %v2510, %v2448
  %v2512 = vadd.f32 %v2511, %v2449
  %v2513 = vadd.f32 %v2512, %v2450
  %v2514 = vadd.f32 %v2513, %v2451
  %v2515 = vadd.f32 %v2514, %v2452
  %v2516 = vadd.f32 %v2515, %v2453
  %v2517 = vadd.f32 %v2516, %v2454
  %v2518 = vadd.f32 %v2517, %v2455
  %v2519 = vadd.f32 %v2518, %v2456
  %v2520 = vadd.f32 %v2519, %v2457
  %v2521 = vadd.f32 %v2520, %v2458
  %v2522 = vadd.f32 %v2521, %v2459
  %v2523 = vadd.f32 %v2522, %v2460
  %v2524 = vadd.f32 %v2523, %v2461
  %v2525 = vadd.f32 %v2524, %v2462
  %v2526 = vadd.f32 %v2525, %v2463
  %v2527 = vadd.f32 %v2526, %v2464
  %v2528 = vadd.f32 %v2527, %v2465
  %v2529 = vadd.f32 %v2528, %v2466
  %v2530 = vadd.f32 %v2529, %v2467
  %v2531 = vadd.f32 %v2530, %v2468
  %v2532 = vadd.f32 %v2531, %v2469
  %v2533 = vadd.f32 %v2532, %v2470
  %v2534 = vadd.f32 %v2533, %v2471
  %v2535 = vadd.f32 %v2534, %v2472
  %v2536 = vadd.f32 %v2535, %v2473
  %v2537 = vadd.f32 %v2536, %v2474
  %v2538 = vadd.f32 %v2537, %v2475
  %v2539 = vadd.f32 %v2538, %v2476
  %v2540 = vadd.f32 %v2539, %v2477
  %v2541 = vadd.f32 %v2540, %v2478
  %v2542 = vadd.f32 %v2541, %v2479
  %v2543 = vadd.f32 %v2542, %v2480
  %v2544 = vadd.f32 %v2543, %v2481
  %v2545 = vadd.f32 %v2544, %v2482
  %v2546 = vadd.f32 %v2545, %v2483
  %v2547 = vadd.f32 %v2546, %v2484
  %v2548 = vadd.f32 %v2547, %v2485
  %v2549 = vadd.f32 %v2548, %v2486
  %v2550 = vadd.f32 %v2549, %v2487
  %v2551 = vadd.f32 %v2550, %v2488
  %v2552 = vadd.f32 %v2551, %v2489
  %v2553 = vadd.f32 %v2552, %v2490
  %v2554 = vadd.f32 %v2553, %v2491
  %v2555 = vadd.f32 %v2554, %v2492
  %v2556 = vadd.f32 %v2555, %v2493
  %v2557 = vadd.f32 %v2556, %v2494
  %v2558 = vadd.f32 %v2557, %v2495
  %v2559 = vadd.f32 %v2558, %v2496
  %v2560 = vadd.f32 %v2559, %v2497
  %v2561 = vadd.f32 %v2560, %v2498
  %v2562 = vadd.f32 %v2561, %v2499
  %v2563 = vadd.f32 %v2562, %v2500
  %v2564 = vadd.f32 %v2563, %v2501
  %v2565 = vadd.f32 %v2564, %v2502
  %v2566 = vrot.slane %v2565, 4
  %v2567 = vadd.f32 %v2565, %v2566
  %v2568 = vrot.slane %v2567, 2
  %v2569 = vadd.f32 %v2567, %v2568
  %v2570 = vrot.slane %v2569, 1
  %v2571 = vadd.f32 %v2569, %v2570
  %v2572 = vmul.f32 %v2438, 0.001953125
  %v2573 = vmul.f32 %v2571, 0.001953125
  %v2574 = vmul.f32 %v2572, %v2572
  %v2575 = vsub.f32 %v2573, %v2574
  %v2576 = vadd.f32 %v2575, 1e-05
  %v2577 = vrsqrt.pop %v2576
  %v2578 = vmul.f32 %v2577, %v2576
  %v2579 = vmul.f32 %v2578, %v2577
  %v2580 = vmul.f32 0.5, %v2579
  %v2581 = vsub.f32 1.5, %v2580
  %v2582 = vmul.f32 %v2577, %v2581
  %vm2583 = vweird.f32 %v2576
  %vm2584 = vweird.f32 %v2577
  %vm2585 = vmor %vm2583, %vm2584
  %v2586 = vsel %vm2585, %v2577, %v2582
  %v2587 = vmul.f32 %v2368, %v2586
  %v2588 = vmul.f32 %v2572, %v2587
  %v2589 = vsub.f32 %v2369, %v2588
  %v2591 = vperm.slane %v2587, 0
  %v2593 = vmul.f32 %v2040, %v2591
  %v2594 = vmul.f32 %v2042, %v2591
  %v2595 = vmul.f32 %v2045, %v2591
  %v2596 = vmul.f32 %v2047, %v2591
  %v2597 = vmul.f32 %v2050, %v2591
  %v2598 = vmul.f32 %v2052, %v2591
  %v2599 = vmul.f32 %v2055, %v2591
  %v2600 = vmul.f32 %v2057, %v2591
  %v2601 = vmul.f32 %v2060, %v2591
  %v2602 = vmul.f32 %v2062, %v2591
  %v2603 = vmul.f32 %v2065, %v2591
  %v2604 = vmul.f32 %v2067, %v2591
  %v2605 = vmul.f32 %v2070, %v2591
  %v2606 = vmul.f32 %v2072, %v2591
  %v2607 = vmul.f32 %v2075, %v2591
  %v2608 = vmul.f32 %v2077, %v2591
  %v2609 = vmul.f32 %v2080, %v2591
  %v2610 = vmul.f32 %v2082, %v2591
  %v2611 = vmul.f32 %v2085, %v2591
  %v2612 = vmul.f32 %v2087, %v2591
  %v2613 = vmul.f32 %v2090, %v2591
  %v2614 = vmul.f32 %v2092, %v2591
  %v2615 = vmul.f32 %v2095, %v2591
  %v2616 = vmul.f32 %v2097, %v2591
  %v2617 = vmul.f32 %v2100, %v2591
  %v2618 = vmul.f32 %v2102, %v2591
  %v2619 = vmul.f32 %v2105, %v2591
  %v2620 = vmul.f32 %v2107, %v2591
  %v2621 = vmul.f32 %v2110, %v2591
  %v2622 = vmul.f32 %v2112, %v2591
  %v2623 = vmul.f32 %v2115, %v2591
  %v2624 = vmul.f32 %v2117, %v2591
  %v2625 = vmul.f32 %v2120, %v2591
  %v2626 = vmul.f32 %v2122, %v2591
  %v2627 = vmul.f32 %v2125, %v2591
  %v2628 = vmul.f32 %v2127, %v2591
  %v2629 = vmul.f32 %v2130, %v2591
  %v2630 = vmul.f32 %v2132, %v2591
  %v2631 = vmul.f32 %v2135, %v2591
  %v2632 = vmul.f32 %v2137, %v2591
  %v2633 = vmul.f32 %v2140, %v2591
  %v2634 = vmul.f32 %v2142, %v2591
  %v2635 = vmul.f32 %v2145, %v2591
  %v2636 = vmul.f32 %v2147, %v2591
  %v2637 = vmul.f32 %v2150, %v2591
  %v2638 = vmul.f32 %v2152, %v2591
  %v2639 = vmul.f32 %v2155, %v2591
  %v2640 = vmul.f32 %v2157, %v2591
  %v2641 = vmul.f32 %v2160, %v2591
  %v2642 = vmul.f32 %v2162, %v2591
  %v2643 = vmul.f32 %v2165, %v2591
  %v2644 = vmul.f32 %v2167, %v2591
  %v2645 = vmul.f32 %v2170, %v2591
  %v2646 = vmul.f32 %v2172, %v2591
  %v2647 = vmul.f32 %v2175, %v2591
  %v2648 = vmul.f32 %v2177, %v2591
  %v2649 = vmul.f32 %v2180, %v2591
  %v2650 = vmul.f32 %v2182, %v2591
  %v2651 = vmul.f32 %v2185, %v2591
  %v2652 = vmul.f32 %v2187, %v2591
  %v2653 = vmul.f32 %v2190, %v2591
  %v2654 = vmul.f32 %v2192, %v2591
  %v2655 = vmul.f32 %v2195, %v2591
  %v2656 = vmul.f32 %v2197, %v2591
  %v2658 = vperm.slane %v2589, 0
  %v2660 = vadd.f32 %v2593, %v2658
  %v2661 = vadd.f32 %v2594, %v2658
  %v2662 = vadd.f32 %v2595, %v2658
  %v2663 = vadd.f32 %v2596, %v2658
  %v2664 = vadd.f32 %v2597, %v2658
  %v2665 = vadd.f32 %v2598, %v2658
  %v2666 = vadd.f32 %v2599, %v2658
  %v2667 = vadd.f32 %v2600, %v2658
  %v2668 = vadd.f32 %v2601, %v2658
  %v2669 = vadd.f32 %v2602, %v2658
  %v2670 = vadd.f32 %v2603, %v2658
  %v2671 = vadd.f32 %v2604, %v2658
  %v2672 = vadd.f32 %v2605, %v2658
  %v2673 = vadd.f32 %v2606, %v2658
  %v2674 = vadd.f32 %v2607, %v2658
  %v2675 = vadd.f32 %v2608, %v2658
  %v2676 = vadd.f32 %v2609, %v2658
  %v2677 = vadd.f32 %v2610, %v2658
  %v2678 = vadd.f32 %v2611, %v2658
  %v2679 = vadd.f32 %v2612, %v2658
  %v2680 = vadd.f32 %v2613, %v2658
  %v2681 = vadd.f32 %v2614, %v2658
  %v2682 = vadd.f32 %v2615, %v2658
  %v2683 = vadd.f32 %v2616, %v2658
  %v2684 = vadd.f32 %v2617, %v2658
  %v2685 = vadd.f32 %v2618, %v2658
  %v2686 = vadd.f32 %v2619, %v2658
  %v2687 = vadd.f32 %v2620, %v2658
  %v2688 = vadd.f32 %v2621, %v2658
  %v2689 = vadd.f32 %v2622, %v2658
  %v2690 = vadd.f32 %v2623, %v2658
  %v2691 = vadd.f32 %v2624, %v2658
  %v2692 = vadd.f32 %v2625, %v2658
  %v2693 = vadd.f32 %v2626, %v2658
  %v2694 = vadd.f32 %v2627, %v2658
  %v2695 = vadd.f32 %v2628, %v2658
  %v2696 = vadd.f32 %v2629, %v2658
  %v2697 = vadd.f32 %v2630, %v2658
  %v2698 = vadd.f32 %v2631, %v2658
  %v2699 = vadd.f32 %v2632, %v2658
  %v2700 = vadd.f32 %v2633, %v2658
  %v2701 = vadd.f32 %v2634, %v2658
  %v2702 = vadd.f32 %v2635, %v2658
  %v2703 = vadd.f32 %v2636, %v2658
  %v2704 = vadd.f32 %v2637, %v2658
  %v2705 = vadd.f32 %v2638, %v2658
  %v2706 = vadd.f32 %v2639, %v2658
  %v2707 = vadd.f32 %v2640, %v2658
  %v2708 = vadd.f32 %v2641, %v2658
  %v2709 = vadd.f32 %v2642, %v2658
  %v2710 = vadd.f32 %v2643, %v2658
  %v2711 = vadd.f32 %v2644, %v2658
  %v2712 = vadd.f32 %v2645, %v2658
  %v2713 = vadd.f32 %v2646, %v2658
  %v2714 = vadd.f32 %v2647, %v2658
  %v2715 = vadd.f32 %v2648, %v2658
  %v2716 = vadd.f32 %v2649, %v2658
  %v2717 = vadd.f32 %v2650, %v2658
  %v2718 = vadd.f32 %v2651, %v2658
  %v2719 = vadd.f32 %v2652, %v2658
  %v2720 = vadd.f32 %v2653, %v2658
  %v2721 = vadd.f32 %v2654, %v2658
  %v2722 = vadd.f32 %v2655, %v2658
  %v2723 = vadd.f32 %v2656, %v2658
  %v2724 = vmax.f32 %v2660, 0.0
  %v2725 = vmax.f32 %v2661, 0.0
  %v2726 = vmax.f32 %v2662, 0.0
  %v2727 = vmax.f32 %v2663, 0.0
  %v2728 = vmax.f32 %v2664, 0.0
  %v2729 = vmax.f32 %v2665, 0.0
  %v2730 = vmax.f32 %v2666, 0.0
  %v2731 = vmax.f32 %v2667, 0.0
  %v2732 = vmax.f32 %v2668, 0.0
  %v2733 = vmax.f32 %v2669, 0.0
  %v2734 = vmax.f32 %v2670, 0.0
  %v2735 = vmax.f32 %v2671, 0.0
  %v2736 = vmax.f32 %v2672, 0.0
  %v2737 = vmax.f32 %v2673, 0.0
  %v2738 = vmax.f32 %v2674, 0.0
  %v2739 = vmax.f32 %v2675, 0.0
  %v2740 = vmax.f32 %v2676, 0.0
  %v2741 = vmax.f32 %v2677, 0.0
  %v2742 = vmax.f32 %v2678, 0.0
  %v2743 = vmax.f32 %v2679, 0.0
  %v2744 = vmax.f32 %v2680, 0.0
  %v2745 = vmax.f32 %v2681, 0.0
  %v2746 = vmax.f32 %v2682, 0.0
  %v2747 = vmax.f32 %v2683, 0.0
  %v2748 = vmax.f32 %v2684, 0.0
  %v2749 = vmax.f32 %v2685, 0.0
  %v2750 = vmax.f32 %v2686, 0.0
  %v2751 = vmax.f32 %v2687, 0.0
  %v2752 = vmax.f32 %v2688, 0.0
  %v2753 = vmax.f32 %v2689, 0.0
  %v2754 = vmax.f32 %v2690, 0.0
  %v2755 = vmax.f32 %v2691, 0.0
  %v2756 = vmax.f32 %v2692, 0.0
  %v2757 = vmax.f32 %v2693, 0.0
  %v2758 = vmax.f32 %v2694, 0.0
  %v2759 = vmax.f32 %v2695, 0.0
  %v2760 = vmax.f32 %v2696, 0.0
  %v2761 = vmax.f32 %v2697, 0.0
  %v2762 = vmax.f32 %v2698, 0.0
  %v2763 = vmax.f32 %v2699, 0.0
  %v2764 = vmax.f32 %v2700, 0.0
  %v2765 = vmax.f32 %v2701, 0.0
  %v2766 = vmax.f32 %v2702, 0.0
  %v2767 = vmax.f32 %v2703, 0.0
  %v2768 = vmax.f32 %v2704, 0.0
  %v2769 = vmax.f32 %v2705, 0.0
  %v2770 = vmax.f32 %v2706, 0.0
  %v2771 = vmax.f32 %v2707, 0.0
  %v2772 = vmax.f32 %v2708, 0.0
  %v2773 = vmax.f32 %v2709, 0.0
  %v2774 = vmax.f32 %v2710, 0.0
  %v2775 = vmax.f32 %v2711, 0.0
  %v2776 = vmax.f32 %v2712, 0.0
  %v2777 = vmax.f32 %v2713, 0.0
  %v2778 = vmax.f32 %v2714, 0.0
  %v2779 = vmax.f32 %v2715, 0.0
  %v2780 = vmax.f32 %v2716, 0.0
  %v2781 = vmax.f32 %v2717, 0.0
  %v2782 = vmax.f32 %v2718, 0.0
  %v2783 = vmax.f32 %v2719, 0.0
  %v2784 = vmax.f32 %v2720, 0.0
  %v2785 = vmax.f32 %v2721, 0.0
  %v2786 = vmax.f32 %v2722, 0.0
  %v2787 = vmax.f32 %v2723, 0.0
  %v2788 = vpack.c.bf16 %v2724, %v2724
  %v2789 = vpack.c.bf16 %v2725, %v2725
  %v2790 = vpack.c.bf16 %v2726, %v2726
  %v2791 = vpack.c.bf16 %v2727, %v2727
  %v2792 = vpack.c.bf16 %v2728, %v2728
  %v2793 = vpack.c.bf16 %v2729, %v2729
  %v2794 = vpack.c.bf16 %v2730, %v2730
  %v2795 = vpack.c.bf16 %v2731, %v2731
  %v2796 = vpack.c.bf16 %v2732, %v2732
  %v2797 = vpack.c.bf16 %v2733, %v2733
  %v2798 = vpack.c.bf16 %v2734, %v2734
  %v2799 = vpack.c.bf16 %v2735, %v2735
  %v2800 = vpack.c.bf16 %v2736, %v2736
  %v2801 = vpack.c.bf16 %v2737, %v2737
  %v2802 = vpack.c.bf16 %v2738, %v2738
  %v2803 = vpack.c.bf16 %v2739, %v2739
  %v2804 = vpack.c.bf16 %v2740, %v2740
  %v2805 = vpack.c.bf16 %v2741, %v2741
  %v2806 = vpack.c.bf16 %v2742, %v2742
  %v2807 = vpack.c.bf16 %v2743, %v2743
  %v2808 = vpack.c.bf16 %v2744, %v2744
  %v2809 = vpack.c.bf16 %v2745, %v2745
  %v2810 = vpack.c.bf16 %v2746, %v2746
  %v2811 = vpack.c.bf16 %v2747, %v2747
  %v2812 = vpack.c.bf16 %v2748, %v2748
  %v2813 = vpack.c.bf16 %v2749, %v2749
  %v2814 = vpack.c.bf16 %v2750, %v2750
  %v2815 = vpack.c.bf16 %v2751, %v2751
  %v2816 = vpack.c.bf16 %v2752, %v2752
  %v2817 = vpack.c.bf16 %v2753, %v2753
  %v2818 = vpack.c.bf16 %v2754, %v2754
  %v2819 = vpack.c.bf16 %v2755, %v2755
  %v2820 = vpack.c.bf16 %v2756, %v2756
  %v2821 = vpack.c.bf16 %v2757, %v2757
  %v2822 = vpack.c.bf16 %v2758, %v2758
  %v2823 = vpack.c.bf16 %v2759, %v2759
  %v2824 = vpack.c.bf16 %v2760, %v2760
  %v2825 = vpack.c.bf16 %v2761, %v2761
  %v2826 = vpack.c.bf16 %v2762, %v2762
  %v2827 = vpack.c.bf16 %v2763, %v2763
  %v2828 = vpack.c.bf16 %v2764, %v2764
  %v2829 = vpack.c.bf16 %v2765, %v2765
  %v2830 = vpack.c.bf16 %v2766, %v2766
  %v2831 = vpack.c.bf16 %v2767, %v2767
  %v2832 = vpack.c.bf16 %v2768, %v2768
  %v2833 = vpack.c.bf16 %v2769, %v2769
  %v2834 = vpack.c.bf16 %v2770, %v2770
  %v2835 = vpack.c.bf16 %v2771, %v2771
  %v2836 = vpack.c.bf16 %v2772, %v2772
  %v2837 = vpack.c.bf16 %v2773, %v2773
  %v2838 = vpack.c.bf16 %v2774, %v2774
  %v2839 = vpack.c.bf16 %v2775, %v2775
  %v2840 = vpack.c.bf16 %v2776, %v2776
  %v2841 = vpack.c.bf16 %v2777, %v2777
  %v2842 = vpack.c.bf16 %v2778, %v2778
  %v2843 = vpack.c.bf16 %v2779, %v2779
  %v2844 = vpack.c.bf16 %v2780, %v2780
  %v2845 = vpack.c.bf16 %v2781, %v2781
  %v2846 = vpack.c.bf16 %v2782, %v2782
  %v2847 = vpack.c.bf16 %v2783, %v2783
  %v2848 = vpack.c.bf16 %v2784, %v2784
  %v2849 = vpack.c.bf16 %v2785, %v2785
  %v2850 = vpack.c.bf16 %v2786, %v2786
  %v2851 = vpack.c.bf16 %v2787, %v2787
  %2852 = vst [vmem:[#allocation2] sm:$0xf] 0
  %2853 = vst [vmem:[#allocation2 + $0x4] sm:$0xf] 0
  %2854 = vst [vmem:[#allocation2 + $0x90] sm:$0xf] 0
  %2855 = vst [vmem:[#allocation2 + $0x94] sm:$0xf] 0
  %s2856 = scalar_lea.vmem [#allocation2], 136
  %2857 = vst [vmem:[%s2856] sm:$0xf] 0
  %2858 = vst [vmem:[%s2856 + $0x4] sm:$0xf] 0
  %2859 = vst [vmem:[%s2856 + $0x90] sm:$0xf] 0
  %2860 = vst [vmem:[%s2856 + $0x94] sm:$0xf] 0
  %s2861 = scalar_lea.vmem [#allocation2], 8
  %2862 = vst [vmem:[%s2861] sm:$0xf] %v2788
  %2863 = vst [vmem:[%s2861 + $0x4] sm:$0xf] %v2789
  %2864 = vst [vmem:[%s2861 + $0x8] sm:$0xf] %v2790
  %2865 = vst [vmem:[%s2861 + $0xc] sm:$0xf] %v2791
  %2866 = vst [vmem:[%s2861 + $0x10] sm:$0xf] %v2792
  %2867 = vst [vmem:[%s2861 + $0x14] sm:$0xf] %v2793
  %2868 = vst [vmem:[%s2861 + $0x18] sm:$0xf] %v2794
  %2869 = vst [vmem:[%s2861 + $0x1c] sm:$0xf] %v2795
  %2870 = vst [vmem:[%s2861 + $0x20] sm:$0xf] %v2796
  %2871 = vst [vmem:[%s2861 + $0x24] sm:$0xf] %v2797
  %2872 = vst [vmem:[%s2861 + $0x28] sm:$0xf] %v2798
  %2873 = vst [vmem:[%s2861 + $0x2c] sm:$0xf] %v2799
  %2874 = vst [vmem:[%s2861 + $0x30] sm:$0xf] %v2800
  %2875 = vst [vmem:[%s2861 + $0x34] sm:$0xf] %v2801
  %2876 = vst [vmem:[%s2861 + $0x38] sm:$0xf] %v2802
  %2877 = vst [vmem:[%s2861 + $0x3c] sm:$0xf] %v2803
  %2878 = vst [vmem:[%s2861 + $0x40] sm:$0xf] %v2804
  %2879 = vst [vmem:[%s2861 + $0x44] sm:$0xf] %v2805
  %2880 = vst [vmem:[%s2861 + $0x48] sm:$0xf] %v2806
  %2881 = vst [vmem:[%s2861 + $0x4c] sm:$0xf] %v2807
  %2882 = vst [vmem:[%s2861 + $0x50] sm:$0xf] %v2808
  %2883 = vst [vmem:[%s2861 + $0x54] sm:$0xf] %v2809
  %2884 = vst [vmem:[%s2861 + $0x58] sm:$0xf] %v2810
  %2885 = vst [vmem:[%s2861 + $0x5c] sm:$0xf] %v2811
  %2886 = vst [vmem:[%s2861 + $0x60] sm:$0xf] %v2812
  %2887 = vst [vmem:[%s2861 + $0x64] sm:$0xf] %v2813
  %2888 = vst [vmem:[%s2861 + $0x68] sm:$0xf] %v2814
  %2889 = vst [vmem:[%s2861 + $0x6c] sm:$0xf] %v2815
  %2890 = vst [vmem:[%s2861 + $0x70] sm:$0xf] %v2816
  %2891 = vst [vmem:[%s2861 + $0x74] sm:$0xf] %v2817
  %2892 = vst [vmem:[%s2861 + $0x78] sm:$0xf] %v2818
  %2893 = vst [vmem:[%s2861 + $0x7c] sm:$0xf] %v2819
  %2894 = vst [vmem:[%s2861 + $0x90] sm:$0xf] %v2820
  %2895 = vst [vmem:[%s2861 + $0x94] sm:$0xf] %v2821
  %2896 = vst [vmem:[%s2861 + $0x98] sm:$0xf] %v2822
  %2897 = vst [vmem:[%s2861 + $0x9c] sm:$0xf] %v2823
  %2898 = vst [vmem:[%s2861 + $0xa0] sm:$0xf] %v2824
  %2899 = vst [vmem:[%s2861 + $0xa4] sm:$0xf] %v2825
  %2900 = vst [vmem:[%s2861 + $0xa8] sm:$0xf] %v2826
  %2901 = vst [vmem:[%s2861 + $0xac] sm:$0xf] %v2827
  %2902 = vst [vmem:[%s2861 + $0xb0] sm:$0xf] %v2828
  %2903 = vst [vmem:[%s2861 + $0xb4] sm:$0xf] %v2829
  %2904 = vst [vmem:[%s2861 + $0xb8] sm:$0xf] %v2830
  %2905 = vst [vmem:[%s2861 + $0xbc] sm:$0xf] %v2831
  %2906 = vst [vmem:[%s2861 + $0xc0] sm:$0xf] %v2832
  %2907 = vst [vmem:[%s2861 + $0xc4] sm:$0xf] %v2833
  %2908 = vst [vmem:[%s2861 + $0xc8] sm:$0xf] %v2834
  %2909 = vst [vmem:[%s2861 + $0xcc] sm:$0xf] %v2835
  %2910 = vst [vmem:[%s2861 + $0xd0] sm:$0xf] %v2836
  %2911 = vst [vmem:[%s2861 + $0xd4] sm:$0xf] %v2837
  %2912 = vst [vmem:[%s2861 + $0xd8] sm:$0xf] %v2838
  %2913 = vst [vmem:[%s2861 + $0xdc] sm:$0xf] %v2839
  %2914 = vst [vmem:[%s2861 + $0xe0] sm:$0xf] %v2840
  %2915 = vst [vmem:[%s2861 + $0xe4] sm:$0xf] %v2841
  %2916 = vst [vmem:[%s2861 + $0xe8] sm:$0xf] %v2842
  %2917 = vst [vmem:[%s2861 + $0xec] sm:$0xf] %v2843
  %2918 = vst [vmem:[%s2861 + $0xf0] sm:$0xf] %v2844
  %2919 = vst [vmem:[%s2861 + $0xf4] sm:$0xf] %v2845
  %2920 = vst [vmem:[%s2861 + $0xf8] sm:$0xf] %v2846
  %2921 = vst [vmem:[%s2861 + $0xfc] sm:$0xf] %v2847
  %2922 = vst [vmem:[%s2861 + $0x100] sm:$0xf] %v2848
  %2923 = vst [vmem:[%s2861 + $0x104] sm:$0xf] %v2849
  %2924 = vst [vmem:[%s2861 + $0x108] sm:$0xf] %v2850
  %2925 = vst [vmem:[%s2861 + $0x10c] sm:$0xf] %v2851
  %v2926 = vld [vmem:[#allocation2] sm:$0xf]
  %v2927 = vld [vmem:[#allocation2 + $0x4] sm:$0xf]
  %v2928 = vld [vmem:[#allocation2 + $0x8] sm:$0xf]
  %v2929 = vld [vmem:[#allocation2 + $0xc] sm:$0xf]
  %v2930 = vld [vmem:[#allocation2 + $0x10] sm:$0xf]
  %v2931 = vld [vmem:[#allocation2 + $0x14] sm:$0xf]
  %v2932 = vld [vmem:[#allocation2 + $0x18] sm:$0xf]
  %v2933 = vld [vmem:[#allocation2 + $0x1c] sm:$0xf]
  %v2934 = vld [vmem:[#allocation2 + $0x20] sm:$0xf]
  %v2935 = vld [vmem:[#allocation2 + $0x24] sm:$0xf]
  %v2936 = vld [vmem:[#allocation2 + $0x28] sm:$0xf]
  %v2937 = vld [vmem:[#allocation2 + $0x2c] sm:$0xf]
  %v2938 = vld [vmem:[#allocation2 + $0x30] sm:$0xf]
  %v2939 = vld [vmem:[#allocation2 + $0x34] sm:$0xf]
  %v2940 = vld [vmem:[#allocation2 + $0x38] sm:$0xf]
  %v2941 = vld [vmem:[#allocation2 + $0x3c] sm:$0xf]
  %v2942 = vld [vmem:[#allocation2 + $0x40] sm:$0xf]
  %v2943 = vld [vmem:[#allocation2 + $0x44] sm:$0xf]
  %v2944 = vld [vmem:[#allocation2 + $0x48] sm:$0xf]
  %v2945 = vld [vmem:[#allocation2 + $0x4c] sm:$0xf]
  %v2946 = vld [vmem:[#allocation2 + $0x50] sm:$0xf]
  %v2947 = vld [vmem:[#allocation2 + $0x54] sm:$0xf]
  %v2948 = vld [vmem:[#allocation2 + $0x58] sm:$0xf]
  %v2949 = vld [vmem:[#allocation2 + $0x5c] sm:$0xf]
  %v2950 = vld [vmem:[#allocation2 + $0x60] sm:$0xf]
  %v2951 = vld [vmem:[#allocation2 + $0x64] sm:$0xf]
  %v2952 = vld [vmem:[#allocation2 + $0x68] sm:$0xf]
  %v2953 = vld [vmem:[#allocation2 + $0x6c] sm:$0xf]
  %v2954 = vld [vmem:[#allocation2 + $0x70] sm:$0xf]
  %v2955 = vld [vmem:[#allocation2 + $0x74] sm:$0xf]
  %v2956 = vld [vmem:[#allocation2 + $0x78] sm:$0xf]
  %v2957 = vld [vmem:[#allocation2 + $0x7c] sm:$0xf]
  %v2958 = vld [vmem:[#allocation2 + $0x80] sm:$0xf]
  %v2959 = vld [vmem:[#allocation2 + $0x84] sm:$0xf]
  %v2960 = vld [vmem:[#allocation2 + $0x88] sm:$0xf]
  %v2961 = vld [vmem:[#allocation2 + $0x8c] sm:$0xf]
  %v2962 = vld [vmem:[#allocation2 + $0x90] sm:$0xf]
  %v2963 = vld [vmem:[#allocation2 + $0x94] sm:$0xf]
  %v2964 = vld [vmem:[#allocation2 + $0x98] sm:$0xf]
  %v2965 = vld [vmem:[#allocation2 + $0x9c] sm:$0xf]
  %v2966 = vld [vmem:[#allocation2 + $0xa0] sm:$0xf]
  %v2967 = vld [vmem:[#allocation2 + $0xa4] sm:$0xf]
  %v2968 = vld [vmem:[#allocation2 + $0xa8] sm:$0xf]
  %v2969 = vld [vmem:[#allocation2 + $0xac] sm:$0xf]
  %v2970 = vld [vmem:[#allocation2 + $0xb0] sm:$0xf]
  %v2971 = vld [vmem:[#allocation2 + $0xb4] sm:$0xf]
  %v2972 = vld [vmem:[#allocation2 + $0xb8] sm:$0xf]
  %v2973 = vld [vmem:[#allocation2 + $0xbc] sm:$0xf]
  %v2974 = vld [vmem:[#allocation2 + $0xc0] sm:$0xf]
  %v2975 = vld [vmem:[#allocation2 + $0xc4] sm:$0xf]
  %v2976 = vld [vmem:[#allocation2 + $0xc8] sm:$0xf]
  %v2977 = vld [vmem:[#allocation2 + $0xcc] sm:$0xf]
  %v2978 = vld [vmem:[#allocation2 + $0xd0] sm:$0xf]
  %v2979 = vld [vmem:[#allocation2 + $0xd4] sm:$0xf]
  %v2980 = vld [vmem:[#allocation2 + $0xd8] sm:$0xf]
  %v2981 = vld [vmem:[#allocation2 + $0xdc] sm:$0xf]
  %v2982 = vld [vmem:[#allocation2 + $0xe0] sm:$0xf]
  %v2983 = vld [vmem:[#allocation2 + $0xe4] sm:$0xf]
  %v2984 = vld [vmem:[#allocation2 + $0xe8] sm:$0xf]
  %v2985 = vld [vmem:[#allocation2 + $0xec] sm:$0xf]
  %v2986 = vld [vmem:[#allocation2 + $0xf0] sm:$0xf]
  %v2987 = vld [vmem:[#allocation2 + $0xf4] sm:$0xf]
  %v2988 = vld [vmem:[#allocation2 + $0xf8] sm:$0xf]
  %v2989 = vld [vmem:[#allocation2 + $0xfc] sm:$0xf]
  %v2990 = vld [vmem:[#allocation2 + $0x100] sm:$0xf]
  %v2991 = vld [vmem:[#allocation2 + $0x104] sm:$0xf]
  %v2992 = vld [vmem:[#allocation2 + $0x108] sm:$0xf]
  %v2993 = vld [vmem:[#allocation2 + $0x10c] sm:$0xf]
  %v2994 = vld [vmem:[#allocation2 + $0x110] sm:$0xf]
  %v2995 = vld [vmem:[#allocation2 + $0x114] sm:$0xf]
  %v2996 = vld [vmem:[#allocation2 + $0x118] sm:$0xf]
  %v2997 = vld [vmem:[#allocation2 + $0x11c] sm:$0xf]
  %v3070 = vunpack.c.l.b16 %v2926
  %v3071 = vunpack.c.l.b16 %v2927
  %v3072 = vunpack.c.l.b16 %v2928
  %v3073 = vunpack.c.l.b16 %v2929
  %v3074 = vunpack.c.l.b16 %v2930
  %v3075 = vunpack.c.l.b16 %v2931
  %v3076 = vunpack.c.l.b16 %v2932
  %v3077 = vunpack.c.l.b16 %v2933
  %v3078 = vunpack.c.l.b16 %v2934
  %v3079 = vunpack.c.l.b16 %v2935
  %v3080 = vunpack.c.l.b16 %v2936
  %v3081 = vunpack.c.l.b16 %v2937
  %v3082 = vunpack.c.l.b16 %v2938
  %v3083 = vunpack.c.l.b16 %v2939
  %v3084 = vunpack.c.l.b16 %v2940
  %v3085 = vunpack.c.l.b16 %v2941
  %v3086 = vunpack.c.l.b16 %v2942
  %v3087 = vunpack.c.l.b16 %v2943
  %v3088 = vunpack.c.l.b16 %v2944
  %v3089 = vunpack.c.l.b16 %v2945
  %v3090 = vunpack.c.l.b16 %v2946
  %v3091 = vunpack.c.l.b16 %v2947
  %v3092 = vunpack.c.l.b16 %v2948
  %v3093 = vunpack.c.l.b16 %v2949
  %v3094 = vunpack.c.l.b16 %v2950
  %v3095 = vunpack.c.l.b16 %v2951
  %v3096 = vunpack.c.l.b16 %v2952
  %v3097 = vunpack.c.l.b16 %v2953
  %v3098 = vunpack.c.l.b16 %v2954
  %v3099 = vunpack.c.l.b16 %v2955
  %v3100 = vunpack.c.l.b16 %v2956
  %v3101 = vunpack.c.l.b16 %v2957
  %v3102 = vunpack.c.l.b16 %v2958
  %v3103 = vunpack.c.l.b16 %v2959
  %v3104 = vunpack.c.l.b16 %v2960
  %v3105 = vunpack.c.l.b16 %v2961
  %v3106 = vunpack.c.l.b16 %v2962
  %v3107 = vunpack.c.l.b16 %v2963
  %v3108 = vunpack.c.l.b16 %v2964
  %v3109 = vunpack.c.l.b16 %v2965
  %v3110 = vunpack.c.l.b16 %v2966
  %v3111 = vunpack.c.l.b16 %v2967
  %v3112 = vunpack.c.l.b16 %v2968
  %v3113 = vunpack.c.l.b16 %v2969
  %v3114 = vunpack.c.l.b16 %v2970
  %v3115 = vunpack.c.l.b16 %v2971
  %v3116 = vunpack.c.l.b16 %v2972
  %v3117 = vunpack.c.l.b16 %v2973
  %v3118 = vunpack.c.l.b16 %v2974
  %v3119 = vunpack.c.l.b16 %v2975
  %v3120 = vunpack.c.l.b16 %v2976
  %v3121 = vunpack.c.l.b16 %v2977
  %v3122 = vunpack.c.l.b16 %v2978
  %v3123 = vunpack.c.l.b16 %v2979
  %v3124 = vunpack.c.l.b16 %v2980
  %v3125 = vunpack.c.l.b16 %v2981
  %v3126 = vunpack.c.l.b16 %v2982
  %v3127 = vunpack.c.l.b16 %v2983
  %v3128 = vunpack.c.l.b16 %v2984
  %v3129 = vunpack.c.l.b16 %v2985
  %v3130 = vunpack.c.l.b16 %v2986
  %v3131 = vunpack.c.l.b16 %v2987
  %v3132 = vunpack.c.l.b16 %v2988
  %v3133 = vunpack.c.l.b16 %v2989
  %v3134 = vunpack.c.l.b16 %v2990
  %v3135 = vunpack.c.l.b16 %v2991
  %v3136 = vunpack.c.l.b16 %v2992
  %v3137 = vunpack.c.l.b16 %v2993
  %v3138 = vunpack.c.l.b16 %v2994
  %v3139 = vunpack.c.l.b16 %v2995
  %v3140 = vunpack.c.l.b16 %v2996
  %v3141 = vunpack.c.l.b16 %v2997
  %v3142 = vpack.c.b16 %v3071, %v3070
  %v3143 = vpack.c.b16 %v3073, %v3072
  %v3144 = vpack.c.b16 %v3075, %v3074
  %v3145 = vpack.c.b16 %v3077, %v3076
  %v3146 = vpack.c.b16 %v3079, %v3078
  %v3147 = vpack.c.b16 %v3081, %v3080
  %v3148 = vpack.c.b16 %v3083, %v3082
  %v3149 = vpack.c.b16 %v3085, %v3084
  %v3150 = vpack.c.b16 %v3087, %v3086
  %v3151 = vpack.c.b16 %v3089, %v3088
  %v3152 = vpack.c.b16 %v3091, %v3090
  %v3153 = vpack.c.b16 %v3093, %v3092
  %v3154 = vpack.c.b16 %v3095, %v3094
  %v3155 = vpack.c.b16 %v3097, %v3096
  %v3156 = vpack.c.b16 %v3099, %v3098
  %v3157 = vpack.c.b16 %v3101, %v3100
  %v3158 = vpack.c.b16 %v3103, %v3102
  %v3159 = vpack.c.b16 %v3105, %v3104
  %v3160 = vpack.c.b16 %v3107, %v3106
  %v3161 = vpack.c.b16 %v3109, %v3108
  %v3162 = vpack.c.b16 %v3111, %v3110
  %v3163 = vpack.c.b16 %v3113, %v3112
  %v3164 = vpack.c.b16 %v3115, %v3114
  %v3165 = vpack.c.b16 %v3117, %v3116
  %v3166 = vpack.c.b16 %v3119, %v3118
  %v3167 = vpack.c.b16 %v3121, %v3120
  %v3168 = vpack.c.b16 %v3123, %v3122
  %v3169 = vpack.c.b16 %v3125, %v3124
  %v3170 = vpack.c.b16 %v3127, %v3126
  %v3171 = vpack.c.b16 %v3129, %v3128
  %v3172 = vpack.c.b16 %v3131, %v3130
  %v3173 = vpack.c.b16 %v3133, %v3132
  %v3174 = vpack.c.b16 %v3135, %v3134
  %v3175 = vpack.c.b16 %v3137, %v3136
  %v3176 = vpack.c.b16 %v3139, %v3138
  %v3177 = vpack.c.b16 %v3141, %v3140
  %v3179 = vshrl.u32 %v3142, 16
  %v3181 = vrot.slane %v3179, 7
  %v3182 = vshll.u32 %v3142, 16
  %v3184 = vor.u32 %v3181, %v3182
  %v3186 = vshrl.u32 %v3143, 16
  %v3188 = vrot.slane %v3186, 7
  %v3189 = vshll.u32 %v3143, 16
  %v3191 = vor.u32 %v3188, %v3189
  %v3193 = vshrl.u32 %v3144, 16
  %v3195 = vrot.slane %v3193, 7
  %v3196 = vshll.u32 %v3144, 16
  %v3198 = vor.u32 %v3195, %v3196
  %v3200 = vshrl.u32 %v3145, 16
  %v3202 = vrot.slane %v3200, 7
  %v3203 = vshll.u32 %v3145, 16
  %v3205 = vor.u32 %v3202, %v3203
  %v3207 = vshrl.u32 %v3146, 16
  %v3209 = vrot.slane %v3207, 7
  %v3210 = vshll.u32 %v3146, 16
  %v3212 = vor.u32 %v3209, %v3210
  %v3214 = vshrl.u32 %v3147, 16
  %v3216 = vrot.slane %v3214, 7
  %v3217 = vshll.u32 %v3147, 16
  %v3219 = vor.u32 %v3216, %v3217
  %v3221 = vshrl.u32 %v3148, 16
  %v3223 = vrot.slane %v3221, 7
  %v3224 = vshll.u32 %v3148, 16
  %v3226 = vor.u32 %v3223, %v3224
  %v3228 = vshrl.u32 %v3149, 16
  %v3230 = vrot.slane %v3228, 7
  %v3231 = vshll.u32 %v3149, 16
  %v3233 = vor.u32 %v3230, %v3231
  %v3235 = vshrl.u32 %v3150, 16
  %v3237 = vrot.slane %v3235, 7
  %v3238 = vshll.u32 %v3150, 16
  %v3240 = vor.u32 %v3237, %v3238
  %v3242 = vshrl.u32 %v3151, 16
  %v3244 = vrot.slane %v3242, 7
  %v3245 = vshll.u32 %v3151, 16
  %v3247 = vor.u32 %v3244, %v3245
  %v3249 = vshrl.u32 %v3152, 16
  %v3251 = vrot.slane %v3249, 7
  %v3252 = vshll.u32 %v3152, 16
  %v3254 = vor.u32 %v3251, %v3252
  %v3256 = vshrl.u32 %v3153, 16
  %v3258 = vrot.slane %v3256, 7
  %v3259 = vshll.u32 %v3153, 16
  %v3261 = vor.u32 %v3258, %v3259
  %v3263 = vshrl.u32 %v3154, 16
  %v3265 = vrot.slane %v3263, 7
  %v3266 = vshll.u32 %v3154, 16
  %v3268 = vor.u32 %v3265, %v3266
  %v3270 = vshrl.u32 %v3155, 16
  %v3272 = vrot.slane %v3270, 7
  %v3273 = vshll.u32 %v3155, 16
  %v3275 = vor.u32 %v3272, %v3273
  %v3277 = vshrl.u32 %v3156, 16
  %v3279 = vrot.slane %v3277, 7
  %v3280 = vshll.u32 %v3156, 16
  %v3282 = vor.u32 %v3279, %v3280
  %v3284 = vshrl.u32 %v3157, 16
  %v3286 = vrot.slane %v3284, 7
  %v3287 = vshll.u32 %v3157, 16
  %v3289 = vor.u32 %v3286, %v3287
  %v3291 = vshrl.u32 %v3158, 16
  %v3293 = vrot.slane %v3291, 7
  %v3294 = vshll.u32 %v3158, 16
  %v3296 = vor.u32 %v3293, %v3294
  %v3298 = vshrl.u32 %v3159, 16
  %v3300 = vrot.slane %v3298, 7
  %v3301 = vshll.u32 %v3159, 16
  %v3303 = vor.u32 %v3300, %v3301
  %v3305 = vshrl.u32 %v3160, 16
  %v3307 = vrot.slane %v3305, 7
  %v3308 = vshll.u32 %v3160, 16
  %v3310 = vor.u32 %v3307, %v3308
  %v3312 = vshrl.u32 %v3161, 16
  %v3314 = vrot.slane %v3312, 7
  %v3315 = vshll.u32 %v3161, 16
  %v3317 = vor.u32 %v3314, %v3315
  %v3319 = vshrl.u32 %v3162, 16
  %v3321 = vrot.slane %v3319, 7
  %v3322 = vshll.u32 %v3162, 16
  %v3324 = vor.u32 %v3321, %v3322
  %v3326 = vshrl.u32 %v3163, 16
  %v3328 = vrot.slane %v3326, 7
  %v3329 = vshll.u32 %v3163, 16
  %v3331 = vor.u32 %v3328, %v3329
  %v3333 = vshrl.u32 %v3164, 16
  %v3335 = vrot.slane %v3333, 7
  %v3336 = vshll.u32 %v3164, 16
  %v3338 = vor.u32 %v3335, %v3336
  %v3340 = vshrl.u32 %v3165, 16
  %v3342 = vrot.slane %v3340, 7
  %v3343 = vshll.u32 %v3165, 16
  %v3345 = vor.u32 %v3342, %v3343
  %v3347 = vshrl.u32 %v3166, 16
  %v3349 = vrot.slane %v3347, 7
  %v3350 = vshll.u32 %v3166, 16
  %v3352 = vor.u32 %v3349, %v3350
  %v3354 = vshrl.u32 %v3167, 16
  %v3356 = vrot.slane %v3354, 7
  %v3357 = vshll.u32 %v3167, 16
  %v3359 = vor.u32 %v3356, %v3357
  %v3361 = vshrl.u32 %v3168, 16
  %v3363 = vrot.slane %v3361, 7
  %v3364 = vshll.u32 %v3168, 16
  %v3366 = vor.u32 %v3363, %v3364
  %v3368 = vshrl.u32 %v3169, 16
  %v3370 = vrot.slane %v3368, 7
  %v3371 = vshll.u32 %v3169, 16
  %v3373 = vor.u32 %v3370, %v3371
  %v3375 = vshrl.u32 %v3170, 16
  %v3377 = vrot.slane %v3375, 7
  %v3378 = vshll.u32 %v3170, 16
  %v3380 = vor.u32 %v3377, %v3378
  %v3382 = vshrl.u32 %v3171, 16
  %v3384 = vrot.slane %v3382, 7
  %v3385 = vshll.u32 %v3171, 16
  %v3387 = vor.u32 %v3384, %v3385
  %v3389 = vshrl.u32 %v3172, 16
  %v3391 = vrot.slane %v3389, 7
  %v3392 = vshll.u32 %v3172, 16
  %v3394 = vor.u32 %v3391, %v3392
  %v3396 = vshrl.u32 %v3173, 16
  %v3398 = vrot.slane %v3396, 7
  %v3399 = vshll.u32 %v3173, 16
  %v3401 = vor.u32 %v3398, %v3399
  %v3403 = vshrl.u32 %v3174, 16
  %v3405 = vrot.slane %v3403, 7
  %v3406 = vshll.u32 %v3174, 16
  %v3408 = vor.u32 %v3405, %v3406
  %v3410 = vshrl.u32 %v3175, 16
  %v3412 = vrot.slane %v3410, 7
  %v3413 = vshll.u32 %v3175, 16
  %v3415 = vor.u32 %v3412, %v3413
  %v3417 = vshrl.u32 %v3176, 16
  %v3419 = vrot.slane %v3417, 7
  %v3420 = vshll.u32 %v3176, 16
  %v3422 = vor.u32 %v3419, %v3420
  %v3424 = vshrl.u32 %v3177, 16
  %v3426 = vrot.slane %v3424, 7
  %v3427 = vshll.u32 %v3177, 16
  %v3429 = vor.u32 %v3426, %v3427
  %v3466 = vsel %vm587, 0, %v3184
  %v3467 = vsel %vm587, 0, %v3191
  %v3468 = vsel %vm587, 0, %v3198
  %v3469 = vsel %vm587, 0, %v3205
  %v3470 = vsel %vm587, 0, %v3212
  %v3471 = vsel %vm587, 0, %v3219
  %v3472 = vsel %vm587, 0, %v3226
  %v3473 = vsel %vm587, 0, %v3233
  %v3474 = vsel %vm587, 0, %v3240
  %v3475 = vsel %vm587, 0, %v3247
  %v3476 = vsel %vm587, 0, %v3254
  %v3477 = vsel %vm587, 0, %v3261
  %v3478 = vsel %vm587, 0, %v3268
  %v3479 = vsel %vm587, 0, %v3275
  %v3480 = vsel %vm587, 0, %v3282
  %v3481 = vsel %vm587, 0, %v3289
  %v3482 = vsel %vm587, 0, %v3296
  %v3483 = vsel %vm587, 0, %v3303
  %v3484 = vsel %vm587, 0, %v3310
  %v3485 = vsel %vm587, 0, %v3317
  %v3486 = vsel %vm587, 0, %v3324
  %v3487 = vsel %vm587, 0, %v3331
  %v3488 = vsel %vm587, 0, %v3338
  %v3489 = vsel %vm587, 0, %v3345
  %v3490 = vsel %vm587, 0, %v3352
  %v3491 = vsel %vm587, 0, %v3359
  %v3492 = vsel %vm587, 0, %v3366
  %v3493 = vsel %vm587, 0, %v3373
  %v3494 = vsel %vm587, 0, %v3380
  %v3495 = vsel %vm587, 0, %v3387
  %v3496 = vsel %vm587, 0, %v3394
  %v3497 = vsel %vm587, 0, %v3401
  %v3498 = vsel %vm587, 0, %v3408
  %v3499 = vsel %vm587, 0, %v3415
  %v3500 = vsel %vm587, 0, %v3422
  %v3501 = vsel %vm587, 0, %v3429
  %v3502 = vrot.slane %v3182, 1
  %v3503 = vor.u32 %v3179, %v3502
  %v3504 = vrot.slane %v3189, 1
  %v3505 = vor.u32 %v3186, %v3504
  %v3506 = vrot.slane %v3196, 1
  %v3507 = vor.u32 %v3193, %v3506
  %v3508 = vrot.slane %v3203, 1
  %v3509 = vor.u32 %v3200, %v3508
  %v3510 = vrot.slane %v3210, 1
  %v3511 = vor.u32 %v3207, %v3510
  %v3512 = vrot.slane %v3217, 1
  %v3513 = vor.u32 %v3214, %v3512
  %v3514 = vrot.slane %v3224, 1
  %v3515 = vor.u32 %v3221, %v3514
  %v3516 = vrot.slane %v3231, 1
  %v3517 = vor.u32 %v3228, %v3516
  %v3518 = vrot.slane %v3238, 1
  %v3519 = vor.u32 %v3235, %v3518
  %v3520 = vrot.slane %v3245, 1
  %v3521 = vor.u32 %v3242, %v3520
  %v3522 = vrot.slane %v3252, 1
  %v3523 = vor.u32 %v3249, %v3522
  %v3524 = vrot.slane %v3259, 1
  %v3525 = vor.u32 %v3256, %v3524
  %v3526 = vrot.slane %v3266, 1
  %v3527 = vor.u32 %v3263, %v3526
  %v3528 = vrot.slane %v3273, 1
  %v3529 = vor.u32 %v3270, %v3528
  %v3530 = vrot.slane %v3280, 1
  %v3531 = vor.u32 %v3277, %v3530
  %v3532 = vrot.slane %v3287, 1
  %v3533 = vor.u32 %v3284, %v3532
  %v3534 = vrot.slane %v3294, 1
  %v3535 = vor.u32 %v3291, %v3534
  %v3536 = vrot.slane %v3301, 1
  %v3537 = vor.u32 %v3298, %v3536
  %v3538 = vrot.slane %v3308, 1
  %v3539 = vor.u32 %v3305, %v3538
  %v3540 = vrot.slane %v3315, 1
  %v3541 = vor.u32 %v3312, %v3540
  %v3542 = vrot.slane %v3322, 1
  %v3543 = vor.u32 %v3319, %v3542
  %v3544 = vrot.slane %v3329, 1
  %v3545 = vor.u32 %v3326, %v3544
  %v3546 = vrot.slane %v3336, 1
  %v3547 = vor.u32 %v3333, %v3546
  %v3548 = vrot.slane %v3343, 1
  %v3549 = vor.u32 %v3340, %v3548
  %v3550 = vrot.slane %v3350, 1
  %v3551 = vor.u32 %v3347, %v3550
  %v3552 = vrot.slane %v3357, 1
  %v3553 = vor.u32 %v3354, %v3552
  %v3554 = vrot.slane %v3364, 1
  %v3555 = vor.u32 %v3361, %v3554
  %v3556 = vrot.slane %v3371, 1
  %v3557 = vor.u32 %v3368, %v3556
  %v3558 = vrot.slane %v3378, 1
  %v3559 = vor.u32 %v3375, %v3558
  %v3560 = vrot.slane %v3385, 1
  %v3561 = vor.u32 %v3382, %v3560
  %v3562 = vrot.slane %v3392, 1
  %v3563 = vor.u32 %v3389, %v3562
  %v3564 = vrot.slane %v3399, 1
  %v3565 = vor.u32 %v3396, %v3564
  %v3566 = vrot.slane %v3406, 1
  %v3567 = vor.u32 %v3403, %v3566
  %v3568 = vrot.slane %v3413, 1
  %v3569 = vor.u32 %v3410, %v3568
  %v3570 = vrot.slane %v3420, 1
  %v3571 = vor.u32 %v3417, %v3570
  %v3572 = vrot.slane %v3427, 1
  %v3573 = vor.u32 %v3424, %v3572
  %v3610 = vsel %vm722, %v3503, 0
  %v3611 = vsel %vm722, %v3505, 0
  %v3612 = vsel %vm722, %v3507, 0
  %v3613 = vsel %vm722, %v3509, 0
  %v3614 = vsel %vm722, %v3511, 0
  %v3615 = vsel %vm722, %v3513, 0
  %v3616 = vsel %vm722, %v3515, 0
  %v3617 = vsel %vm722, %v3517, 0
  %v3618 = vsel %vm722, %v3519, 0
  %v3619 = vsel %vm722, %v3521, 0
  %v3620 = vsel %vm722, %v3523, 0
  %v3621 = vsel %vm722, %v3525, 0
  %v3622 = vsel %vm722, %v3527, 0
  %v3623 = vsel %vm722, %v3529, 0
  %v3624 = vsel %vm722, %v3531, 0
  %v3625 = vsel %vm722, %v3533, 0
  %v3626 = vsel %vm722, %v3535, 0
  %v3627 = vsel %vm722, %v3537, 0
  %v3628 = vsel %vm722, %v3539, 0
  %v3629 = vsel %vm722, %v3541, 0
  %v3630 = vsel %vm722, %v3543, 0
  %v3631 = vsel %vm722, %v3545, 0
  %v3632 = vsel %vm722, %v3547, 0
  %v3633 = vsel %vm722, %v3549, 0
  %v3634 = vsel %vm722, %v3551, 0
  %v3635 = vsel %vm722, %v3553, 0
  %v3636 = vsel %vm722, %v3555, 0
  %v3637 = vsel %vm722, %v3557, 0
  %v3638 = vsel %vm722, %v3559, 0
  %v3639 = vsel %vm722, %v3561, 0
  %v3640 = vsel %vm722, %v3563, 0
  %v3641 = vsel %vm722, %v3565, 0
  %v3642 = vsel %vm722, %v3567, 0
  %v3643 = vsel %vm722, %v3569, 0
  %v3644 = vsel %vm722, %v3571, 0
  %v3645 = vsel %vm722, %v3573, 0
  %v3682 = vld [vmem:[%s4] sm:$0xf]
  %v3683 = vld [vmem:[%s4 + $0x4] sm:$0xf]
  %v3684 = vld [vmem:[%s4 + $0x8] sm:$0xf]
  %v3685 = vld [vmem:[%s4 + $0xc] sm:$0xf]
  %v3686 = vld [vmem:[%s4 + $0x10] sm:$0xf]
  %v3687 = vld [vmem:[%s4 + $0x14] sm:$0xf]
  %v3688 = vld [vmem:[%s4 + $0x18] sm:$0xf]
  %v3689 = vld [vmem:[%s4 + $0x1c] sm:$0xf]
  %v3690 = vld [vmem:[%s4 + $0x20] sm:$0xf]
  %v3691 = vld [vmem:[%s4 + $0x24] sm:$0xf]
  %v3692 = vld [vmem:[%s4 + $0x28] sm:$0xf]
  %v3693 = vld [vmem:[%s4 + $0x2c] sm:$0xf]
  %v3694 = vld [vmem:[%s4 + $0x30] sm:$0xf]
  %v3695 = vld [vmem:[%s4 + $0x34] sm:$0xf]
  %v3696 = vld [vmem:[%s4 + $0x38] sm:$0xf]
  %v3697 = vld [vmem:[%s4 + $0x3c] sm:$0xf]
  %v3698 = vld [vmem:[%s4 + $0x40] sm:$0xf]
  %v3699 = vld [vmem:[%s4 + $0x44] sm:$0xf]
  %v3700 = vld [vmem:[%s4 + $0x48] sm:$0xf]
  %v3701 = vld [vmem:[%s4 + $0x4c] sm:$0xf]
  %v3702 = vld [vmem:[%s4 + $0x50] sm:$0xf]
  %v3703 = vld [vmem:[%s4 + $0x54] sm:$0xf]
  %v3704 = vld [vmem:[%s4 + $0x58] sm:$0xf]
  %v3705 = vld [vmem:[%s4 + $0x5c] sm:$0xf]
  %v3706 = vld [vmem:[%s4 + $0x60] sm:$0xf]
  %v3707 = vld [vmem:[%s4 + $0x64] sm:$0xf]
  %v3708 = vld [vmem:[%s4 + $0x68] sm:$0xf]
  %v3709 = vld [vmem:[%s4 + $0x6c] sm:$0xf]
  %v3710 = vld [vmem:[%s4 + $0x70] sm:$0xf]
  %v3711 = vld [vmem:[%s4 + $0x74] sm:$0xf]
  %v3712 = vld [vmem:[%s4 + $0x78] sm:$0xf]
  %v3713 = vld [vmem:[%s4 + $0x7c] sm:$0xf]
  %v3714 = vld [vmem:[%s4 + $0x80] sm:$0xf]
  %v3715 = vld [vmem:[%s4 + $0x84] sm:$0xf]
  %v3716 = vld [vmem:[%s4 + $0x88] sm:$0xf]
  %v3717 = vld [vmem:[%s4 + $0x8c] sm:$0xf]
  %v3718 = vld [vmem:[%s4 + $0x90] sm:$0xf]
  %v3719 = vld [vmem:[%s4 + $0x94] sm:$0xf]
  %v3720 = vld [vmem:[%s4 + $0x98] sm:$0xf]
  %v3721 = vld [vmem:[%s4 + $0x9c] sm:$0xf]
  %v3722 = vld [vmem:[%s4 + $0xa0] sm:$0xf]
  %v3723 = vld [vmem:[%s4 + $0xa4] sm:$0xf]
  %v3724 = vld [vmem:[%s4 + $0xa8] sm:$0xf]
  %v3725 = vld [vmem:[%s4 + $0xac] sm:$0xf]
  %v3726 = vld [vmem:[%s4 + $0xb0] sm:$0xf]
  %v3727 = vld [vmem:[%s4 + $0xb4] sm:$0xf]
  %v3728 = vld [vmem:[%s4 + $0xb8] sm:$0xf]
  %v3729 = vld [vmem:[%s4 + $0xbc] sm:$0xf]
  %v3730 = vld [vmem:[%s4 + $0xc0] sm:$0xf]
  %v3731 = vld [vmem:[%s4 + $0xc4] sm:$0xf]
  %v3732 = vld [vmem:[%s4 + $0xc8] sm:$0xf]
  %v3733 = vld [vmem:[%s4 + $0xcc] sm:$0xf]
  %v3734 = vld [vmem:[%s4 + $0xd0] sm:$0xf]
  %v3735 = vld [vmem:[%s4 + $0xd4] sm:$0xf]
  %v3736 = vld [vmem:[%s4 + $0xd8] sm:$0xf]
  %v3737 = vld [vmem:[%s4 + $0xdc] sm:$0xf]
  %v3738 = vld [vmem:[%s4 + $0xe0] sm:$0xf]
  %v3739 = vld [vmem:[%s4 + $0xe4] sm:$0xf]
  %v3740 = vld [vmem:[%s4 + $0xe8] sm:$0xf]
  %v3741 = vld [vmem:[%s4 + $0xec] sm:$0xf]
  %v3742 = vld [vmem:[%s4 + $0xf0] sm:$0xf]
  %v3743 = vld [vmem:[%s4 + $0xf4] sm:$0xf]
  %v3744 = vld [vmem:[%s4 + $0xf8] sm:$0xf]
  %v3745 = vld [vmem:[%s4 + $0xfc] sm:$0xf]
  %v3746 = vld [vmem:[%s4 + $0x100] sm:$0xf]
  %v3747 = vld [vmem:[%s4 + $0x104] sm:$0xf]
  %v3748 = vld [vmem:[%s4 + $0x108] sm:$0xf]
  %v3749 = vld [vmem:[%s4 + $0x10c] sm:$0xf]
  %v3750 = vld [vmem:[%s4 + $0x110] sm:$0xf]
  %v3751 = vld [vmem:[%s4 + $0x114] sm:$0xf]
  %v3752 = vld [vmem:[%s4 + $0x118] sm:$0xf]
  %v3753 = vld [vmem:[%s4 + $0x11c] sm:$0xf]
  %v3754 = vld [vmem:[%s4 + $0x120] sm:$0xf]
  %v3755 = vld [vmem:[%s4 + $0x124] sm:$0xf]
  %v3756 = vld [vmem:[%s4 + $0x128] sm:$0xf]
  %v3757 = vld [vmem:[%s4 + $0x12c] sm:$0xf]
  %v3758 = vld [vmem:[%s4 + $0x130] sm:$0xf]
  %v3759 = vld [vmem:[%s4 + $0x134] sm:$0xf]
  %v3760 = vld [vmem:[%s4 + $0x138] sm:$0xf]
  %v3761 = vld [vmem:[%s4 + $0x13c] sm:$0xf]
  %v3762 = vld [vmem:[%s4 + $0x140] sm:$0xf]
  %v3763 = vld [vmem:[%s4 + $0x144] sm:$0xf]
  %v3764 = vld [vmem:[%s4 + $0x148] sm:$0xf]
  %v3765 = vld [vmem:[%s4 + $0x14c] sm:$0xf]
  %v3766 = vld [vmem:[%s4 + $0x150] sm:$0xf]
  %v3767 = vld [vmem:[%s4 + $0x154] sm:$0xf]
  %v3768 = vld [vmem:[%s4 + $0x158] sm:$0xf]
  %v3769 = vld [vmem:[%s4 + $0x15c] sm:$0xf]
  %v3770 = vld [vmem:[%s4 + $0x160] sm:$0xf]
  %v3771 = vld [vmem:[%s4 + $0x164] sm:$0xf]
  %v3772 = vld [vmem:[%s4 + $0x168] sm:$0xf]
  %v3773 = vld [vmem:[%s4 + $0x16c] sm:$0xf]
  %v3774 = vld [vmem:[%s4 + $0x170] sm:$0xf]
  %v3775 = vld [vmem:[%s4 + $0x174] sm:$0xf]
  %v3776 = vld [vmem:[%s4 + $0x178] sm:$0xf]
  %v3777 = vld [vmem:[%s4 + $0x17c] sm:$0xf]
  %v3778 = vld [vmem:[%s4 + $0x180] sm:$0xf]
  %v3779 = vld [vmem:[%s4 + $0x184] sm:$0xf]
  %v3780 = vld [vmem:[%s4 + $0x188] sm:$0xf]
  %v3781 = vld [vmem:[%s4 + $0x18c] sm:$0xf]
  %v3782 = vld [vmem:[%s4 + $0x190] sm:$0xf]
  %v3783 = vld [vmem:[%s4 + $0x194] sm:$0xf]
  %v3784 = vld [vmem:[%s4 + $0x198] sm:$0xf]
  %v3785 = vld [vmem:[%s4 + $0x19c] sm:$0xf]
  %v3786 = vld [vmem:[%s4 + $0x1a0] sm:$0xf]
  %v3787 = vld [vmem:[%s4 + $0x1a4] sm:$0xf]
  %v3788 = vld [vmem:[%s4 + $0x1a8] sm:$0xf]
  %v3789 = vld [vmem:[%s4 + $0x1ac] sm:$0xf]
  %v3790 = vld [vmem:[%s4 + $0x1b0] sm:$0xf]
  %v3791 = vld [vmem:[%s4 + $0x1b4] sm:$0xf]
  %v3792 = vld [vmem:[%s4 + $0x1b8] sm:$0xf]
  %v3793 = vld [vmem:[%s4 + $0x1bc] sm:$0xf]
  %v3794 = vld [vmem:[%s4 + $0x1c0] sm:$0xf]
  %v3795 = vld [vmem:[%s4 + $0x1c4] sm:$0xf]
  %v3796 = vld [vmem:[%s4 + $0x1c8] sm:$0xf]
  %v3797 = vld [vmem:[%s4 + $0x1cc] sm:$0xf]
  %v3798 = vld [vmem:[%s4 + $0x1d0] sm:$0xf]
  %v3799 = vld [vmem:[%s4 + $0x1d4] sm:$0xf]
  %v3800 = vld [vmem:[%s4 + $0x1d8] sm:$0xf]
  %v3801 = vld [vmem:[%s4 + $0x1dc] sm:$0xf]
  %v3802 = vld [vmem:[%s4 + $0x1e0] sm:$0xf]
  %v3803 = vld [vmem:[%s4 + $0x1e4] sm:$0xf]
  %v3804 = vld [vmem:[%s4 + $0x1e8] sm:$0xf]
  %v3805 = vld [vmem:[%s4 + $0x1ec] sm:$0xf]
  %v3806 = vld [vmem:[%s4 + $0x1f0] sm:$0xf]
  %v3807 = vld [vmem:[%s4 + $0x1f4] sm:$0xf]
  %v3808 = vld [vmem:[%s4 + $0x1f8] sm:$0xf]
  %v3809 = vld [vmem:[%s4 + $0x1fc] sm:$0xf]
  %v3810 = vld [vmem:[%s4 + $0x200] sm:$0xf]
  %v3811 = vld [vmem:[%s4 + $0x204] sm:$0xf]
  %v3812 = vld [vmem:[%s4 + $0x208] sm:$0xf]
  %v3813 = vld [vmem:[%s4 + $0x20c] sm:$0xf]
  %v3814 = vld [vmem:[%s4 + $0x210] sm:$0xf]
  %v3815 = vld [vmem:[%s4 + $0x214] sm:$0xf]
  %v3816 = vld [vmem:[%s4 + $0x218] sm:$0xf]
  %v3817 = vld [vmem:[%s4 + $0x21c] sm:$0xf]
  %v3818 = vld [vmem:[%s4 + $0x220] sm:$0xf]
  %v3819 = vld [vmem:[%s4 + $0x224] sm:$0xf]
  %v3820 = vld [vmem:[%s4 + $0x228] sm:$0xf]
  %v3821 = vld [vmem:[%s4 + $0x22c] sm:$0xf]
  %v3822 = vld [vmem:[%s4 + $0x230] sm:$0xf]
  %v3823 = vld [vmem:[%s4 + $0x234] sm:$0xf]
  %v3824 = vld [vmem:[%s4 + $0x238] sm:$0xf]
  %v3825 = vld [vmem:[%s4 + $0x23c] sm:$0xf]
  %v3970 = vunpack.c.l.b16 %v3682
  %v3971 = vunpack.c.l.b16 %v3683
  %v3972 = vunpack.c.l.b16 %v3684
  %v3973 = vunpack.c.l.b16 %v3685
  %v3974 = vunpack.c.l.b16 %v3686
  %v3975 = vunpack.c.l.b16 %v3687
  %v3976 = vunpack.c.l.b16 %v3688
  %v3977 = vunpack.c.l.b16 %v3689
  %v3978 = vunpack.c.l.b16 %v3690
  %v3979 = vunpack.c.l.b16 %v3691
  %v3980 = vunpack.c.l.b16 %v3692
  %v3981 = vunpack.c.l.b16 %v3693
  %v3982 = vunpack.c.l.b16 %v3694
  %v3983 = vunpack.c.l.b16 %v3695
  %v3984 = vunpack.c.l.b16 %v3696
  %v3985 = vunpack.c.l.b16 %v3697
  %v3986 = vunpack.c.l.b16 %v3698
  %v3987 = vunpack.c.l.b16 %v3699
  %v3988 = vunpack.c.l.b16 %v3700
  %v3989 = vunpack.c.l.b16 %v3701
  %v3990 = vunpack.c.l.b16 %v3702
  %v3991 = vunpack.c.l.b16 %v3703
  %v3992 = vunpack.c.l.b16 %v3704
  %v3993 = vunpack.c.l.b16 %v3705
  %v3994 = vunpack.c.l.b16 %v3706
  %v3995 = vunpack.c.l.b16 %v3707
  %v3996 = vunpack.c.l.b16 %v3708
  %v3997 = vunpack.c.l.b16 %v3709
  %v3998 = vunpack.c.l.b16 %v3710
  %v3999 = vunpack.c.l.b16 %v3711
  %v4000 = vunpack.c.l.b16 %v3712
  %v4001 = vunpack.c.l.b16 %v3713
  %v4002 = vunpack.c.l.b16 %v3714
  %v4003 = vunpack.c.l.b16 %v3715
  %v4004 = vunpack.c.l.b16 %v3716
  %v4005 = vunpack.c.l.b16 %v3717
  %v4006 = vunpack.c.l.b16 %v3718
  %v4007 = vunpack.c.l.b16 %v3719
  %v4008 = vunpack.c.l.b16 %v3720
  %v4009 = vunpack.c.l.b16 %v3721
  %v4010 = vunpack.c.l.b16 %v3722
  %v4011 = vunpack.c.l.b16 %v3723
  %v4012 = vunpack.c.l.b16 %v3724
  %v4013 = vunpack.c.l.b16 %v3725
  %v4014 = vunpack.c.l.b16 %v3726
  %v4015 = vunpack.c.l.b16 %v3727
  %v4016 = vunpack.c.l.b16 %v3728
  %v4017 = vunpack.c.l.b16 %v3729
  %v4018 = vunpack.c.l.b16 %v3730
  %v4019 = vunpack.c.l.b16 %v3731
  %v4020 = vunpack.c.l.b16 %v3732
  %v4021 = vunpack.c.l.b16 %v3733
  %v4022 = vunpack.c.l.b16 %v3734
  %v4023 = vunpack.c.l.b16 %v3735
  %v4024 = vunpack.c.l.b16 %v3736
  %v4025 = vunpack.c.l.b16 %v3737
  %v4026 = vunpack.c.l.b16 %v3738
  %v4027 = vunpack.c.l.b16 %v3739
  %v4028 = vunpack.c.l.b16 %v3740
  %v4029 = vunpack.c.l.b16 %v3741
  %v4030 = vunpack.c.l.b16 %v3742
  %v4031 = vunpack.c.l.b16 %v3743
  %v4032 = vunpack.c.l.b16 %v3744
  %v4033 = vunpack.c.l.b16 %v3745
  %v4034 = vunpack.c.l.b16 %v3746
  %v4035 = vunpack.c.l.b16 %v3747
  %v4036 = vunpack.c.l.b16 %v3748
  %v4037 = vunpack.c.l.b16 %v3749
  %v4038 = vunpack.c.l.b16 %v3750
  %v4039 = vunpack.c.l.b16 %v3751
  %v4040 = vunpack.c.l.b16 %v3752
  %v4041 = vunpack.c.l.b16 %v3753
  %v4042 = vunpack.c.l.b16 %v3754
  %v4043 = vunpack.c.l.b16 %v3755
  %v4044 = vunpack.c.l.b16 %v3756
  %v4045 = vunpack.c.l.b16 %v3757
  %v4046 = vunpack.c.l.b16 %v3758
  %v4047 = vunpack.c.l.b16 %v3759
  %v4048 = vunpack.c.l.b16 %v3760
  %v4049 = vunpack.c.l.b16 %v3761
  %v4050 = vunpack.c.l.b16 %v3762
  %v4051 = vunpack.c.l.b16 %v3763
  %v4052 = vunpack.c.l.b16 %v3764
  %v4053 = vunpack.c.l.b16 %v3765
  %v4054 = vunpack.c.l.b16 %v3766
  %v4055 = vunpack.c.l.b16 %v3767
  %v4056 = vunpack.c.l.b16 %v3768
  %v4057 = vunpack.c.l.b16 %v3769
  %v4058 = vunpack.c.l.b16 %v3770
  %v4059 = vunpack.c.l.b16 %v3771
  %v4060 = vunpack.c.l.b16 %v3772
  %v4061 = vunpack.c.l.b16 %v3773
  %v4062 = vunpack.c.l.b16 %v3774
  %v4063 = vunpack.c.l.b16 %v3775
  %v4064 = vunpack.c.l.b16 %v3776
  %v4065 = vunpack.c.l.b16 %v3777
  %v4066 = vunpack.c.l.b16 %v3778
  %v4067 = vunpack.c.l.b16 %v3779
  %v4068 = vunpack.c.l.b16 %v3780
  %v4069 = vunpack.c.l.b16 %v3781
  %v4070 = vunpack.c.l.b16 %v3782
  %v4071 = vunpack.c.l.b16 %v3783
  %v4072 = vunpack.c.l.b16 %v3784
  %v4073 = vunpack.c.l.b16 %v3785
  %v4074 = vunpack.c.l.b16 %v3786
  %v4075 = vunpack.c.l.b16 %v3787
  %v4076 = vunpack.c.l.b16 %v3788
  %v4077 = vunpack.c.l.b16 %v3789
  %v4078 = vunpack.c.l.b16 %v3790
  %v4079 = vunpack.c.l.b16 %v3791
  %v4080 = vunpack.c.l.b16 %v3792
  %v4081 = vunpack.c.l.b16 %v3793
  %v4082 = vunpack.c.l.b16 %v3794
  %v4083 = vunpack.c.l.b16 %v3795
  %v4084 = vunpack.c.l.b16 %v3796
  %v4085 = vunpack.c.l.b16 %v3797
  %v4086 = vunpack.c.l.b16 %v3798
  %v4087 = vunpack.c.l.b16 %v3799
  %v4088 = vunpack.c.l.b16 %v3800
  %v4089 = vunpack.c.l.b16 %v3801
  %v4090 = vunpack.c.l.b16 %v3802
  %v4091 = vunpack.c.l.b16 %v3803
  %v4092 = vunpack.c.l.b16 %v3804
  %v4093 = vunpack.c.l.b16 %v3805
  %v4094 = vunpack.c.l.b16 %v3806
  %v4095 = vunpack.c.l.b16 %v3807
  %v4096 = vunpack.c.l.b16 %v3808
  %v4097 = vunpack.c.l.b16 %v3809
  %v4098 = vunpack.c.l.b16 %v3810
  %v4099 = vunpack.c.l.b16 %v3811
  %v4100 = vunpack.c.l.b16 %v3812
  %v4101 = vunpack.c.l.b16 %v3813
  %v4102 = vunpack.c.l.b16 %v3814
  %v4103 = vunpack.c.l.b16 %v3815
  %v4104 = vunpack.c.l.b16 %v3816
  %v4105 = vunpack.c.l.b16 %v3817
  %v4106 = vunpack.c.l.b16 %v3818
  %v4107 = vunpack.c.l.b16 %v3819
  %v4108 = vunpack.c.l.b16 %v3820
  %v4109 = vunpack.c.l.b16 %v3821
  %v4110 = vunpack.c.l.b16 %v3822
  %v4111 = vunpack.c.l.b16 %v3823
  %v4112 = vunpack.c.l.b16 %v3824
  %v4113 = vunpack.c.l.b16 %v3825
  %v4114 = vpack.c.b16 %v3971, %v3970
  %v4115 = vpack.c.b16 %v3973, %v3972
  %v4116 = vpack.c.b16 %v3975, %v3974
  %v4117 = vpack.c.b16 %v3977, %v3976
  %v4118 = vpack.c.b16 %v3979, %v3978
  %v4119 = vpack.c.b16 %v3981, %v3980
  %v4120 = vpack.c.b16 %v3983, %v3982
  %v4121 = vpack.c.b16 %v3985, %v3984
  %v4122 = vpack.c.b16 %v3987, %v3986
  %v4123 = vpack.c.b16 %v3989, %v3988
  %v4124 = vpack.c.b16 %v3991, %v3990
  %v4125 = vpack.c.b16 %v3993, %v3992
  %v4126 = vpack.c.b16 %v3995, %v3994
  %v4127 = vpack.c.b16 %v3997, %v3996
  %v4128 = vpack.c.b16 %v3999, %v3998
  %v4129 = vpack.c.b16 %v4001, %v4000
  %v4130 = vpack.c.b16 %v4003, %v4002
  %v4131 = vpack.c.b16 %v4005, %v4004
  %v4132 = vpack.c.b16 %v4007, %v4006
  %v4133 = vpack.c.b16 %v4009, %v4008
  %v4134 = vpack.c.b16 %v4011, %v4010
  %v4135 = vpack.c.b16 %v4013, %v4012
  %v4136 = vpack.c.b16 %v4015, %v4014
  %v4137 = vpack.c.b16 %v4017, %v4016
  %v4138 = vpack.c.b16 %v4019, %v4018
  %v4139 = vpack.c.b16 %v4021, %v4020
  %v4140 = vpack.c.b16 %v4023, %v4022
  %v4141 = vpack.c.b16 %v4025, %v4024
  %v4142 = vpack.c.b16 %v4027, %v4026
  %v4143 = vpack.c.b16 %v4029, %v4028
  %v4144 = vpack.c.b16 %v4031, %v4030
  %v4145 = vpack.c.b16 %v4033, %v4032
  %v4146 = vpack.c.b16 %v4035, %v4034
  %v4147 = vpack.c.b16 %v4037, %v4036
  %v4148 = vpack.c.b16 %v4039, %v4038
  %v4149 = vpack.c.b16 %v4041, %v4040
  %v4150 = vpack.c.b16 %v4043, %v4042
  %v4151 = vpack.c.b16 %v4045, %v4044
  %v4152 = vpack.c.b16 %v4047, %v4046
  %v4153 = vpack.c.b16 %v4049, %v4048
  %v4154 = vpack.c.b16 %v4051, %v4050
  %v4155 = vpack.c.b16 %v4053, %v4052
  %v4156 = vpack.c.b16 %v4055, %v4054
  %v4157 = vpack.c.b16 %v4057, %v4056
  %v4158 = vpack.c.b16 %v4059, %v4058
  %v4159 = vpack.c.b16 %v4061, %v4060
  %v4160 = vpack.c.b16 %v4063, %v4062
  %v4161 = vpack.c.b16 %v4065, %v4064
  %v4162 = vpack.c.b16 %v4067, %v4066
  %v4163 = vpack.c.b16 %v4069, %v4068
  %v4164 = vpack.c.b16 %v4071, %v4070
  %v4165 = vpack.c.b16 %v4073, %v4072
  %v4166 = vpack.c.b16 %v4075, %v4074
  %v4167 = vpack.c.b16 %v4077, %v4076
  %v4168 = vpack.c.b16 %v4079, %v4078
  %v4169 = vpack.c.b16 %v4081, %v4080
  %v4170 = vpack.c.b16 %v4083, %v4082
  %v4171 = vpack.c.b16 %v4085, %v4084
  %v4172 = vpack.c.b16 %v4087, %v4086
  %v4173 = vpack.c.b16 %v4089, %v4088
  %v4174 = vpack.c.b16 %v4091, %v4090
  %v4175 = vpack.c.b16 %v4093, %v4092
  %v4176 = vpack.c.b16 %v4095, %v4094
  %v4177 = vpack.c.b16 %v4097, %v4096
  %v4178 = vpack.c.b16 %v4099, %v4098
  %v4179 = vpack.c.b16 %v4101, %v4100
  %v4180 = vpack.c.b16 %v4103, %v4102
  %v4181 = vpack.c.b16 %v4105, %v4104
  %v4182 = vpack.c.b16 %v4107, %v4106
  %v4183 = vpack.c.b16 %v4109, %v4108
  %v4184 = vpack.c.b16 %v4111, %v4110
  %v4185 = vpack.c.b16 %v4113, %v4112
  %4258 = vmatpush.bf16.msra.mxu0 %v4121
  %4259 = vmatpush.bf16.msra.mxu0 %v4120
  %4260 = vmatpush.bf16.msra.mxu0 %v4119
  %4261 = vmatpush.bf16.msra.mxu0 %v4118
  %4262 = vmatpush.bf16.msra.mxu0 %v4117
  %4263 = vmatpush.bf16.msra.mxu0 %v4116
  %4264 = vmatpush.bf16.msra.mxu0 %v4115
  %4265 = vmatpush.bf16.msra.mxu0 %v4114
  %4266 = vmatmul.bf16.gmra.mxu0 %v3466
  %v4267 = vpop.f32.mrf.mxu0
  %v4268 = vadd.f32 0.0, %v4267
  %v4269 = vpop.f32.mrf.mxu0
  %v4270 = vadd.f32 0.0, %v4269
  %4271 = vmatmul.bf16.gmra.mxu0 %v3467
  %v4272 = vpop.f32.mrf.mxu0
  %v4273 = vadd.f32 0.0, %v4272
  %v4274 = vpop.f32.mrf.mxu0
  %v4275 = vadd.f32 0.0, %v4274
  %4276 = vmatmul.bf16.gmra.mxu0 %v3468
  %v4277 = vpop.f32.mrf.mxu0
  %v4278 = vadd.f32 0.0, %v4277
  %v4279 = vpop.f32.mrf.mxu0
  %v4280 = vadd.f32 0.0, %v4279
  %4281 = vmatmul.bf16.gmra.mxu0 %v3469
  %v4282 = vpop.f32.mrf.mxu0
  %v4283 = vadd.f32 0.0, %v4282
  %v4284 = vpop.f32.mrf.mxu0
  %v4285 = vadd.f32 0.0, %v4284
  %4286 = vmatmul.bf16.gmra.mxu0 %v3470
  %v4287 = vpop.f32.mrf.mxu0
  %v4288 = vadd.f32 0.0, %v4287
  %v4289 = vpop.f32.mrf.mxu0
  %v4290 = vadd.f32 0.0, %v4289
  %4291 = vmatmul.bf16.gmra.mxu0 %v3471
  %v4292 = vpop.f32.mrf.mxu0
  %v4293 = vadd.f32 0.0, %v4292
  %v4294 = vpop.f32.mrf.mxu0
  %v4295 = vadd.f32 0.0, %v4294
  %4296 = vmatmul.bf16.gmra.mxu0 %v3472
  %v4297 = vpop.f32.mrf.mxu0
  %v4298 = vadd.f32 0.0, %v4297
  %v4299 = vpop.f32.mrf.mxu0
  %v4300 = vadd.f32 0.0, %v4299
  %4301 = vmatmul.bf16.gmra.mxu0 %v3473
  %v4302 = vpop.f32.mrf.mxu0
  %v4303 = vadd.f32 0.0, %v4302
  %v4304 = vpop.f32.mrf.mxu0
  %v4305 = vadd.f32 0.0, %v4304
  %4306 = vmatmul.bf16.gmra.mxu0 %v3474
  %v4307 = vpop.f32.mrf.mxu0
  %v4308 = vadd.f32 0.0, %v4307
  %v4309 = vpop.f32.mrf.mxu0
  %v4310 = vadd.f32 0.0, %v4309
  %4311 = vmatmul.bf16.gmra.mxu0 %v3475
  %v4312 = vpop.f32.mrf.mxu0
  %v4313 = vadd.f32 0.0, %v4312
  %v4314 = vpop.f32.mrf.mxu0
  %v4315 = vadd.f32 0.0, %v4314
  %4316 = vmatmul.bf16.gmra.mxu0 %v3476
  %v4317 = vpop.f32.mrf.mxu0
  %v4318 = vadd.f32 0.0, %v4317
  %v4319 = vpop.f32.mrf.mxu0
  %v4320 = vadd.f32 0.0, %v4319
  %4321 = vmatmul.bf16.gmra.mxu0 %v3477
  %v4322 = vpop.f32.mrf.mxu0
  %v4323 = vadd.f32 0.0, %v4322
  %v4324 = vpop.f32.mrf.mxu0
  %v4325 = vadd.f32 0.0, %v4324
  %4326 = vmatmul.bf16.gmra.mxu0 %v3478
  %v4327 = vpop.f32.mrf.mxu0
  %v4328 = vadd.f32 0.0, %v4327
  %v4329 = vpop.f32.mrf.mxu0
  %v4330 = vadd.f32 0.0, %v4329
  %4331 = vmatmul.bf16.gmra.mxu0 %v3479
  %v4332 = vpop.f32.mrf.mxu0
  %v4333 = vadd.f32 0.0, %v4332
  %v4334 = vpop.f32.mrf.mxu0
  %v4335 = vadd.f32 0.0, %v4334
  %4336 = vmatmul.bf16.gmra.mxu0 %v3480
  %v4337 = vpop.f32.mrf.mxu0
  %v4338 = vadd.f32 0.0, %v4337
  %v4339 = vpop.f32.mrf.mxu0
  %v4340 = vadd.f32 0.0, %v4339
  %4341 = vmatmul.bf16.gmra.mxu0 %v3481
  %v4342 = vpop.f32.mrf.mxu0
  %v4343 = vadd.f32 0.0, %v4342
  %v4344 = vpop.f32.mrf.mxu0
  %v4345 = vadd.f32 0.0, %v4344
  %4346 = vmatmul.bf16.gmra.mxu0 %v3484
  %v4347 = vpop.f32.mrf.mxu0
  %v4348 = vadd.f32 0.0, %v4347
  %v4349 = vpop.f32.mrf.mxu0
  %v4350 = vadd.f32 0.0, %v4349
  %4351 = vmatmul.bf16.gmra.mxu0 %v3485
  %v4352 = vpop.f32.mrf.mxu0
  %v4353 = vadd.f32 0.0, %v4352
  %v4354 = vpop.f32.mrf.mxu0
  %v4355 = vadd.f32 0.0, %v4354
  %4356 = vmatmul.bf16.gmra.mxu0 %v3486
  %v4357 = vpop.f32.mrf.mxu0
  %v4358 = vadd.f32 0.0, %v4357
  %v4359 = vpop.f32.mrf.mxu0
  %v4360 = vadd.f32 0.0, %v4359
  %4361 = vmatmul.bf16.gmra.mxu0 %v3487
  %v4362 = vpop.f32.mrf.mxu0
  %v4363 = vadd.f32 0.0, %v4362
  %v4364 = vpop.f32.mrf.mxu0
  %v4365 = vadd.f32 0.0, %v4364
  %4366 = vmatmul.bf16.gmra.mxu0 %v3488
  %v4367 = vpop.f32.mrf.mxu0
  %v4368 = vadd.f32 0.0, %v4367
  %v4369 = vpop.f32.mrf.mxu0
  %v4370 = vadd.f32 0.0, %v4369
  %4371 = vmatmul.bf16.gmra.mxu0 %v3489
  %v4372 = vpop.f32.mrf.mxu0
  %v4373 = vadd.f32 0.0, %v4372
  %v4374 = vpop.f32.mrf.mxu0
  %v4375 = vadd.f32 0.0, %v4374
  %4376 = vmatmul.bf16.gmra.mxu0 %v3490
  %v4377 = vpop.f32.mrf.mxu0
  %v4378 = vadd.f32 0.0, %v4377
  %v4379 = vpop.f32.mrf.mxu0
  %v4380 = vadd.f32 0.0, %v4379
  %4381 = vmatmul.bf16.gmra.mxu0 %v3491
  %v4382 = vpop.f32.mrf.mxu0
  %v4383 = vadd.f32 0.0, %v4382
  %v4384 = vpop.f32.mrf.mxu0
  %v4385 = vadd.f32 0.0, %v4384
  %4386 = vmatmul.bf16.gmra.mxu0 %v3492
  %v4387 = vpop.f32.mrf.mxu0
  %v4388 = vadd.f32 0.0, %v4387
  %v4389 = vpop.f32.mrf.mxu0
  %v4390 = vadd.f32 0.0, %v4389
  %4391 = vmatmul.bf16.gmra.mxu0 %v3493
  %v4392 = vpop.f32.mrf.mxu0
  %v4393 = vadd.f32 0.0, %v4392
  %v4394 = vpop.f32.mrf.mxu0
  %v4395 = vadd.f32 0.0, %v4394
  %4396 = vmatmul.bf16.gmra.mxu0 %v3494
  %v4397 = vpop.f32.mrf.mxu0
  %v4398 = vadd.f32 0.0, %v4397
  %v4399 = vpop.f32.mrf.mxu0
  %v4400 = vadd.f32 0.0, %v4399
  %4401 = vmatmul.bf16.gmra.mxu0 %v3495
  %v4402 = vpop.f32.mrf.mxu0
  %v4403 = vadd.f32 0.0, %v4402
  %v4404 = vpop.f32.mrf.mxu0
  %v4405 = vadd.f32 0.0, %v4404
  %4406 = vmatmul.bf16.gmra.mxu0 %v3496
  %v4407 = vpop.f32.mrf.mxu0
  %v4408 = vadd.f32 0.0, %v4407
  %v4409 = vpop.f32.mrf.mxu0
  %v4410 = vadd.f32 0.0, %v4409
  %4411 = vmatmul.bf16.gmra.mxu0 %v3497
  %v4412 = vpop.f32.mrf.mxu0
  %v4413 = vadd.f32 0.0, %v4412
  %v4414 = vpop.f32.mrf.mxu0
  %v4415 = vadd.f32 0.0, %v4414
  %4416 = vmatmul.bf16.gmra.mxu0 %v3498
  %v4417 = vpop.f32.mrf.mxu0
  %v4418 = vadd.f32 0.0, %v4417
  %v4419 = vpop.f32.mrf.mxu0
  %v4420 = vadd.f32 0.0, %v4419
  %4421 = vmatmul.bf16.gmra.mxu0 %v3499
  %v4422 = vpop.f32.mrf.mxu0
  %v4423 = vadd.f32 0.0, %v4422
  %v4424 = vpop.f32.mrf.mxu0
  %v4425 = vadd.f32 0.0, %v4424
  %4426 = vdwg.mxu0
  %4427 = vmatpush.bf16.msra.mxu0 %v4129
  %4428 = vmatpush.bf16.msra.mxu0 %v4128
  %4429 = vmatpush.bf16.msra.mxu0 %v4127
  %4430 = vmatpush.bf16.msra.mxu0 %v4126
  %4431 = vmatpush.bf16.msra.mxu0 %v4125
  %4432 = vmatpush.bf16.msra.mxu0 %v4124
  %4433 = vmatpush.bf16.msra.mxu0 %v4123
  %4434 = vmatpush.bf16.msra.mxu0 %v4122
  %4435 = vmatmul.bf16.gmra.mxu0 %v3142
  %v4436 = vpop.f32.mrf.mxu0
  %v4437 = vadd.f32 %v4268, %v4436
  %v4438 = vpop.f32.mrf.mxu0
  %v4439 = vadd.f32 %v4270, %v4438
  %4440 = vmatmul.bf16.gmra.mxu0 %v3143
  %v4441 = vpop.f32.mrf.mxu0
  %v4442 = vadd.f32 %v4273, %v4441
  %v4443 = vpop.f32.mrf.mxu0
  %v4444 = vadd.f32 %v4275, %v4443
  %4445 = vmatmul.bf16.gmra.mxu0 %v3144
  %v4446 = vpop.f32.mrf.mxu0
  %v4447 = vadd.f32 %v4278, %v4446
  %v4448 = vpop.f32.mrf.mxu0
  %v4449 = vadd.f32 %v4280, %v4448
  %4450 = vmatmul.bf16.gmra.mxu0 %v3145
  %v4451 = vpop.f32.mrf.mxu0
  %v4452 = vadd.f32 %v4283, %v4451
  %v4453 = vpop.f32.mrf.mxu0
  %v4454 = vadd.f32 %v4285, %v4453
  %4455 = vmatmul.bf16.gmra.mxu0 %v3146
  %v4456 = vpop.f32.mrf.mxu0
  %v4457 = vadd.f32 %v4288, %v4456
  %v4458 = vpop.f32.mrf.mxu0
  %v4459 = vadd.f32 %v4290, %v4458
  %4460 = vmatmul.bf16.gmra.mxu0 %v3147
  %v4461 = vpop.f32.mrf.mxu0
  %v4462 = vadd.f32 %v4293, %v4461
  %v4463 = vpop.f32.mrf.mxu0
  %v4464 = vadd.f32 %v4295, %v4463
  %4465 = vmatmul.bf16.gmra.mxu0 %v3148
  %v4466 = vpop.f32.mrf.mxu0
  %v4467 = vadd.f32 %v4298, %v4466
  %v4468 = vpop.f32.mrf.mxu0
  %v4469 = vadd.f32 %v4300, %v4468
  %4470 = vmatmul.bf16.gmra.mxu0 %v3149
  %v4471 = vpop.f32.mrf.mxu0
  %v4472 = vadd.f32 %v4303, %v4471
  %v4473 = vpop.f32.mrf.mxu0
  %v4474 = vadd.f32 %v4305, %v4473
  %4475 = vmatmul.bf16.gmra.mxu0 %v3150
  %v4476 = vpop.f32.mrf.mxu0
  %v4477 = vadd.f32 %v4308, %v4476
  %v4478 = vpop.f32.mrf.mxu0
  %v4479 = vadd.f32 %v4310, %v4478
  %4480 = vmatmul.bf16.gmra.mxu0 %v3151
  %v4481 = vpop.f32.mrf.mxu0
  %v4482 = vadd.f32 %v4313, %v4481
  %v4483 = vpop.f32.mrf.mxu0
  %v4484 = vadd.f32 %v4315, %v4483
  %4485 = vmatmul.bf16.gmra.mxu0 %v3152
  %v4486 = vpop.f32.mrf.mxu0
  %v4487 = vadd.f32 %v4318, %v4486
  %v4488 = vpop.f32.mrf.mxu0
  %v4489 = vadd.f32 %v4320, %v4488
  %4490 = vmatmul.bf16.gmra.mxu0 %v3153
  %v4491 = vpop.f32.mrf.mxu0
  %v4492 = vadd.f32 %v4323, %v4491
  %v4493 = vpop.f32.mrf.mxu0
  %v4494 = vadd.f32 %v4325, %v4493
  %4495 = vmatmul.bf16.gmra.mxu0 %v3154
  %v4496 = vpop.f32.mrf.mxu0
  %v4497 = vadd.f32 %v4328, %v4496
  %v4498 = vpop.f32.mrf.mxu0
  %v4499 = vadd.f32 %v4330, %v4498
  %4500 = vmatmul.bf16.gmra.mxu0 %v3155
  %v4501 = vpop.f32.mrf.mxu0
  %v4502 = vadd.f32 %v4333, %v4501
  %v4503 = vpop.f32.mrf.mxu0
  %v4504 = vadd.f32 %v4335, %v4503
  %4505 = vmatmul.bf16.gmra.mxu0 %v3156
  %v4506 = vpop.f32.mrf.mxu0
  %v4507 = vadd.f32 %v4338, %v4506
  %v4508 = vpop.f32.mrf.mxu0
  %v4509 = vadd.f32 %v4340, %v4508
  %4510 = vmatmul.bf16.gmra.mxu0 %v3157
  %v4511 = vpop.f32.mrf.mxu0
  %v4512 = vadd.f32 %v4343, %v4511
  %v4513 = vpop.f32.mrf.mxu0
  %v4514 = vadd.f32 %v4345, %v4513
  %4515 = vmatmul.bf16.gmra.mxu0 %v3160
  %v4516 = vpop.f32.mrf.mxu0
  %v4517 = vadd.f32 %v4348, %v4516
  %v4518 = vpop.f32.mrf.mxu0
  %v4519 = vadd.f32 %v4350, %v4518
  %4520 = vmatmul.bf16.gmra.mxu0 %v3161
  %v4521 = vpop.f32.mrf.mxu0
  %v4522 = vadd.f32 %v4353, %v4521
  %v4523 = vpop.f32.mrf.mxu0
  %v4524 = vadd.f32 %v4355, %v4523
  %4525 = vmatmul.bf16.gmra.mxu0 %v3162
  %v4526 = vpop.f32.mrf.mxu0
  %v4527 = vadd.f32 %v4358, %v4526
  %v4528 = vpop.f32.mrf.mxu0
  %v4529 = vadd.f32 %v4360, %v4528
  %4530 = vmatmul.bf16.gmra.mxu0 %v3163
  %v4531 = vpop.f32.mrf.mxu0
  %v4532 = vadd.f32 %v4363, %v4531
  %v4533 = vpop.f32.mrf.mxu0
  %v4534 = vadd.f32 %v4365, %v4533
  %4535 = vmatmul.bf16.gmra.mxu0 %v3164
  %v4536 = vpop.f32.mrf.mxu0
  %v4537 = vadd.f32 %v4368, %v4536
  %v4538 = vpop.f32.mrf.mxu0
  %v4539 = vadd.f32 %v4370, %v4538
  %4540 = vmatmul.bf16.gmra.mxu0 %v3165
  %v4541 = vpop.f32.mrf.mxu0
  %v4542 = vadd.f32 %v4373, %v4541
  %v4543 = vpop.f32.mrf.mxu0
  %v4544 = vadd.f32 %v4375, %v4543
  %4545 = vmatmul.bf16.gmra.mxu0 %v3166
  %v4546 = vpop.f32.mrf.mxu0
  %v4547 = vadd.f32 %v4378, %v4546
  %v4548 = vpop.f32.mrf.mxu0
  %v4549 = vadd.f32 %v4380, %v4548
  %4550 = vmatmul.bf16.gmra.mxu0 %v3167
  %v4551 = vpop.f32.mrf.mxu0
  %v4552 = vadd.f32 %v4383, %v4551
  %v4553 = vpop.f32.mrf.mxu0
  %v4554 = vadd.f32 %v4385, %v4553
  %4555 = vmatmul.bf16.gmra.mxu0 %v3168
  %v4556 = vpop.f32.mrf.mxu0
  %v4557 = vadd.f32 %v4388, %v4556
  %v4558 = vpop.f32.mrf.mxu0
  %v4559 = vadd.f32 %v4390, %v4558
  %4560 = vmatmul.bf16.gmra.mxu0 %v3169
  %v4561 = vpop.f32.mrf.mxu0
  %v4562 = vadd.f32 %v4393, %v4561
  %v4563 = vpop.f32.mrf.mxu0
  %v4564 = vadd.f32 %v4395, %v4563
  %4565 = vmatmul.bf16.gmra.mxu0 %v3170
  %v4566 = vpop.f32.mrf.mxu0
  %v4567 = vadd.f32 %v4398, %v4566
  %v4568 = vpop.f32.mrf.mxu0
  %v4569 = vadd.f32 %v4400, %v4568
  %4570 = vmatmul.bf16.gmra.mxu0 %v3171
  %v4571 = vpop.f32.mrf.mxu0
  %v4572 = vadd.f32 %v4403, %v4571
  %v4573 = vpop.f32.mrf.mxu0
  %v4574 = vadd.f32 %v4405, %v4573
  %4575 = vmatmul.bf16.gmra.mxu0 %v3172
  %v4576 = vpop.f32.mrf.mxu0
  %v4577 = vadd.f32 %v4408, %v4576
  %v4578 = vpop.f32.mrf.mxu0
  %v4579 = vadd.f32 %v4410, %v4578
  %4580 = vmatmul.bf16.gmra.mxu0 %v3173
  %v4581 = vpop.f32.mrf.mxu0
  %v4582 = vadd.f32 %v4413, %v4581
  %v4583 = vpop.f32.mrf.mxu0
  %v4584 = vadd.f32 %v4415, %v4583
  %4585 = vmatmul.bf16.gmra.mxu0 %v3174
  %v4586 = vpop.f32.mrf.mxu0
  %v4587 = vadd.f32 %v4418, %v4586
  %v4588 = vpop.f32.mrf.mxu0
  %v4589 = vadd.f32 %v4420, %v4588
  %4590 = vmatmul.bf16.gmra.mxu0 %v3175
  %v4591 = vpop.f32.mrf.mxu0
  %v4592 = vadd.f32 %v4423, %v4591
  %v4593 = vpop.f32.mrf.mxu0
  %v4594 = vadd.f32 %v4425, %v4593
  %4595 = vdwg.mxu0
  %4596 = vmatpush.bf16.msra.mxu0 %v4137
  %4597 = vmatpush.bf16.msra.mxu0 %v4136
  %4598 = vmatpush.bf16.msra.mxu0 %v4135
  %4599 = vmatpush.bf16.msra.mxu0 %v4134
  %4600 = vmatpush.bf16.msra.mxu0 %v4133
  %4601 = vmatpush.bf16.msra.mxu0 %v4132
  %4602 = vmatpush.bf16.msra.mxu0 %v4131
  %4603 = vmatpush.bf16.msra.mxu0 %v4130
  %4604 = vmatmul.bf16.gmra.mxu0 %v3610
  %v4605 = vpop.f32.mrf.mxu0
  %v4606 = vadd.f32 %v4437, %v4605
  %v4607 = vpop.f32.mrf.mxu0
  %v4608 = vadd.f32 %v4439, %v4607
  %4609 = vmatmul.bf16.gmra.mxu0 %v3611
  %v4610 = vpop.f32.mrf.mxu0
  %v4611 = vadd.f32 %v4442, %v4610
  %v4612 = vpop.f32.mrf.mxu0
  %v4613 = vadd.f32 %v4444, %v4612
  %4614 = vmatmul.bf16.gmra.mxu0 %v3612
  %v4615 = vpop.f32.mrf.mxu0
  %v4616 = vadd.f32 %v4447, %v4615
  %v4617 = vpop.f32.mrf.mxu0
  %v4618 = vadd.f32 %v4449, %v4617
  %4619 = vmatmul.bf16.gmra.mxu0 %v3613
  %v4620 = vpop.f32.mrf.mxu0
  %v4621 = vadd.f32 %v4452, %v4620
  %v4622 = vpop.f32.mrf.mxu0
  %v4623 = vadd.f32 %v4454, %v4622
  %4624 = vmatmul.bf16.gmra.mxu0 %v3614
  %v4625 = vpop.f32.mrf.mxu0
  %v4626 = vadd.f32 %v4457, %v4625
  %v4627 = vpop.f32.mrf.mxu0
  %v4628 = vadd.f32 %v4459, %v4627
  %4629 = vmatmul.bf16.gmra.mxu0 %v3615
  %v4630 = vpop.f32.mrf.mxu0
  %v4631 = vadd.f32 %v4462, %v4630
  %v4632 = vpop.f32.mrf.mxu0
  %v4633 = vadd.f32 %v4464, %v4632
  %4634 = vmatmul.bf16.gmra.mxu0 %v3616
  %v4635 = vpop.f32.mrf.mxu0
  %v4636 = vadd.f32 %v4467, %v4635
  %v4637 = vpop.f32.mrf.mxu0
  %v4638 = vadd.f32 %v4469, %v4637
  %4639 = vmatmul.bf16.gmra.mxu0 %v3617
  %v4640 = vpop.f32.mrf.mxu0
  %v4641 = vadd.f32 %v4472, %v4640
  %v4642 = vpop.f32.mrf.mxu0
  %v4643 = vadd.f32 %v4474, %v4642
  %4644 = vmatmul.bf16.gmra.mxu0 %v3618
  %v4645 = vpop.f32.mrf.mxu0
  %v4646 = vadd.f32 %v4477, %v4645
  %v4647 = vpop.f32.mrf.mxu0
  %v4648 = vadd.f32 %v4479, %v4647
  %4649 = vmatmul.bf16.gmra.mxu0 %v3619
  %v4650 = vpop.f32.mrf.mxu0
  %v4651 = vadd.f32 %v4482, %v4650
  %v4652 = vpop.f32.mrf.mxu0
  %v4653 = vadd.f32 %v4484, %v4652
  %4654 = vmatmul.bf16.gmra.mxu0 %v3620
  %v4655 = vpop.f32.mrf.mxu0
  %v4656 = vadd.f32 %v4487, %v4655
  %v4657 = vpop.f32.mrf.mxu0
  %v4658 = vadd.f32 %v4489, %v4657
  %4659 = vmatmul.bf16.gmra.mxu0 %v3621
  %v4660 = vpop.f32.mrf.mxu0
  %v4661 = vadd.f32 %v4492, %v4660
  %v4662 = vpop.f32.mrf.mxu0
  %v4663 = vadd.f32 %v4494, %v4662
  %4664 = vmatmul.bf16.gmra.mxu0 %v3622
  %v4665 = vpop.f32.mrf.mxu0
  %v4666 = vadd.f32 %v4497, %v4665
  %v4667 = vpop.f32.mrf.mxu0
  %v4668 = vadd.f32 %v4499, %v4667
  %4669 = vmatmul.bf16.gmra.mxu0 %v3623
  %v4670 = vpop.f32.mrf.mxu0
  %v4671 = vadd.f32 %v4502, %v4670
  %v4672 = vpop.f32.mrf.mxu0
  %v4673 = vadd.f32 %v4504, %v4672
  %4674 = vmatmul.bf16.gmra.mxu0 %v3624
  %v4675 = vpop.f32.mrf.mxu0
  %v4676 = vadd.f32 %v4507, %v4675
  %v4677 = vpop.f32.mrf.mxu0
  %v4678 = vadd.f32 %v4509, %v4677
  %4679 = vmatmul.bf16.gmra.mxu0 %v3625
  %v4680 = vpop.f32.mrf.mxu0
  %v4681 = vadd.f32 %v4512, %v4680
  %v4682 = vpop.f32.mrf.mxu0
  %v4683 = vadd.f32 %v4514, %v4682
  %4684 = vmatmul.bf16.gmra.mxu0 %v3628
  %v4685 = vpop.f32.mrf.mxu0
  %v4686 = vadd.f32 %v4517, %v4685
  %v4687 = vpop.f32.mrf.mxu0
  %v4688 = vadd.f32 %v4519, %v4687
  %4689 = vmatmul.bf16.gmra.mxu0 %v3629
  %v4690 = vpop.f32.mrf.mxu0
  %v4691 = vadd.f32 %v4522, %v4690
  %v4692 = vpop.f32.mrf.mxu0
  %v4693 = vadd.f32 %v4524, %v4692
  %4694 = vmatmul.bf16.gmra.mxu0 %v3630
  %v4695 = vpop.f32.mrf.mxu0
  %v4696 = vadd.f32 %v4527, %v4695
  %v4697 = vpop.f32.mrf.mxu0
  %v4698 = vadd.f32 %v4529, %v4697
  %4699 = vmatmul.bf16.gmra.mxu0 %v3631
  %v4700 = vpop.f32.mrf.mxu0
  %v4701 = vadd.f32 %v4532, %v4700
  %v4702 = vpop.f32.mrf.mxu0
  %v4703 = vadd.f32 %v4534, %v4702
  %4704 = vmatmul.bf16.gmra.mxu0 %v3632
  %v4705 = vpop.f32.mrf.mxu0
  %v4706 = vadd.f32 %v4537, %v4705
  %v4707 = vpop.f32.mrf.mxu0
  %v4708 = vadd.f32 %v4539, %v4707
  %4709 = vmatmul.bf16.gmra.mxu0 %v3633
  %v4710 = vpop.f32.mrf.mxu0
  %v4711 = vadd.f32 %v4542, %v4710
  %v4712 = vpop.f32.mrf.mxu0
  %v4713 = vadd.f32 %v4544, %v4712
  %4714 = vmatmul.bf16.gmra.mxu0 %v3634
  %v4715 = vpop.f32.mrf.mxu0
  %v4716 = vadd.f32 %v4547, %v4715
  %v4717 = vpop.f32.mrf.mxu0
  %v4718 = vadd.f32 %v4549, %v4717
  %4719 = vmatmul.bf16.gmra.mxu0 %v3635
  %v4720 = vpop.f32.mrf.mxu0
  %v4721 = vadd.f32 %v4552, %v4720
  %v4722 = vpop.f32.mrf.mxu0
  %v4723 = vadd.f32 %v4554, %v4722
  %4724 = vmatmul.bf16.gmra.mxu0 %v3636
  %v4725 = vpop.f32.mrf.mxu0
  %v4726 = vadd.f32 %v4557, %v4725
  %v4727 = vpop.f32.mrf.mxu0
  %v4728 = vadd.f32 %v4559, %v4727
  %4729 = vmatmul.bf16.gmra.mxu0 %v3637
  %v4730 = vpop.f32.mrf.mxu0
  %v4731 = vadd.f32 %v4562, %v4730
  %v4732 = vpop.f32.mrf.mxu0
  %v4733 = vadd.f32 %v4564, %v4732
  %4734 = vmatmul.bf16.gmra.mxu0 %v3638
  %v4735 = vpop.f32.mrf.mxu0
  %v4736 = vadd.f32 %v4567, %v4735
  %v4737 = vpop.f32.mrf.mxu0
  %v4738 = vadd.f32 %v4569, %v4737
  %4739 = vmatmul.bf16.gmra.mxu0 %v3639
  %v4740 = vpop.f32.mrf.mxu0
  %v4741 = vadd.f32 %v4572, %v4740
  %v4742 = vpop.f32.mrf.mxu0
  %v4743 = vadd.f32 %v4574, %v4742
  %4744 = vmatmul.bf16.gmra.mxu0 %v3640
  %v4745 = vpop.f32.mrf.mxu0
  %v4746 = vadd.f32 %v4577, %v4745
  %v4747 = vpop.f32.mrf.mxu0
  %v4748 = vadd.f32 %v4579, %v4747
  %4749 = vmatmul.bf16.gmra.mxu0 %v3641
  %v4750 = vpop.f32.mrf.mxu0
  %v4751 = vadd.f32 %v4582, %v4750
  %v4752 = vpop.f32.mrf.mxu0
  %v4753 = vadd.f32 %v4584, %v4752
  %4754 = vmatmul.bf16.gmra.mxu0 %v3642
  %v4755 = vpop.f32.mrf.mxu0
  %v4756 = vadd.f32 %v4587, %v4755
  %v4757 = vpop.f32.mrf.mxu0
  %v4758 = vadd.f32 %v4589, %v4757
  %4759 = vmatmul.bf16.gmra.mxu0 %v3643
  %v4760 = vpop.f32.mrf.mxu0
  %v4761 = vadd.f32 %v4592, %v4760
  %v4762 = vpop.f32.mrf.mxu0
  %v4763 = vadd.f32 %v4594, %v4762
  %4764 = vdwg.mxu0
  %4765 = vmatpush.bf16.msra.mxu0 %v4145
  %4766 = vmatpush.bf16.msra.mxu0 %v4144
  %4767 = vmatpush.bf16.msra.mxu0 %v4143
  %4768 = vmatpush.bf16.msra.mxu0 %v4142
  %4769 = vmatpush.bf16.msra.mxu0 %v4141
  %4770 = vmatpush.bf16.msra.mxu0 %v4140
  %4771 = vmatpush.bf16.msra.mxu0 %v4139
  %4772 = vmatpush.bf16.msra.mxu0 %v4138
  %4773 = vmatmul.bf16.gmra.mxu0 %v3467
  %v4774 = vpop.f32.mrf.mxu0
  %v4775 = vadd.f32 %v4606, %v4774
  %v4776 = vpop.f32.mrf.mxu0
  %v4777 = vadd.f32 %v4608, %v4776
  %4778 = vmatmul.bf16.gmra.mxu0 %v3468
  %v4779 = vpop.f32.mrf.mxu0
  %v4780 = vadd.f32 %v4611, %v4779
  %v4781 = vpop.f32.mrf.mxu0
  %v4782 = vadd.f32 %v4613, %v4781
  %4783 = vmatmul.bf16.gmra.mxu0 %v3469
  %v4784 = vpop.f32.mrf.mxu0
  %v4785 = vadd.f32 %v4616, %v4784
  %v4786 = vpop.f32.mrf.mxu0
  %v4787 = vadd.f32 %v4618, %v4786
  %4788 = vmatmul.bf16.gmra.mxu0 %v3470
  %v4789 = vpop.f32.mrf.mxu0
  %v4790 = vadd.f32 %v4621, %v4789
  %v4791 = vpop.f32.mrf.mxu0
  %v4792 = vadd.f32 %v4623, %v4791
  %4793 = vmatmul.bf16.gmra.mxu0 %v3471
  %v4794 = vpop.f32.mrf.mxu0
  %v4795 = vadd.f32 %v4626, %v4794
  %v4796 = vpop.f32.mrf.mxu0
  %v4797 = vadd.f32 %v4628, %v4796
  %4798 = vmatmul.bf16.gmra.mxu0 %v3472
  %v4799 = vpop.f32.mrf.mxu0
  %v4800 = vadd.f32 %v4631, %v4799
  %v4801 = vpop.f32.mrf.mxu0
  %v4802 = vadd.f32 %v4633, %v4801
  %4803 = vmatmul.bf16.gmra.mxu0 %v3473
  %v4804 = vpop.f32.mrf.mxu0
  %v4805 = vadd.f32 %v4636, %v4804
  %v4806 = vpop.f32.mrf.mxu0
  %v4807 = vadd.f32 %v4638, %v4806
  %4808 = vmatmul.bf16.gmra.mxu0 %v3474
  %v4809 = vpop.f32.mrf.mxu0
  %v4810 = vadd.f32 %v4641, %v4809
  %v4811 = vpop.f32.mrf.mxu0
  %v4812 = vadd.f32 %v4643, %v4811
  %4813 = vmatmul.bf16.gmra.mxu0 %v3475
  %v4814 = vpop.f32.mrf.mxu0
  %v4815 = vadd.f32 %v4646, %v4814
  %v4816 = vpop.f32.mrf.mxu0
  %v4817 = vadd.f32 %v4648, %v4816
  %4818 = vmatmul.bf16.gmra.mxu0 %v3476
  %v4819 = vpop.f32.mrf.mxu0
  %v4820 = vadd.f32 %v4651, %v4819
  %v4821 = vpop.f32.mrf.mxu0
  %v4822 = vadd.f32 %v4653, %v4821
  %4823 = vmatmul.bf16.gmra.mxu0 %v3477
  %v4824 = vpop.f32.mrf.mxu0
  %v4825 = vadd.f32 %v4656, %v4824
  %v4826 = vpop.f32.mrf.mxu0
  %v4827 = vadd.f32 %v4658, %v4826
  %4828 = vmatmul.bf16.gmra.mxu0 %v3478
  %v4829 = vpop.f32.mrf.mxu0
  %v4830 = vadd.f32 %v4661, %v4829
  %v4831 = vpop.f32.mrf.mxu0
  %v4832 = vadd.f32 %v4663, %v4831
  %4833 = vmatmul.bf16.gmra.mxu0 %v3479
  %v4834 = vpop.f32.mrf.mxu0
  %v4835 = vadd.f32 %v4666, %v4834
  %v4836 = vpop.f32.mrf.mxu0
  %v4837 = vadd.f32 %v4668, %v4836
  %4838 = vmatmul.bf16.gmra.mxu0 %v3480
  %v4839 = vpop.f32.mrf.mxu0
  %v4840 = vadd.f32 %v4671, %v4839
  %v4841 = vpop.f32.mrf.mxu0
  %v4842 = vadd.f32 %v4673, %v4841
  %4843 = vmatmul.bf16.gmra.mxu0 %v3481
  %v4844 = vpop.f32.mrf.mxu0
  %v4845 = vadd.f32 %v4676, %v4844
  %v4846 = vpop.f32.mrf.mxu0
  %v4847 = vadd.f32 %v4678, %v4846
  %4848 = vmatmul.bf16.gmra.mxu0 %v3482
  %v4849 = vpop.f32.mrf.mxu0
  %v4850 = vadd.f32 %v4681, %v4849
  %v4851 = vpop.f32.mrf.mxu0
  %v4852 = vadd.f32 %v4683, %v4851
  %4853 = vmatmul.bf16.gmra.mxu0 %v3485
  %v4854 = vpop.f32.mrf.mxu0
  %v4855 = vadd.f32 %v4686, %v4854
  %v4856 = vpop.f32.mrf.mxu0
  %v4857 = vadd.f32 %v4688, %v4856
  %4858 = vmatmul.bf16.gmra.mxu0 %v3486
  %v4859 = vpop.f32.mrf.mxu0
  %v4860 = vadd.f32 %v4691, %v4859
  %v4861 = vpop.f32.mrf.mxu0
  %v4862 = vadd.f32 %v4693, %v4861
  %4863 = vmatmul.bf16.gmra.mxu0 %v3487
  %v4864 = vpop.f32.mrf.mxu0
  %v4865 = vadd.f32 %v4696, %v4864
  %v4866 = vpop.f32.mrf.mxu0
  %v4867 = vadd.f32 %v4698, %v4866
  %4868 = vmatmul.bf16.gmra.mxu0 %v3488
  %v4869 = vpop.f32.mrf.mxu0
  %v4870 = vadd.f32 %v4701, %v4869
  %v4871 = vpop.f32.mrf.mxu0
  %v4872 = vadd.f32 %v4703, %v4871
  %4873 = vmatmul.bf16.gmra.mxu0 %v3489
  %v4874 = vpop.f32.mrf.mxu0
  %v4875 = vadd.f32 %v4706, %v4874
  %v4876 = vpop.f32.mrf.mxu0
  %v4877 = vadd.f32 %v4708, %v4876
  %4878 = vmatmul.bf16.gmra.mxu0 %v3490
  %v4879 = vpop.f32.mrf.mxu0
  %v4880 = vadd.f32 %v4711, %v4879
  %v4881 = vpop.f32.mrf.mxu0
  %v4882 = vadd.f32 %v4713, %v4881
  %4883 = vmatmul.bf16.gmra.mxu0 %v3491
  %v4884 = vpop.f32.mrf.mxu0
  %v4885 = vadd.f32 %v4716, %v4884
  %v4886 = vpop.f32.mrf.mxu0
  %v4887 = vadd.f32 %v4718, %v4886
  %4888 = vmatmul.bf16.gmra.mxu0 %v3492
  %v4889 = vpop.f32.mrf.mxu0
  %v4890 = vadd.f32 %v4721, %v4889
  %v4891 = vpop.f32.mrf.mxu0
  %v4892 = vadd.f32 %v4723, %v4891
  %4893 = vmatmul.bf16.gmra.mxu0 %v3493
  %v4894 = vpop.f32.mrf.mxu0
  %v4895 = vadd.f32 %v4726, %v4894
  %v4896 = vpop.f32.mrf.mxu0
  %v4897 = vadd.f32 %v4728, %v4896
  %4898 = vmatmul.bf16.gmra.mxu0 %v3494
  %v4899 = vpop.f32.mrf.mxu0
  %v4900 = vadd.f32 %v4731, %v4899
  %v4901 = vpop.f32.mrf.mxu0
  %v4902 = vadd.f32 %v4733, %v4901
  %4903 = vmatmul.bf16.gmra.mxu0 %v3495
  %v4904 = vpop.f32.mrf.mxu0
  %v4905 = vadd.f32 %v4736, %v4904
  %v4906 = vpop.f32.mrf.mxu0
  %v4907 = vadd.f32 %v4738, %v4906
  %4908 = vmatmul.bf16.gmra.mxu0 %v3496
  %v4909 = vpop.f32.mrf.mxu0
  %v4910 = vadd.f32 %v4741, %v4909
  %v4911 = vpop.f32.mrf.mxu0
  %v4912 = vadd.f32 %v4743, %v4911
  %4913 = vmatmul.bf16.gmra.mxu0 %v3497
  %v4914 = vpop.f32.mrf.mxu0
  %v4915 = vadd.f32 %v4746, %v4914
  %v4916 = vpop.f32.mrf.mxu0
  %v4917 = vadd.f32 %v4748, %v4916
  %4918 = vmatmul.bf16.gmra.mxu0 %v3498
  %v4919 = vpop.f32.mrf.mxu0
  %v4920 = vadd.f32 %v4751, %v4919
  %v4921 = vpop.f32.mrf.mxu0
  %v4922 = vadd.f32 %v4753, %v4921
  %4923 = vmatmul.bf16.gmra.mxu0 %v3499
  %v4924 = vpop.f32.mrf.mxu0
  %v4925 = vadd.f32 %v4756, %v4924
  %v4926 = vpop.f32.mrf.mxu0
  %v4927 = vadd.f32 %v4758, %v4926
  %4928 = vmatmul.bf16.gmra.mxu0 %v3500
  %v4929 = vpop.f32.mrf.mxu0
  %v4930 = vadd.f32 %v4761, %v4929
  %v4931 = vpop.f32.mrf.mxu0
  %v4932 = vadd.f32 %v4763, %v4931
  %4933 = vdwg.mxu0
  %4934 = vmatpush.bf16.msra.mxu0 %v4153
  %4935 = vmatpush.bf16.msra.mxu0 %v4152
  %4936 = vmatpush.bf16.msra.mxu0 %v4151
  %4937 = vmatpush.bf16.msra.mxu0 %v4150
  %4938 = vmatpush.bf16.msra.mxu0 %v4149
  %4939 = vmatpush.bf16.msra.mxu0 %v4148
  %4940 = vmatpush.bf16.msra.mxu0 %v4147
  %4941 = vmatpush.bf16.msra.mxu0 %v4146
  %4942 = vmatmul.bf16.gmra.mxu0 %v3143
  %v4943 = vpop.f32.mrf.mxu0
  %v4944 = vadd.f32 %v4775, %v4943
  %v4945 = vpop.f32.mrf.mxu0
  %v4946 = vadd.f32 %v4777, %v4945
  %4947 = vmatmul.bf16.gmra.mxu0 %v3144
  %v4948 = vpop.f32.mrf.mxu0
  %v4949 = vadd.f32 %v4780, %v4948
  %v4950 = vpop.f32.mrf.mxu0
  %v4951 = vadd.f32 %v4782, %v4950
  %4952 = vmatmul.bf16.gmra.mxu0 %v3145
  %v4953 = vpop.f32.mrf.mxu0
  %v4954 = vadd.f32 %v4785, %v4953
  %v4955 = vpop.f32.mrf.mxu0
  %v4956 = vadd.f32 %v4787, %v4955
  %4957 = vmatmul.bf16.gmra.mxu0 %v3146
  %v4958 = vpop.f32.mrf.mxu0
  %v4959 = vadd.f32 %v4790, %v4958
  %v4960 = vpop.f32.mrf.mxu0
  %v4961 = vadd.f32 %v4792, %v4960
  %4962 = vmatmul.bf16.gmra.mxu0 %v3147
  %v4963 = vpop.f32.mrf.mxu0
  %v4964 = vadd.f32 %v4795, %v4963
  %v4965 = vpop.f32.mrf.mxu0
  %v4966 = vadd.f32 %v4797, %v4965
  %4967 = vmatmul.bf16.gmra.mxu0 %v3148
  %v4968 = vpop.f32.mrf.mxu0
  %v4969 = vadd.f32 %v4800, %v4968
  %v4970 = vpop.f32.mrf.mxu0
  %v4971 = vadd.f32 %v4802, %v4970
  %4972 = vmatmul.bf16.gmra.mxu0 %v3149
  %v4973 = vpop.f32.mrf.mxu0
  %v4974 = vadd.f32 %v4805, %v4973
  %v4975 = vpop.f32.mrf.mxu0
  %v4976 = vadd.f32 %v4807, %v4975
  %4977 = vmatmul.bf16.gmra.mxu0 %v3150
  %v4978 = vpop.f32.mrf.mxu0
  %v4979 = vadd.f32 %v4810, %v4978
  %v4980 = vpop.f32.mrf.mxu0
  %v4981 = vadd.f32 %v4812, %v4980
  %4982 = vmatmul.bf16.gmra.mxu0 %v3151
  %v4983 = vpop.f32.mrf.mxu0
  %v4984 = vadd.f32 %v4815, %v4983
  %v4985 = vpop.f32.mrf.mxu0
  %v4986 = vadd.f32 %v4817, %v4985
  %4987 = vmatmul.bf16.gmra.mxu0 %v3152
  %v4988 = vpop.f32.mrf.mxu0
  %v4989 = vadd.f32 %v4820, %v4988
  %v4990 = vpop.f32.mrf.mxu0
  %v4991 = vadd.f32 %v4822, %v4990
  %4992 = vmatmul.bf16.gmra.mxu0 %v3153
  %v4993 = vpop.f32.mrf.mxu0
  %v4994 = vadd.f32 %v4825, %v4993
  %v4995 = vpop.f32.mrf.mxu0
  %v4996 = vadd.f32 %v4827, %v4995
  %4997 = vmatmul.bf16.gmra.mxu0 %v3154
  %v4998 = vpop.f32.mrf.mxu0
  %v4999 = vadd.f32 %v4830, %v4998
  %v5000 = vpop.f32.mrf.mxu0
  %v5001 = vadd.f32 %v4832, %v5000
  %5002 = vmatmul.bf16.gmra.mxu0 %v3155
  %v5003 = vpop.f32.mrf.mxu0
  %v5004 = vadd.f32 %v4835, %v5003
  %v5005 = vpop.f32.mrf.mxu0
  %v5006 = vadd.f32 %v4837, %v5005
  %5007 = vmatmul.bf16.gmra.mxu0 %v3156
  %v5008 = vpop.f32.mrf.mxu0
  %v5009 = vadd.f32 %v4840, %v5008
  %v5010 = vpop.f32.mrf.mxu0
  %v5011 = vadd.f32 %v4842, %v5010
  %5012 = vmatmul.bf16.gmra.mxu0 %v3157
  %v5013 = vpop.f32.mrf.mxu0
  %v5014 = vadd.f32 %v4845, %v5013
  %v5015 = vpop.f32.mrf.mxu0
  %v5016 = vadd.f32 %v4847, %v5015
  %5017 = vmatmul.bf16.gmra.mxu0 %v3158
  %v5018 = vpop.f32.mrf.mxu0
  %v5019 = vadd.f32 %v4850, %v5018
  %v5020 = vpop.f32.mrf.mxu0
  %v5021 = vadd.f32 %v4852, %v5020
  %5022 = vmatmul.bf16.gmra.mxu0 %v3161
  %v5023 = vpop.f32.mrf.mxu0
  %v5024 = vadd.f32 %v4855, %v5023
  %v5025 = vpop.f32.mrf.mxu0
  %v5026 = vadd.f32 %v4857, %v5025
  %5027 = vmatmul.bf16.gmra.mxu0 %v3162
  %v5028 = vpop.f32.mrf.mxu0
  %v5029 = vadd.f32 %v4860, %v5028
  %v5030 = vpop.f32.mrf.mxu0
  %v5031 = vadd.f32 %v4862, %v5030
  %5032 = vmatmul.bf16.gmra.mxu0 %v3163
  %v5033 = vpop.f32.mrf.mxu0
  %v5034 = vadd.f32 %v4865, %v5033
  %v5035 = vpop.f32.mrf.mxu0
  %v5036 = vadd.f32 %v4867, %v5035
  %5037 = vmatmul.bf16.gmra.mxu0 %v3164
  %v5038 = vpop.f32.mrf.mxu0
  %v5039 = vadd.f32 %v4870, %v5038
  %v5040 = vpop.f32.mrf.mxu0
  %v5041 = vadd.f32 %v4872, %v5040
  %5042 = vmatmul.bf16.gmra.mxu0 %v3165
  %v5043 = vpop.f32.mrf.mxu0
  %v5044 = vadd.f32 %v4875, %v5043
  %v5045 = vpop.f32.mrf.mxu0
  %v5046 = vadd.f32 %v4877, %v5045
  %5047 = vmatmul.bf16.gmra.mxu0 %v3166
  %v5048 = vpop.f32.mrf.mxu0
  %v5049 = vadd.f32 %v4880, %v5048
  %v5050 = vpop.f32.mrf.mxu0
  %v5051 = vadd.f32 %v4882, %v5050
  %5052 = vmatmul.bf16.gmra.mxu0 %v3167
  %v5053 = vpop.f32.mrf.mxu0
  %v5054 = vadd.f32 %v4885, %v5053
  %v5055 = vpop.f32.mrf.mxu0
  %v5056 = vadd.f32 %v4887, %v5055
  %5057 = vmatmul.bf16.gmra.mxu0 %v3168
  %v5058 = vpop.f32.mrf.mxu0
  %v5059 = vadd.f32 %v4890, %v5058
  %v5060 = vpop.f32.mrf.mxu0
  %v5061 = vadd.f32 %v4892, %v5060
  %5062 = vmatmul.bf16.gmra.mxu0 %v3169
  %v5063 = vpop.f32.mrf.mxu0
  %v5064 = vadd.f32 %v4895, %v5063
  %v5065 = vpop.f32.mrf.mxu0
  %v5066 = vadd.f32 %v4897, %v5065
  %5067 = vmatmul.bf16.gmra.mxu0 %v3170
  %v5068 = vpop.f32.mrf.mxu0
  %v5069 = vadd.f32 %v4900, %v5068
  %v5070 = vpop.f32.mrf.mxu0
  %v5071 = vadd.f32 %v4902, %v5070
  %5072 = vmatmul.bf16.gmra.mxu0 %v3171
  %v5073 = vpop.f32.mrf.mxu0
  %v5074 = vadd.f32 %v4905, %v5073
  %v5075 = vpop.f32.mrf.mxu0
  %v5076 = vadd.f32 %v4907, %v5075
  %5077 = vmatmul.bf16.gmra.mxu0 %v3172
  %v5078 = vpop.f32.mrf.mxu0
  %v5079 = vadd.f32 %v4910, %v5078
  %v5080 = vpop.f32.mrf.mxu0
  %v5081 = vadd.f32 %v4912, %v5080
  %5082 = vmatmul.bf16.gmra.mxu0 %v3173
  %v5083 = vpop.f32.mrf.mxu0
  %v5084 = vadd.f32 %v4915, %v5083
  %v5085 = vpop.f32.mrf.mxu0
  %v5086 = vadd.f32 %v4917, %v5085
  %5087 = vmatmul.bf16.gmra.mxu0 %v3174
  %v5088 = vpop.f32.mrf.mxu0
  %v5089 = vadd.f32 %v4920, %v5088
  %v5090 = vpop.f32.mrf.mxu0
  %v5091 = vadd.f32 %v4922, %v5090
  %5092 = vmatmul.bf16.gmra.mxu0 %v3175
  %v5093 = vpop.f32.mrf.mxu0
  %v5094 = vadd.f32 %v4925, %v5093
  %v5095 = vpop.f32.mrf.mxu0
  %v5096 = vadd.f32 %v4927, %v5095
  %5097 = vmatmul.bf16.gmra.mxu0 %v3176
  %v5098 = vpop.f32.mrf.mxu0
  %v5099 = vadd.f32 %v4930, %v5098
  %v5100 = vpop.f32.mrf.mxu0
  %v5101 = vadd.f32 %v4932, %v5100
  %5102 = vdwg.mxu0
  %5103 = vmatpush.bf16.msra.mxu0 %v4161
  %5104 = vmatpush.bf16.msra.mxu0 %v4160
  %5105 = vmatpush.bf16.msra.mxu0 %v4159
  %5106 = vmatpush.bf16.msra.mxu0 %v4158
  %5107 = vmatpush.bf16.msra.mxu0 %v4157
  %5108 = vmatpush.bf16.msra.mxu0 %v4156
  %5109 = vmatpush.bf16.msra.mxu0 %v4155
  %5110 = vmatpush.bf16.msra.mxu0 %v4154
  %5111 = vmatmul.bf16.gmra.mxu0 %v3611
  %v5112 = vpop.f32.mrf.mxu0
  %v5113 = vadd.f32 %v4944, %v5112
  %v5114 = vpop.f32.mrf.mxu0
  %v5115 = vadd.f32 %v4946, %v5114
  %5116 = vmatmul.bf16.gmra.mxu0 %v3612
  %v5117 = vpop.f32.mrf.mxu0
  %v5118 = vadd.f32 %v4949, %v5117
  %v5119 = vpop.f32.mrf.mxu0
  %v5120 = vadd.f32 %v4951, %v5119
  %5121 = vmatmul.bf16.gmra.mxu0 %v3613
  %v5122 = vpop.f32.mrf.mxu0
  %v5123 = vadd.f32 %v4954, %v5122
  %v5124 = vpop.f32.mrf.mxu0
  %v5125 = vadd.f32 %v4956, %v5124
  %5126 = vmatmul.bf16.gmra.mxu0 %v3614
  %v5127 = vpop.f32.mrf.mxu0
  %v5128 = vadd.f32 %v4959, %v5127
  %v5129 = vpop.f32.mrf.mxu0
  %v5130 = vadd.f32 %v4961, %v5129
  %5131 = vmatmul.bf16.gmra.mxu0 %v3615
  %v5132 = vpop.f32.mrf.mxu0
  %v5133 = vadd.f32 %v4964, %v5132
  %v5134 = vpop.f32.mrf.mxu0
  %v5135 = vadd.f32 %v4966, %v5134
  %5136 = vmatmul.bf16.gmra.mxu0 %v3616
  %v5137 = vpop.f32.mrf.mxu0
  %v5138 = vadd.f32 %v4969, %v5137
  %v5139 = vpop.f32.mrf.mxu0
  %v5140 = vadd.f32 %v4971, %v5139
  %5141 = vmatmul.bf16.gmra.mxu0 %v3617
  %v5142 = vpop.f32.mrf.mxu0
  %v5143 = vadd.f32 %v4974, %v5142
  %v5144 = vpop.f32.mrf.mxu0
  %v5145 = vadd.f32 %v4976, %v5144
  %5146 = vmatmul.bf16.gmra.mxu0 %v3618
  %v5147 = vpop.f32.mrf.mxu0
  %v5148 = vadd.f32 %v4979, %v5147
  %v5149 = vpop.f32.mrf.mxu0
  %v5150 = vadd.f32 %v4981, %v5149
  %5151 = vmatmul.bf16.gmra.mxu0 %v3619
  %v5152 = vpop.f32.mrf.mxu0
  %v5153 = vadd.f32 %v4984, %v5152
  %v5154 = vpop.f32.mrf.mxu0
  %v5155 = vadd.f32 %v4986, %v5154
  %5156 = vmatmul.bf16.gmra.mxu0 %v3620
  %v5157 = vpop.f32.mrf.mxu0
  %v5158 = vadd.f32 %v4989, %v5157
  %v5159 = vpop.f32.mrf.mxu0
  %v5160 = vadd.f32 %v4991, %v5159
  %5161 = vmatmul.bf16.gmra.mxu0 %v3621
  %v5162 = vpop.f32.mrf.mxu0
  %v5163 = vadd.f32 %v4994, %v5162
  %v5164 = vpop.f32.mrf.mxu0
  %v5165 = vadd.f32 %v4996, %v5164
  %5166 = vmatmul.bf16.gmra.mxu0 %v3622
  %v5167 = vpop.f32.mrf.mxu0
  %v5168 = vadd.f32 %v4999, %v5167
  %v5169 = vpop.f32.mrf.mxu0
  %v5170 = vadd.f32 %v5001, %v5169
  %5171 = vmatmul.bf16.gmra.mxu0 %v3623
  %v5172 = vpop.f32.mrf.mxu0
  %v5173 = vadd.f32 %v5004, %v5172
  %v5174 = vpop.f32.mrf.mxu0
  %v5175 = vadd.f32 %v5006, %v5174
  %5176 = vmatmul.bf16.gmra.mxu0 %v3624
  %v5177 = vpop.f32.mrf.mxu0
  %v5178 = vadd.f32 %v5009, %v5177
  %v5179 = vpop.f32.mrf.mxu0
  %v5180 = vadd.f32 %v5011, %v5179
  %5181 = vmatmul.bf16.gmra.mxu0 %v3625
  %v5182 = vpop.f32.mrf.mxu0
  %v5183 = vadd.f32 %v5014, %v5182
  %v5184 = vpop.f32.mrf.mxu0
  %v5185 = vadd.f32 %v5016, %v5184
  %5186 = vmatmul.bf16.gmra.mxu0 %v3626
  %v5187 = vpop.f32.mrf.mxu0
  %v5188 = vadd.f32 %v5019, %v5187
  %v5189 = vpop.f32.mrf.mxu0
  %v5190 = vadd.f32 %v5021, %v5189
  %5191 = vmatmul.bf16.gmra.mxu0 %v3629
  %v5192 = vpop.f32.mrf.mxu0
  %v5193 = vadd.f32 %v5024, %v5192
  %v5194 = vpop.f32.mrf.mxu0
  %v5195 = vadd.f32 %v5026, %v5194
  %5196 = vmatmul.bf16.gmra.mxu0 %v3630
  %v5197 = vpop.f32.mrf.mxu0
  %v5198 = vadd.f32 %v5029, %v5197
  %v5199 = vpop.f32.mrf.mxu0
  %v5200 = vadd.f32 %v5031, %v5199
  %5201 = vmatmul.bf16.gmra.mxu0 %v3631
  %v5202 = vpop.f32.mrf.mxu0
  %v5203 = vadd.f32 %v5034, %v5202
  %v5204 = vpop.f32.mrf.mxu0
  %v5205 = vadd.f32 %v5036, %v5204
  %5206 = vmatmul.bf16.gmra.mxu0 %v3632
  %v5207 = vpop.f32.mrf.mxu0
  %v5208 = vadd.f32 %v5039, %v5207
  %v5209 = vpop.f32.mrf.mxu0
  %v5210 = vadd.f32 %v5041, %v5209
  %5211 = vmatmul.bf16.gmra.mxu0 %v3633
  %v5212 = vpop.f32.mrf.mxu0
  %v5213 = vadd.f32 %v5044, %v5212
  %v5214 = vpop.f32.mrf.mxu0
  %v5215 = vadd.f32 %v5046, %v5214
  %5216 = vmatmul.bf16.gmra.mxu0 %v3634
  %v5217 = vpop.f32.mrf.mxu0
  %v5218 = vadd.f32 %v5049, %v5217
  %v5219 = vpop.f32.mrf.mxu0
  %v5220 = vadd.f32 %v5051, %v5219
  %5221 = vmatmul.bf16.gmra.mxu0 %v3635
  %v5222 = vpop.f32.mrf.mxu0
  %v5223 = vadd.f32 %v5054, %v5222
  %v5224 = vpop.f32.mrf.mxu0
  %v5225 = vadd.f32 %v5056, %v5224
  %5226 = vmatmul.bf16.gmra.mxu0 %v3636
  %v5227 = vpop.f32.mrf.mxu0
  %v5228 = vadd.f32 %v5059, %v5227
  %v5229 = vpop.f32.mrf.mxu0
  %v5230 = vadd.f32 %v5061, %v5229
  %5231 = vmatmul.bf16.gmra.mxu0 %v3637
  %v5232 = vpop.f32.mrf.mxu0
  %v5233 = vadd.f32 %v5064, %v5232
  %v5234 = vpop.f32.mrf.mxu0
  %v5235 = vadd.f32 %v5066, %v5234
  %5236 = vmatmul.bf16.gmra.mxu0 %v3638
  %v5237 = vpop.f32.mrf.mxu0
  %v5238 = vadd.f32 %v5069, %v5237
  %v5239 = vpop.f32.mrf.mxu0
  %v5240 = vadd.f32 %v5071, %v5239
  %5241 = vmatmul.bf16.gmra.mxu0 %v3639
  %v5242 = vpop.f32.mrf.mxu0
  %v5243 = vadd.f32 %v5074, %v5242
  %v5244 = vpop.f32.mrf.mxu0
  %v5245 = vadd.f32 %v5076, %v5244
  %5246 = vmatmul.bf16.gmra.mxu0 %v3640
  %v5247 = vpop.f32.mrf.mxu0
  %v5248 = vadd.f32 %v5079, %v5247
  %v5249 = vpop.f32.mrf.mxu0
  %v5250 = vadd.f32 %v5081, %v5249
  %5251 = vmatmul.bf16.gmra.mxu0 %v3641
  %v5252 = vpop.f32.mrf.mxu0
  %v5253 = vadd.f32 %v5084, %v5252
  %v5254 = vpop.f32.mrf.mxu0
  %v5255 = vadd.f32 %v5086, %v5254
  %5256 = vmatmul.bf16.gmra.mxu0 %v3642
  %v5257 = vpop.f32.mrf.mxu0
  %v5258 = vadd.f32 %v5089, %v5257
  %v5259 = vpop.f32.mrf.mxu0
  %v5260 = vadd.f32 %v5091, %v5259
  %5261 = vmatmul.bf16.gmra.mxu0 %v3643
  %v5262 = vpop.f32.mrf.mxu0
  %v5263 = vadd.f32 %v5094, %v5262
  %v5264 = vpop.f32.mrf.mxu0
  %v5265 = vadd.f32 %v5096, %v5264
  %5266 = vmatmul.bf16.gmra.mxu0 %v3644
  %v5267 = vpop.f32.mrf.mxu0
  %v5268 = vadd.f32 %v5099, %v5267
  %v5269 = vpop.f32.mrf.mxu0
  %v5270 = vadd.f32 %v5101, %v5269
  %5271 = vdwg.mxu0
  %5272 = vmatpush.bf16.msra.mxu0 %v4169
  %5273 = vmatpush.bf16.msra.mxu0 %v4168
  %5274 = vmatpush.bf16.msra.mxu0 %v4167
  %5275 = vmatpush.bf16.msra.mxu0 %v4166
  %5276 = vmatpush.bf16.msra.mxu0 %v4165
  %5277 = vmatpush.bf16.msra.mxu0 %v4164
  %5278 = vmatpush.bf16.msra.mxu0 %v4163
  %5279 = vmatpush.bf16.msra.mxu0 %v4162
  %5280 = vmatmul.bf16.gmra.mxu0 %v3468
  %v5281 = vpop.f32.mrf.mxu0
  %v5282 = vadd.f32 %v5113, %v5281
  %v5283 = vpop.f32.mrf.mxu0
  %v5284 = vadd.f32 %v5115, %v5283
  %5285 = vmatmul.bf16.gmra.mxu0 %v3469
  %v5286 = vpop.f32.mrf.mxu0
  %v5287 = vadd.f32 %v5118, %v5286
  %v5288 = vpop.f32.mrf.mxu0
  %v5289 = vadd.f32 %v5120, %v5288
  %5290 = vmatmul.bf16.gmra.mxu0 %v3470
  %v5291 = vpop.f32.mrf.mxu0
  %v5292 = vadd.f32 %v5123, %v5291
  %v5293 = vpop.f32.mrf.mxu0
  %v5294 = vadd.f32 %v5125, %v5293
  %5295 = vmatmul.bf16.gmra.mxu0 %v3471
  %v5296 = vpop.f32.mrf.mxu0
  %v5297 = vadd.f32 %v5128, %v5296
  %v5298 = vpop.f32.mrf.mxu0
  %v5299 = vadd.f32 %v5130, %v5298
  %5300 = vmatmul.bf16.gmra.mxu0 %v3472
  %v5301 = vpop.f32.mrf.mxu0
  %v5302 = vadd.f32 %v5133, %v5301
  %v5303 = vpop.f32.mrf.mxu0
  %v5304 = vadd.f32 %v5135, %v5303
  %5305 = vmatmul.bf16.gmra.mxu0 %v3473
  %v5306 = vpop.f32.mrf.mxu0
  %v5307 = vadd.f32 %v5138, %v5306
  %v5308 = vpop.f32.mrf.mxu0
  %v5309 = vadd.f32 %v5140, %v5308
  %5310 = vmatmul.bf16.gmra.mxu0 %v3474
  %v5311 = vpop.f32.mrf.mxu0
  %v5312 = vadd.f32 %v5143, %v5311
  %v5313 = vpop.f32.mrf.mxu0
  %v5314 = vadd.f32 %v5145, %v5313
  %5315 = vmatmul.bf16.gmra.mxu0 %v3475
  %v5316 = vpop.f32.mrf.mxu0
  %v5317 = vadd.f32 %v5148, %v5316
  %v5318 = vpop.f32.mrf.mxu0
  %v5319 = vadd.f32 %v5150, %v5318
  %5320 = vmatmul.bf16.gmra.mxu0 %v3476
  %v5321 = vpop.f32.mrf.mxu0
  %v5322 = vadd.f32 %v5153, %v5321
  %v5323 = vpop.f32.mrf.mxu0
  %v5324 = vadd.f32 %v5155, %v5323
  %5325 = vmatmul.bf16.gmra.mxu0 %v3477
  %v5326 = vpop.f32.mrf.mxu0
  %v5327 = vadd.f32 %v5158, %v5326
  %v5328 = vpop.f32.mrf.mxu0
  %v5329 = vadd.f32 %v5160, %v5328
  %5330 = vmatmul.bf16.gmra.mxu0 %v3478
  %v5331 = vpop.f32.mrf.mxu0
  %v5332 = vadd.f32 %v5163, %v5331
  %v5333 = vpop.f32.mrf.mxu0
  %v5334 = vadd.f32 %v5165, %v5333
  %5335 = vmatmul.bf16.gmra.mxu0 %v3479
  %v5336 = vpop.f32.mrf.mxu0
  %v5337 = vadd.f32 %v5168, %v5336
  %v5338 = vpop.f32.mrf.mxu0
  %v5339 = vadd.f32 %v5170, %v5338
  %5340 = vmatmul.bf16.gmra.mxu0 %v3480
  %v5341 = vpop.f32.mrf.mxu0
  %v5342 = vadd.f32 %v5173, %v5341
  %v5343 = vpop.f32.mrf.mxu0
  %v5344 = vadd.f32 %v5175, %v5343
  %5345 = vmatmul.bf16.gmra.mxu0 %v3481
  %v5346 = vpop.f32.mrf.mxu0
  %v5347 = vadd.f32 %v5178, %v5346
  %v5348 = vpop.f32.mrf.mxu0
  %v5349 = vadd.f32 %v5180, %v5348
  %5350 = vmatmul.bf16.gmra.mxu0 %v3482
  %v5351 = vpop.f32.mrf.mxu0
  %v5352 = vadd.f32 %v5183, %v5351
  %v5353 = vpop.f32.mrf.mxu0
  %v5354 = vadd.f32 %v5185, %v5353
  %5355 = vmatmul.bf16.gmra.mxu0 %v3483
  %v5356 = vpop.f32.mrf.mxu0
  %v5357 = vadd.f32 %v5188, %v5356
  %v5358 = vpop.f32.mrf.mxu0
  %v5359 = vadd.f32 %v5190, %v5358
  %5360 = vmatmul.bf16.gmra.mxu0 %v3486
  %v5361 = vpop.f32.mrf.mxu0
  %v5362 = vadd.f32 %v5193, %v5361
  %v5363 = vpop.f32.mrf.mxu0
  %v5364 = vadd.f32 %v5195, %v5363
  %5365 = vmatmul.bf16.gmra.mxu0 %v3487
  %v5366 = vpop.f32.mrf.mxu0
  %v5367 = vadd.f32 %v5198, %v5366
  %v5368 = vpop.f32.mrf.mxu0
  %v5369 = vadd.f32 %v5200, %v5368
  %5370 = vmatmul.bf16.gmra.mxu0 %v3488
  %v5371 = vpop.f32.mrf.mxu0
  %v5372 = vadd.f32 %v5203, %v5371
  %v5373 = vpop.f32.mrf.mxu0
  %v5374 = vadd.f32 %v5205, %v5373
  %5375 = vmatmul.bf16.gmra.mxu0 %v3489
  %v5376 = vpop.f32.mrf.mxu0
  %v5377 = vadd.f32 %v5208, %v5376
  %v5378 = vpop.f32.mrf.mxu0
  %v5379 = vadd.f32 %v5210, %v5378
  %5380 = vmatmul.bf16.gmra.mxu0 %v3490
  %v5381 = vpop.f32.mrf.mxu0
  %v5382 = vadd.f32 %v5213, %v5381
  %v5383 = vpop.f32.mrf.mxu0
  %v5384 = vadd.f32 %v5215, %v5383
  %5385 = vmatmul.bf16.gmra.mxu0 %v3491
  %v5386 = vpop.f32.mrf.mxu0
  %v5387 = vadd.f32 %v5218, %v5386
  %v5388 = vpop.f32.mrf.mxu0
  %v5389 = vadd.f32 %v5220, %v5388
  %5390 = vmatmul.bf16.gmra.mxu0 %v3492
  %v5391 = vpop.f32.mrf.mxu0
  %v5392 = vadd.f32 %v5223, %v5391
  %v5393 = vpop.f32.mrf.mxu0
  %v5394 = vadd.f32 %v5225, %v5393
  %5395 = vmatmul.bf16.gmra.mxu0 %v3493
  %v5396 = vpop.f32.mrf.mxu0
  %v5397 = vadd.f32 %v5228, %v5396
  %v5398 = vpop.f32.mrf.mxu0
  %v5399 = vadd.f32 %v5230, %v5398
  %5400 = vmatmul.bf16.gmra.mxu0 %v3494
  %v5401 = vpop.f32.mrf.mxu0
  %v5402 = vadd.f32 %v5233, %v5401
  %v5403 = vpop.f32.mrf.mxu0
  %v5404 = vadd.f32 %v5235, %v5403
  %5405 = vmatmul.bf16.gmra.mxu0 %v3495
  %v5406 = vpop.f32.mrf.mxu0
  %v5407 = vadd.f32 %v5238, %v5406
  %v5408 = vpop.f32.mrf.mxu0
  %v5409 = vadd.f32 %v5240, %v5408
  %5410 = vmatmul.bf16.gmra.mxu0 %v3496
  %v5411 = vpop.f32.mrf.mxu0
  %v5412 = vadd.f32 %v5243, %v5411
  %v5413 = vpop.f32.mrf.mxu0
  %v5414 = vadd.f32 %v5245, %v5413
  %5415 = vmatmul.bf16.gmra.mxu0 %v3497
  %v5416 = vpop.f32.mrf.mxu0
  %v5417 = vadd.f32 %v5248, %v5416
  %v5418 = vpop.f32.mrf.mxu0
  %v5419 = vadd.f32 %v5250, %v5418
  %5420 = vmatmul.bf16.gmra.mxu0 %v3498
  %v5421 = vpop.f32.mrf.mxu0
  %v5422 = vadd.f32 %v5253, %v5421
  %v5423 = vpop.f32.mrf.mxu0
  %v5424 = vadd.f32 %v5255, %v5423
  %5425 = vmatmul.bf16.gmra.mxu0 %v3499
  %v5426 = vpop.f32.mrf.mxu0
  %v5427 = vadd.f32 %v5258, %v5426
  %v5428 = vpop.f32.mrf.mxu0
  %v5429 = vadd.f32 %v5260, %v5428
  %5430 = vmatmul.bf16.gmra.mxu0 %v3500
  %v5431 = vpop.f32.mrf.mxu0
  %v5432 = vadd.f32 %v5263, %v5431
  %v5433 = vpop.f32.mrf.mxu0
  %v5434 = vadd.f32 %v5265, %v5433
  %5435 = vmatmul.bf16.gmra.mxu0 %v3501
  %v5436 = vpop.f32.mrf.mxu0
  %v5437 = vadd.f32 %v5268, %v5436
  %v5438 = vpop.f32.mrf.mxu0
  %v5439 = vadd.f32 %v5270, %v5438
  %5440 = vdwg.mxu0
  %5441 = vmatpush.bf16.msra.mxu0 %v4177
  %5442 = vmatpush.bf16.msra.mxu0 %v4176
  %5443 = vmatpush.bf16.msra.mxu0 %v4175
  %5444 = vmatpush.bf16.msra.mxu0 %v4174
  %5445 = vmatpush.bf16.msra.mxu0 %v4173
  %5446 = vmatpush.bf16.msra.mxu0 %v4172
  %5447 = vmatpush.bf16.msra.mxu0 %v4171
  %5448 = vmatpush.bf16.msra.mxu0 %v4170
  %5449 = vmatmul.bf16.gmra.mxu0 %v3144
  %v5450 = vpop.f32.mrf.mxu0
  %v5451 = vadd.f32 %v5282, %v5450
  %v5452 = vpop.f32.mrf.mxu0
  %v5453 = vadd.f32 %v5284, %v5452
  %5454 = vmatmul.bf16.gmra.mxu0 %v3145
  %v5455 = vpop.f32.mrf.mxu0
  %v5456 = vadd.f32 %v5287, %v5455
  %v5457 = vpop.f32.mrf.mxu0
  %v5458 = vadd.f32 %v5289, %v5457
  %5459 = vmatmul.bf16.gmra.mxu0 %v3146
  %v5460 = vpop.f32.mrf.mxu0
  %v5461 = vadd.f32 %v5292, %v5460
  %v5462 = vpop.f32.mrf.mxu0
  %v5463 = vadd.f32 %v5294, %v5462
  %5464 = vmatmul.bf16.gmra.mxu0 %v3147
  %v5465 = vpop.f32.mrf.mxu0
  %v5466 = vadd.f32 %v5297, %v5465
  %v5467 = vpop.f32.mrf.mxu0
  %v5468 = vadd.f32 %v5299, %v5467
  %5469 = vmatmul.bf16.gmra.mxu0 %v3148
  %v5470 = vpop.f32.mrf.mxu0
  %v5471 = vadd.f32 %v5302, %v5470
  %v5472 = vpop.f32.mrf.mxu0
  %v5473 = vadd.f32 %v5304, %v5472
  %5474 = vmatmul.bf16.gmra.mxu0 %v3149
  %v5475 = vpop.f32.mrf.mxu0
  %v5476 = vadd.f32 %v5307, %v5475
  %v5477 = vpop.f32.mrf.mxu0
  %v5478 = vadd.f32 %v5309, %v5477
  %5479 = vmatmul.bf16.gmra.mxu0 %v3150
  %v5480 = vpop.f32.mrf.mxu0
  %v5481 = vadd.f32 %v5312, %v5480
  %v5482 = vpop.f32.mrf.mxu0
  %v5483 = vadd.f32 %v5314, %v5482
  %5484 = vmatmul.bf16.gmra.mxu0 %v3151
  %v5485 = vpop.f32.mrf.mxu0
  %v5486 = vadd.f32 %v5317, %v5485
  %v5487 = vpop.f32.mrf.mxu0
  %v5488 = vadd.f32 %v5319, %v5487
  %5489 = vmatmul.bf16.gmra.mxu0 %v3152
  %v5490 = vpop.f32.mrf.mxu0
  %v5491 = vadd.f32 %v5322, %v5490
  %v5492 = vpop.f32.mrf.mxu0
  %v5493 = vadd.f32 %v5324, %v5492
  %5494 = vmatmul.bf16.gmra.mxu0 %v3153
  %v5495 = vpop.f32.mrf.mxu0
  %v5496 = vadd.f32 %v5327, %v5495
  %v5497 = vpop.f32.mrf.mxu0
  %v5498 = vadd.f32 %v5329, %v5497
  %5499 = vmatmul.bf16.gmra.mxu0 %v3154
  %v5500 = vpop.f32.mrf.mxu0
  %v5501 = vadd.f32 %v5332, %v5500
  %v5502 = vpop.f32.mrf.mxu0
  %v5503 = vadd.f32 %v5334, %v5502
  %5504 = vmatmul.bf16.gmra.mxu0 %v3155
  %v5505 = vpop.f32.mrf.mxu0
  %v5506 = vadd.f32 %v5337, %v5505
  %v5507 = vpop.f32.mrf.mxu0
  %v5508 = vadd.f32 %v5339, %v5507
  %5509 = vmatmul.bf16.gmra.mxu0 %v3156
  %v5510 = vpop.f32.mrf.mxu0
  %v5511 = vadd.f32 %v5342, %v5510
  %v5512 = vpop.f32.mrf.mxu0
  %v5513 = vadd.f32 %v5344, %v5512
  %5514 = vmatmul.bf16.gmra.mxu0 %v3157
  %v5515 = vpop.f32.mrf.mxu0
  %v5516 = vadd.f32 %v5347, %v5515
  %v5517 = vpop.f32.mrf.mxu0
  %v5518 = vadd.f32 %v5349, %v5517
  %5519 = vmatmul.bf16.gmra.mxu0 %v3158
  %v5520 = vpop.f32.mrf.mxu0
  %v5521 = vadd.f32 %v5352, %v5520
  %v5522 = vpop.f32.mrf.mxu0
  %v5523 = vadd.f32 %v5354, %v5522
  %5524 = vmatmul.bf16.gmra.mxu0 %v3159
  %v5525 = vpop.f32.mrf.mxu0
  %v5526 = vadd.f32 %v5357, %v5525
  %v5527 = vpop.f32.mrf.mxu0
  %v5528 = vadd.f32 %v5359, %v5527
  %5529 = vmatmul.bf16.gmra.mxu0 %v3162
  %v5530 = vpop.f32.mrf.mxu0
  %v5531 = vadd.f32 %v5362, %v5530
  %v5532 = vpop.f32.mrf.mxu0
  %v5533 = vadd.f32 %v5364, %v5532
  %5534 = vmatmul.bf16.gmra.mxu0 %v3163
  %v5535 = vpop.f32.mrf.mxu0
  %v5536 = vadd.f32 %v5367, %v5535
  %v5537 = vpop.f32.mrf.mxu0
  %v5538 = vadd.f32 %v5369, %v5537
  %5539 = vmatmul.bf16.gmra.mxu0 %v3164
  %v5540 = vpop.f32.mrf.mxu0
  %v5541 = vadd.f32 %v5372, %v5540
  %v5542 = vpop.f32.mrf.mxu0
  %v5543 = vadd.f32 %v5374, %v5542
  %5544 = vmatmul.bf16.gmra.mxu0 %v3165
  %v5545 = vpop.f32.mrf.mxu0
  %v5546 = vadd.f32 %v5377, %v5545
  %v5547 = vpop.f32.mrf.mxu0
  %v5548 = vadd.f32 %v5379, %v5547
  %5549 = vmatmul.bf16.gmra.mxu0 %v3166
  %v5550 = vpop.f32.mrf.mxu0
  %v5551 = vadd.f32 %v5382, %v5550
  %v5552 = vpop.f32.mrf.mxu0
  %v5553 = vadd.f32 %v5384, %v5552
  %5554 = vmatmul.bf16.gmra.mxu0 %v3167
  %v5555 = vpop.f32.mrf.mxu0
  %v5556 = vadd.f32 %v5387, %v5555
  %v5557 = vpop.f32.mrf.mxu0
  %v5558 = vadd.f32 %v5389, %v5557
  %5559 = vmatmul.bf16.gmra.mxu0 %v3168
  %v5560 = vpop.f32.mrf.mxu0
  %v5561 = vadd.f32 %v5392, %v5560
  %v5562 = vpop.f32.mrf.mxu0
  %v5563 = vadd.f32 %v5394, %v5562
  %5564 = vmatmul.bf16.gmra.mxu0 %v3169
  %v5565 = vpop.f32.mrf.mxu0
  %v5566 = vadd.f32 %v5397, %v5565
  %v5567 = vpop.f32.mrf.mxu0
  %v5568 = vadd.f32 %v5399, %v5567
  %5569 = vmatmul.bf16.gmra.mxu0 %v3170
  %v5570 = vpop.f32.mrf.mxu0
  %v5571 = vadd.f32 %v5402, %v5570
  %v5572 = vpop.f32.mrf.mxu0
  %v5573 = vadd.f32 %v5404, %v5572
  %5574 = vmatmul.bf16.gmra.mxu0 %v3171
  %v5575 = vpop.f32.mrf.mxu0
  %v5576 = vadd.f32 %v5407, %v5575
  %v5577 = vpop.f32.mrf.mxu0
  %v5578 = vadd.f32 %v5409, %v5577
  %5579 = vmatmul.bf16.gmra.mxu0 %v3172
  %v5580 = vpop.f32.mrf.mxu0
  %v5581 = vadd.f32 %v5412, %v5580
  %v5582 = vpop.f32.mrf.mxu0
  %v5583 = vadd.f32 %v5414, %v5582
  %5584 = vmatmul.bf16.gmra.mxu0 %v3173
  %v5585 = vpop.f32.mrf.mxu0
  %v5586 = vadd.f32 %v5417, %v5585
  %v5587 = vpop.f32.mrf.mxu0
  %v5588 = vadd.f32 %v5419, %v5587
  %5589 = vmatmul.bf16.gmra.mxu0 %v3174
  %v5590 = vpop.f32.mrf.mxu0
  %v5591 = vadd.f32 %v5422, %v5590
  %v5592 = vpop.f32.mrf.mxu0
  %v5593 = vadd.f32 %v5424, %v5592
  %5594 = vmatmul.bf16.gmra.mxu0 %v3175
  %v5595 = vpop.f32.mrf.mxu0
  %v5596 = vadd.f32 %v5427, %v5595
  %v5597 = vpop.f32.mrf.mxu0
  %v5598 = vadd.f32 %v5429, %v5597
  %5599 = vmatmul.bf16.gmra.mxu0 %v3176
  %v5600 = vpop.f32.mrf.mxu0
  %v5601 = vadd.f32 %v5432, %v5600
  %v5602 = vpop.f32.mrf.mxu0
  %v5603 = vadd.f32 %v5434, %v5602
  %5604 = vmatmul.bf16.gmra.mxu0 %v3177
  %v5605 = vpop.f32.mrf.mxu0
  %v5606 = vadd.f32 %v5437, %v5605
  %v5607 = vpop.f32.mrf.mxu0
  %v5608 = vadd.f32 %v5439, %v5607
  %5609 = vdwg.mxu0
  %5610 = vmatpush.bf16.msra.mxu0 %v4185
  %5611 = vmatpush.bf16.msra.mxu0 %v4184
  %5612 = vmatpush.bf16.msra.mxu0 %v4183
  %5613 = vmatpush.bf16.msra.mxu0 %v4182
  %5614 = vmatpush.bf16.msra.mxu0 %v4181
  %5615 = vmatpush.bf16.msra.mxu0 %v4180
  %5616 = vmatpush.bf16.msra.mxu0 %v4179
  %5617 = vmatpush.bf16.msra.mxu0 %v4178
  %5618 = vmatmul.bf16.gmra.mxu0 %v3612
  %v5619 = vpop.f32.mrf.mxu0
  %v5620 = vadd.f32 %v5451, %v5619
  %v5621 = vpop.f32.mrf.mxu0
  %v5622 = vadd.f32 %v5453, %v5621
  %5623 = vmatmul.bf16.gmra.mxu0 %v3613
  %v5624 = vpop.f32.mrf.mxu0
  %v5625 = vadd.f32 %v5456, %v5624
  %v5626 = vpop.f32.mrf.mxu0
  %v5627 = vadd.f32 %v5458, %v5626
  %5628 = vmatmul.bf16.gmra.mxu0 %v3614
  %v5629 = vpop.f32.mrf.mxu0
  %v5630 = vadd.f32 %v5461, %v5629
  %v5631 = vpop.f32.mrf.mxu0
  %v5632 = vadd.f32 %v5463, %v5631
  %5633 = vmatmul.bf16.gmra.mxu0 %v3615
  %v5634 = vpop.f32.mrf.mxu0
  %v5635 = vadd.f32 %v5466, %v5634
  %v5636 = vpop.f32.mrf.mxu0
  %v5637 = vadd.f32 %v5468, %v5636
  %5638 = vmatmul.bf16.gmra.mxu0 %v3616
  %v5639 = vpop.f32.mrf.mxu0
  %v5640 = vadd.f32 %v5471, %v5639
  %v5641 = vpop.f32.mrf.mxu0
  %v5642 = vadd.f32 %v5473, %v5641
  %5643 = vmatmul.bf16.gmra.mxu0 %v3617
  %v5644 = vpop.f32.mrf.mxu0
  %v5645 = vadd.f32 %v5476, %v5644
  %v5646 = vpop.f32.mrf.mxu0
  %v5647 = vadd.f32 %v5478, %v5646
  %5648 = vmatmul.bf16.gmra.mxu0 %v3618
  %v5649 = vpop.f32.mrf.mxu0
  %v5650 = vadd.f32 %v5481, %v5649
  %v5651 = vpop.f32.mrf.mxu0
  %v5652 = vadd.f32 %v5483, %v5651
  %5653 = vmatmul.bf16.gmra.mxu0 %v3619
  %v5654 = vpop.f32.mrf.mxu0
  %v5655 = vadd.f32 %v5486, %v5654
  %v5656 = vpop.f32.mrf.mxu0
  %v5657 = vadd.f32 %v5488, %v5656
  %5658 = vmatmul.bf16.gmra.mxu0 %v3620
  %v5659 = vpop.f32.mrf.mxu0
  %v5660 = vadd.f32 %v5491, %v5659
  %v5661 = vpop.f32.mrf.mxu0
  %v5662 = vadd.f32 %v5493, %v5661
  %5663 = vmatmul.bf16.gmra.mxu0 %v3621
  %v5664 = vpop.f32.mrf.mxu0
  %v5665 = vadd.f32 %v5496, %v5664
  %v5666 = vpop.f32.mrf.mxu0
  %v5667 = vadd.f32 %v5498, %v5666
  %5668 = vmatmul.bf16.gmra.mxu0 %v3622
  %v5669 = vpop.f32.mrf.mxu0
  %v5670 = vadd.f32 %v5501, %v5669
  %v5671 = vpop.f32.mrf.mxu0
  %v5672 = vadd.f32 %v5503, %v5671
  %5673 = vmatmul.bf16.gmra.mxu0 %v3623
  %v5674 = vpop.f32.mrf.mxu0
  %v5675 = vadd.f32 %v5506, %v5674
  %v5676 = vpop.f32.mrf.mxu0
  %v5677 = vadd.f32 %v5508, %v5676
  %5678 = vmatmul.bf16.gmra.mxu0 %v3624
  %v5679 = vpop.f32.mrf.mxu0
  %v5680 = vadd.f32 %v5511, %v5679
  %v5681 = vpop.f32.mrf.mxu0
  %v5682 = vadd.f32 %v5513, %v5681
  %5683 = vmatmul.bf16.gmra.mxu0 %v3625
  %v5684 = vpop.f32.mrf.mxu0
  %v5685 = vadd.f32 %v5516, %v5684
  %v5686 = vpop.f32.mrf.mxu0
  %v5687 = vadd.f32 %v5518, %v5686
  %5688 = vmatmul.bf16.gmra.mxu0 %v3626
  %v5689 = vpop.f32.mrf.mxu0
  %v5690 = vadd.f32 %v5521, %v5689
  %v5691 = vpop.f32.mrf.mxu0
  %v5692 = vadd.f32 %v5523, %v5691
  %5693 = vmatmul.bf16.gmra.mxu0 %v3627
  %v5694 = vpop.f32.mrf.mxu0
  %v5695 = vadd.f32 %v5526, %v5694
  %v5696 = vpop.f32.mrf.mxu0
  %v5697 = vadd.f32 %v5528, %v5696
  %5698 = vmatmul.bf16.gmra.mxu0 %v3630
  %v5699 = vpop.f32.mrf.mxu0
  %v5700 = vadd.f32 %v5531, %v5699
  %v5701 = vpop.f32.mrf.mxu0
  %v5702 = vadd.f32 %v5533, %v5701
  %5703 = vmatmul.bf16.gmra.mxu0 %v3631
  %v5704 = vpop.f32.mrf.mxu0
  %v5705 = vadd.f32 %v5536, %v5704
  %v5706 = vpop.f32.mrf.mxu0
  %v5707 = vadd.f32 %v5538, %v5706
  %5708 = vmatmul.bf16.gmra.mxu0 %v3632
  %v5709 = vpop.f32.mrf.mxu0
  %v5710 = vadd.f32 %v5541, %v5709
  %v5711 = vpop.f32.mrf.mxu0
  %v5712 = vadd.f32 %v5543, %v5711
  %5713 = vmatmul.bf16.gmra.mxu0 %v3633
  %v5714 = vpop.f32.mrf.mxu0
  %v5715 = vadd.f32 %v5546, %v5714
  %v5716 = vpop.f32.mrf.mxu0
  %v5717 = vadd.f32 %v5548, %v5716
  %5718 = vmatmul.bf16.gmra.mxu0 %v3634
  %v5719 = vpop.f32.mrf.mxu0
  %v5720 = vadd.f32 %v5551, %v5719
  %v5721 = vpop.f32.mrf.mxu0
  %v5722 = vadd.f32 %v5553, %v5721
  %5723 = vmatmul.bf16.gmra.mxu0 %v3635
  %v5724 = vpop.f32.mrf.mxu0
  %v5725 = vadd.f32 %v5556, %v5724
  %v5726 = vpop.f32.mrf.mxu0
  %v5727 = vadd.f32 %v5558, %v5726
  %5728 = vmatmul.bf16.gmra.mxu0 %v3636
  %v5729 = vpop.f32.mrf.mxu0
  %v5730 = vadd.f32 %v5561, %v5729
  %v5731 = vpop.f32.mrf.mxu0
  %v5732 = vadd.f32 %v5563, %v5731
  %5733 = vmatmul.bf16.gmra.mxu0 %v3637
  %v5734 = vpop.f32.mrf.mxu0
  %v5735 = vadd.f32 %v5566, %v5734
  %v5736 = vpop.f32.mrf.mxu0
  %v5737 = vadd.f32 %v5568, %v5736
  %5738 = vmatmul.bf16.gmra.mxu0 %v3638
  %v5739 = vpop.f32.mrf.mxu0
  %v5740 = vadd.f32 %v5571, %v5739
  %v5741 = vpop.f32.mrf.mxu0
  %v5742 = vadd.f32 %v5573, %v5741
  %5743 = vmatmul.bf16.gmra.mxu0 %v3639
  %v5744 = vpop.f32.mrf.mxu0
  %v5745 = vadd.f32 %v5576, %v5744
  %v5746 = vpop.f32.mrf.mxu0
  %v5747 = vadd.f32 %v5578, %v5746
  %5748 = vmatmul.bf16.gmra.mxu0 %v3640
  %v5749 = vpop.f32.mrf.mxu0
  %v5750 = vadd.f32 %v5581, %v5749
  %v5751 = vpop.f32.mrf.mxu0
  %v5752 = vadd.f32 %v5583, %v5751
  %5753 = vmatmul.bf16.gmra.mxu0 %v3641
  %v5754 = vpop.f32.mrf.mxu0
  %v5755 = vadd.f32 %v5586, %v5754
  %v5756 = vpop.f32.mrf.mxu0
  %v5757 = vadd.f32 %v5588, %v5756
  %5758 = vmatmul.bf16.gmra.mxu0 %v3642
  %v5759 = vpop.f32.mrf.mxu0
  %v5760 = vadd.f32 %v5591, %v5759
  %v5761 = vpop.f32.mrf.mxu0
  %v5762 = vadd.f32 %v5593, %v5761
  %5763 = vmatmul.bf16.gmra.mxu0 %v3643
  %v5764 = vpop.f32.mrf.mxu0
  %v5765 = vadd.f32 %v5596, %v5764
  %v5766 = vpop.f32.mrf.mxu0
  %v5767 = vadd.f32 %v5598, %v5766
  %5768 = vmatmul.bf16.gmra.mxu0 %v3644
  %v5769 = vpop.f32.mrf.mxu0
  %v5770 = vadd.f32 %v5601, %v5769
  %v5771 = vpop.f32.mrf.mxu0
  %v5772 = vadd.f32 %v5603, %v5771
  %5773 = vmatmul.bf16.gmra.mxu0 %v3645
  %v5774 = vpop.f32.mrf.mxu0
  %v5775 = vadd.f32 %v5606, %v5774
  %v5776 = vpop.f32.mrf.mxu0
  %v5777 = vadd.f32 %v5608, %v5776
  %5778 = vdwg.mxu0
  %v5779 = vld [vmem:[%s5] sm:$0x1]
  %v5780 = vld [vmem:[%s6] sm:$0x1]
  %v5781 = vadd.f32 %v5620, %v5622
  %v5782 = vadd.f32 %v5781, %v5625
  %v5783 = vadd.f32 %v5782, %v5627
  %v5784 = vadd.f32 %v5783, %v5630
  %v5785 = vadd.f32 %v5784, %v5632
  %v5786 = vadd.f32 %v5785, %v5635
  %v5787 = vadd.f32 %v5786, %v5637
  %v5788 = vadd.f32 %v5787, %v5640
  %v5789 = vadd.f32 %v5788, %v5642
  %v5790 = vadd.f32 %v5789, %v5645
  %v5791 = vadd.f32 %v5790, %v5647
  %v5792 = vadd.f32 %v5791, %v5650
  %v5793 = vadd.f32 %v5792, %v5652
  %v5794 = vadd.f32 %v5793, %v5655
  %v5795 = vadd.f32 %v5794, %v5657
  %v5796 = vadd.f32 %v5795, %v5660
  %v5797 = vadd.f32 %v5796, %v5662
  %v5798 = vadd.f32 %v5797, %v5665
  %v5799 = vadd.f32 %v5798, %v5667
  %v5800 = vadd.f32 %v5799, %v5670
  %v5801 = vadd.f32 %v5800, %v5672
  %v5802 = vadd.f32 %v5801, %v5675
  %v5803 = vadd.f32 %v5802, %v5677
  %v5804 = vadd.f32 %v5803, %v5680
  %v5805 = vadd.f32 %v5804, %v5682
  %v5806 = vadd.f32 %v5805, %v5685
  %v5807 = vadd.f32 %v5806, %v5687
  %v5808 = vadd.f32 %v5807, %v5690
  %v5809 = vadd.f32 %v5808, %v5692
  %v5810 = vadd.f32 %v5809, %v5695
  %v5811 = vadd.f32 %v5810, %v5697
  %v5812 = vadd.f32 %v5811, %v5700
  %v5813 = vadd.f32 %v5812, %v5702
  %v5814 = vadd.f32 %v5813, %v5705
  %v5815 = vadd.f32 %v5814, %v5707
  %v5816 = vadd.f32 %v5815, %v5710
  %v5817 = vadd.f32 %v5816, %v5712
  %v5818 = vadd.f32 %v5817, %v5715
  %v5819 = vadd.f32 %v5818, %v5717
  %v5820 = vadd.f32 %v5819, %v5720
  %v5821 = vadd.f32 %v5820, %v5722
  %v5822 = vadd.f32 %v5821, %v5725
  %v5823 = vadd.f32 %v5822, %v5727
  %v5824 = vadd.f32 %v5823, %v5730
  %v5825 = vadd.f32 %v5824, %v5732
  %v5826 = vadd.f32 %v5825, %v5735
  %v5827 = vadd.f32 %v5826, %v5737
  %v5828 = vadd.f32 %v5827, %v5740
  %v5829 = vadd.f32 %v5828, %v5742
  %v5830 = vadd.f32 %v5829, %v5745
  %v5831 = vadd.f32 %v5830, %v5747
  %v5832 = vadd.f32 %v5831, %v5750
  %v5833 = vadd.f32 %v5832, %v5752
  %v5834 = vadd.f32 %v5833, %v5755
  %v5835 = vadd.f32 %v5834, %v5757
  %v5836 = vadd.f32 %v5835, %v5760
  %v5837 = vadd.f32 %v5836, %v5762
  %v5838 = vadd.f32 %v5837, %v5765
  %v5839 = vadd.f32 %v5838, %v5767
  %v5840 = vadd.f32 %v5839, %v5770
  %v5841 = vadd.f32 %v5840, %v5772
  %v5842 = vadd.f32 %v5841, %v5775
  %v5843 = vadd.f32 %v5842, %v5777
  %v5844 = vrot.slane %v5843, 4
  %v5845 = vadd.f32 %v5843, %v5844
  %v5846 = vrot.slane %v5845, 2
  %v5847 = vadd.f32 %v5845, %v5846
  %v5848 = vrot.slane %v5847, 1
  %v5849 = vadd.f32 %v5847, %v5848
  %v5850 = vmul.f32 %v5620, %v5620
  %v5851 = vmul.f32 %v5622, %v5622
  %v5852 = vmul.f32 %v5625, %v5625
  %v5853 = vmul.f32 %v5627, %v5627
  %v5854 = vmul.f32 %v5630, %v5630
  %v5855 = vmul.f32 %v5632, %v5632
  %v5856 = vmul.f32 %v5635, %v5635
  %v5857 = vmul.f32 %v5637, %v5637
  %v5858 = vmul.f32 %v5640, %v5640
  %v5859 = vmul.f32 %v5642, %v5642
  %v5860 = vmul.f32 %v5645, %v5645
  %v5861 = vmul.f32 %v5647, %v5647
  %v5862 = vmul.f32 %v5650, %v5650
  %v5863 = vmul.f32 %v5652, %v5652
  %v5864 = vmul.f32 %v5655, %v5655
  %v5865 = vmul.f32 %v5657, %v5657
  %v5866 = vmul.f32 %v5660, %v5660
  %v5867 = vmul.f32 %v5662, %v5662
  %v5868 = vmul.f32 %v5665, %v5665
  %v5869 = vmul.f32 %v5667, %v5667
  %v5870 = vmul.f32 %v5670, %v5670
  %v5871 = vmul.f32 %v5672, %v5672
  %v5872 = vmul.f32 %v5675, %v5675
  %v5873 = vmul.f32 %v5677, %v5677
  %v5874 = vmul.f32 %v5680, %v5680
  %v5875 = vmul.f32 %v5682, %v5682
  %v5876 = vmul.f32 %v5685, %v5685
  %v5877 = vmul.f32 %v5687, %v5687
  %v5878 = vmul.f32 %v5690, %v5690
  %v5879 = vmul.f32 %v5692, %v5692
  %v5880 = vmul.f32 %v5695, %v5695
  %v5881 = vmul.f32 %v5697, %v5697
  %v5882 = vmul.f32 %v5700, %v5700
  %v5883 = vmul.f32 %v5702, %v5702
  %v5884 = vmul.f32 %v5705, %v5705
  %v5885 = vmul.f32 %v5707, %v5707
  %v5886 = vmul.f32 %v5710, %v5710
  %v5887 = vmul.f32 %v5712, %v5712
  %v5888 = vmul.f32 %v5715, %v5715
  %v5889 = vmul.f32 %v5717, %v5717
  %v5890 = vmul.f32 %v5720, %v5720
  %v5891 = vmul.f32 %v5722, %v5722
  %v5892 = vmul.f32 %v5725, %v5725
  %v5893 = vmul.f32 %v5727, %v5727
  %v5894 = vmul.f32 %v5730, %v5730
  %v5895 = vmul.f32 %v5732, %v5732
  %v5896 = vmul.f32 %v5735, %v5735
  %v5897 = vmul.f32 %v5737, %v5737
  %v5898 = vmul.f32 %v5740, %v5740
  %v5899 = vmul.f32 %v5742, %v5742
  %v5900 = vmul.f32 %v5745, %v5745
  %v5901 = vmul.f32 %v5747, %v5747
  %v5902 = vmul.f32 %v5750, %v5750
  %v5903 = vmul.f32 %v5752, %v5752
  %v5904 = vmul.f32 %v5755, %v5755
  %v5905 = vmul.f32 %v5757, %v5757
  %v5906 = vmul.f32 %v5760, %v5760
  %v5907 = vmul.f32 %v5762, %v5762
  %v5908 = vmul.f32 %v5765, %v5765
  %v5909 = vmul.f32 %v5767, %v5767
  %v5910 = vmul.f32 %v5770, %v5770
  %v5911 = vmul.f32 %v5772, %v5772
  %v5912 = vmul.f32 %v5775, %v5775
  %v5913 = vmul.f32 %v5777, %v5777
  %v5914 = vadd.f32 %v5850, %v5851
  %v5915 = vadd.f32 %v5914, %v5852
  %v5916 = vadd.f32 %v5915, %v5853
  %v5917 = vadd.f32 %v5916, %v5854
  %v5918 = vadd.f32 %v5917, %v5855
  %v5919 = vadd.f32 %v5918, %v5856
  %v5920 = vadd.f32 %v5919, %v5857
  %v5921 = vadd.f32 %v5920, %v5858
  %v5922 = vadd.f32 %v5921, %v5859
  %v5923 = vadd.f32 %v5922, %v5860
  %v5924 = vadd.f32 %v5923, %v5861
  %v5925 = vadd.f32 %v5924, %v5862
  %v5926 = vadd.f32 %v5925, %v5863
  %v5927 = vadd.f32 %v5926, %v5864
  %v5928 = vadd.f32 %v5927, %v5865
  %v5929 = vadd.f32 %v5928, %v5866
  %v5930 = vadd.f32 %v5929, %v5867
  %v5931 = vadd.f32 %v5930, %v5868
  %v5932 = vadd.f32 %v5931, %v5869
  %v5933 = vadd.f32 %v5932, %v5870
  %v5934 = vadd.f32 %v5933, %v5871
  %v5935 = vadd.f32 %v5934, %v5872
  %v5936 = vadd.f32 %v5935, %v5873
  %v5937 = vadd.f32 %v5936, %v5874
  %v5938 = vadd.f32 %v5937, %v5875
  %v5939 = vadd.f32 %v5938, %v5876
  %v5940 = vadd.f32 %v5939, %v5877
  %v5941 = vadd.f32 %v5940, %v5878
  %v5942 = vadd.f32 %v5941, %v5879
  %v5943 = vadd.f32 %v5942, %v5880
  %v5944 = vadd.f32 %v5943, %v5881
  %v5945 = vadd.f32 %v5944, %v5882
  %v5946 = vadd.f32 %v5945, %v5883
  %v5947 = vadd.f32 %v5946, %v5884
  %v5948 = vadd.f32 %v5947, %v5885
  %v5949 = vadd.f32 %v5948, %v5886
  %v5950 = vadd.f32 %v5949, %v5887
  %v5951 = vadd.f32 %v5950, %v5888
  %v5952 = vadd.f32 %v5951, %v5889
  %v5953 = vadd.f32 %v5952, %v5890
  %v5954 = vadd.f32 %v5953, %v5891
  %v5955 = vadd.f32 %v5954, %v5892
  %v5956 = vadd.f32 %v5955, %v5893
  %v5957 = vadd.f32 %v5956, %v5894
  %v5958 = vadd.f32 %v5957, %v5895
  %v5959 = vadd.f32 %v5958, %v5896
  %v5960 = vadd.f32 %v5959, %v5897
  %v5961 = vadd.f32 %v5960, %v5898
  %v5962 = vadd.f32 %v5961, %v5899
  %v5963 = vadd.f32 %v5962, %v5900
  %v5964 = vadd.f32 %v5963, %v5901
  %v5965 = vadd.f32 %v5964, %v5902
  %v5966 = vadd.f32 %v5965, %v5903
  %v5967 = vadd.f32 %v5966, %v5904
  %v5968 = vadd.f32 %v5967, %v5905
  %v5969 = vadd.f32 %v5968, %v5906
  %v5970 = vadd.f32 %v5969, %v5907
  %v5971 = vadd.f32 %v5970, %v5908
  %v5972 = vadd.f32 %v5971, %v5909
  %v5973 = vadd.f32 %v5972, %v5910
  %v5974 = vadd.f32 %v5973, %v5911
  %v5975 = vadd.f32 %v5974, %v5912
  %v5976 = vadd.f32 %v5975, %v5913
  %v5977 = vrot.slane %v5976, 4
  %v5978 = vadd.f32 %v5976, %v5977
  %v5979 = vrot.slane %v5978, 2
  %v5980 = vadd.f32 %v5978, %v5979
  %v5981 = vrot.slane %v5980, 1
  %v5982 = vadd.f32 %v5980, %v5981
  %v5983 = vmul.f32 %v5849, 0.001953125
  %v5984 = vmul.f32 %v5982, 0.001953125
  %v5985 = vmul.f32 %v5983, %v5983
  %v5986 = vsub.f32 %v5984, %v5985
  %v5987 = vadd.f32 %v5986, 1e-05
  %v5988 = vrsqrt.pop %v5987
  %v5989 = vmul.f32 %v5988, %v5987
  %v5990 = vmul.f32 %v5989, %v5988
  %v5991 = vmul.f32 0.5, %v5990
  %v5992 = vsub.f32 1.5, %v5991
  %v5993 = vmul.f32 %v5988, %v5992
  %vm5994 = vweird.f32 %v5987
  %vm5995 = vweird.f32 %v5988
  %vm5996 = vmor %vm5994, %vm5995
  %v5997 = vsel %vm5996, %v5988, %v5993
  %v5998 = vmul.f32 %v5779, %v5997
  %v5999 = vmul.f32 %v5983, %v5998
  %v6000 = vsub.f32 %v5780, %v5999
  %v6002 = vperm.slane %v5998, 0
  %v6004 = vmul.f32 %v5620, %v6002
  %v6005 = vmul.f32 %v5622, %v6002
  %v6006 = vmul.f32 %v5625, %v6002
  %v6007 = vmul.f32 %v5627, %v6002
  %v6008 = vmul.f32 %v5630, %v6002
  %v6009 = vmul.f32 %v5632, %v6002
  %v6010 = vmul.f32 %v5635, %v6002
  %v6011 = vmul.f32 %v5637, %v6002
  %v6012 = vmul.f32 %v5640, %v6002
  %v6013 = vmul.f32 %v5642, %v6002
  %v6014 = vmul.f32 %v5645, %v6002
  %v6015 = vmul.f32 %v5647, %v6002
  %v6016 = vmul.f32 %v5650, %v6002
  %v6017 = vmul.f32 %v5652, %v6002
  %v6018 = vmul.f32 %v5655, %v6002
  %v6019 = vmul.f32 %v5657, %v6002
  %v6020 = vmul.f32 %v5660, %v6002
  %v6021 = vmul.f32 %v5662, %v6002
  %v6022 = vmul.f32 %v5665, %v6002
  %v6023 = vmul.f32 %v5667, %v6002
  %v6024 = vmul.f32 %v5670, %v6002
  %v6025 = vmul.f32 %v5672, %v6002
  %v6026 = vmul.f32 %v5675, %v6002
  %v6027 = vmul.f32 %v5677, %v6002
  %v6028 = vmul.f32 %v5680, %v6002
  %v6029 = vmul.f32 %v5682, %v6002
  %v6030 = vmul.f32 %v5685, %v6002
  %v6031 = vmul.f32 %v5687, %v6002
  %v6032 = vmul.f32 %v5690, %v6002
  %v6033 = vmul.f32 %v5692, %v6002
  %v6034 = vmul.f32 %v5695, %v6002
  %v6035 = vmul.f32 %v5697, %v6002
  %v6036 = vmul.f32 %v5700, %v6002
  %v6037 = vmul.f32 %v5702, %v6002
  %v6038 = vmul.f32 %v5705, %v6002
  %v6039 = vmul.f32 %v5707, %v6002
  %v6040 = vmul.f32 %v5710, %v6002
  %v6041 = vmul.f32 %v5712, %v6002
  %v6042 = vmul.f32 %v5715, %v6002
  %v6043 = vmul.f32 %v5717, %v6002
  %v6044 = vmul.f32 %v5720, %v6002
  %v6045 = vmul.f32 %v5722, %v6002
  %v6046 = vmul.f32 %v5725, %v6002
  %v6047 = vmul.f32 %v5727, %v6002
  %v6048 = vmul.f32 %v5730, %v6002
  %v6049 = vmul.f32 %v5732, %v6002
  %v6050 = vmul.f32 %v5735, %v6002
  %v6051 = vmul.f32 %v5737, %v6002
  %v6052 = vmul.f32 %v5740, %v6002
  %v6053 = vmul.f32 %v5742, %v6002
  %v6054 = vmul.f32 %v5745, %v6002
  %v6055 = vmul.f32 %v5747, %v6002
  %v6056 = vmul.f32 %v5750, %v6002
  %v6057 = vmul.f32 %v5752, %v6002
  %v6058 = vmul.f32 %v5755, %v6002
  %v6059 = vmul.f32 %v5757, %v6002
  %v6060 = vmul.f32 %v5760, %v6002
  %v6061 = vmul.f32 %v5762, %v6002
  %v6062 = vmul.f32 %v5765, %v6002
  %v6063 = vmul.f32 %v5767, %v6002
  %v6064 = vmul.f32 %v5770, %v6002
  %v6065 = vmul.f32 %v5772, %v6002
  %v6066 = vmul.f32 %v5775, %v6002
  %v6067 = vmul.f32 %v5777, %v6002
  %v6069 = vperm.slane %v6000, 0
  %v6071 = vadd.f32 %v6004, %v6069
  %v6072 = vadd.f32 %v6005, %v6069
  %v6073 = vadd.f32 %v6006, %v6069
  %v6074 = vadd.f32 %v6007, %v6069
  %v6075 = vadd.f32 %v6008, %v6069
  %v6076 = vadd.f32 %v6009, %v6069
  %v6077 = vadd.f32 %v6010, %v6069
  %v6078 = vadd.f32 %v6011, %v6069
  %v6079 = vadd.f32 %v6012, %v6069
  %v6080 = vadd.f32 %v6013, %v6069
  %v6081 = vadd.f32 %v6014, %v6069
  %v6082 = vadd.f32 %v6015, %v6069
  %v6083 = vadd.f32 %v6016, %v6069
  %v6084 = vadd.f32 %v6017, %v6069
  %v6085 = vadd.f32 %v6018, %v6069
  %v6086 = vadd.f32 %v6019, %v6069
  %v6087 = vadd.f32 %v6020, %v6069
  %v6088 = vadd.f32 %v6021, %v6069
  %v6089 = vadd.f32 %v6022, %v6069
  %v6090 = vadd.f32 %v6023, %v6069
  %v6091 = vadd.f32 %v6024, %v6069
  %v6092 = vadd.f32 %v6025, %v6069
  %v6093 = vadd.f32 %v6026, %v6069
  %v6094 = vadd.f32 %v6027, %v6069
  %v6095 = vadd.f32 %v6028, %v6069
  %v6096 = vadd.f32 %v6029, %v6069
  %v6097 = vadd.f32 %v6030, %v6069
  %v6098 = vadd.f32 %v6031, %v6069
  %v6099 = vadd.f32 %v6032, %v6069
  %v6100 = vadd.f32 %v6033, %v6069
  %v6101 = vadd.f32 %v6034, %v6069
  %v6102 = vadd.f32 %v6035, %v6069
  %v6103 = vadd.f32 %v6036, %v6069
  %v6104 = vadd.f32 %v6037, %v6069
  %v6105 = vadd.f32 %v6038, %v6069
  %v6106 = vadd.f32 %v6039, %v6069
  %v6107 = vadd.f32 %v6040, %v6069
  %v6108 = vadd.f32 %v6041, %v6069
  %v6109 = vadd.f32 %v6042, %v6069
  %v6110 = vadd.f32 %v6043, %v6069
  %v6111 = vadd.f32 %v6044, %v6069
  %v6112 = vadd.f32 %v6045, %v6069
  %v6113 = vadd.f32 %v6046, %v6069
  %v6114 = vadd.f32 %v6047, %v6069
  %v6115 = vadd.f32 %v6048, %v6069
  %v6116 = vadd.f32 %v6049, %v6069
  %v6117 = vadd.f32 %v6050, %v6069
  %v6118 = vadd.f32 %v6051, %v6069
  %v6119 = vadd.f32 %v6052, %v6069
  %v6120 = vadd.f32 %v6053, %v6069
  %v6121 = vadd.f32 %v6054, %v6069
  %v6122 = vadd.f32 %v6055, %v6069
  %v6123 = vadd.f32 %v6056, %v6069
  %v6124 = vadd.f32 %v6057, %v6069
  %v6125 = vadd.f32 %v6058, %v6069
  %v6126 = vadd.f32 %v6059, %v6069
  %v6127 = vadd.f32 %v6060, %v6069
  %v6128 = vadd.f32 %v6061, %v6069
  %v6129 = vadd.f32 %v6062, %v6069
  %v6130 = vadd.f32 %v6063, %v6069
  %v6131 = vadd.f32 %v6064, %v6069
  %v6132 = vadd.f32 %v6065, %v6069
  %v6133 = vadd.f32 %v6066, %v6069
  %v6134 = vadd.f32 %v6067, %v6069
  %v6135 = vld [vmem:[%s7] sm:$0x1]
  %v6136 = vld [vmem:[%s8] sm:$0x1]
  %v6137 = vadd.f32 %v2209, %v2211
  %v6138 = vadd.f32 %v6137, %v2214
  %v6139 = vadd.f32 %v6138, %v2216
  %v6140 = vadd.f32 %v6139, %v2219
  %v6141 = vadd.f32 %v6140, %v2221
  %v6142 = vadd.f32 %v6141, %v2224
  %v6143 = vadd.f32 %v6142, %v2226
  %v6144 = vadd.f32 %v6143, %v2229
  %v6145 = vadd.f32 %v6144, %v2231
  %v6146 = vadd.f32 %v6145, %v2234
  %v6147 = vadd.f32 %v6146, %v2236
  %v6148 = vadd.f32 %v6147, %v2239
  %v6149 = vadd.f32 %v6148, %v2241
  %v6150 = vadd.f32 %v6149, %v2244
  %v6151 = vadd.f32 %v6150, %v2246
  %v6152 = vadd.f32 %v6151, %v2249
  %v6153 = vadd.f32 %v6152, %v2251
  %v6154 = vadd.f32 %v6153, %v2254
  %v6155 = vadd.f32 %v6154, %v2256
  %v6156 = vadd.f32 %v6155, %v2259
  %v6157 = vadd.f32 %v6156, %v2261
  %v6158 = vadd.f32 %v6157, %v2264
  %v6159 = vadd.f32 %v6158, %v2266
  %v6160 = vadd.f32 %v6159, %v2269
  %v6161 = vadd.f32 %v6160, %v2271
  %v6162 = vadd.f32 %v6161, %v2274
  %v6163 = vadd.f32 %v6162, %v2276
  %v6164 = vadd.f32 %v6163, %v2279
  %v6165 = vadd.f32 %v6164, %v2281
  %v6166 = vadd.f32 %v6165, %v2284
  %v6167 = vadd.f32 %v6166, %v2286
  %v6168 = vadd.f32 %v6167, %v2289
  %v6169 = vadd.f32 %v6168, %v2291
  %v6170 = vadd.f32 %v6169, %v2294
  %v6171 = vadd.f32 %v6170, %v2296
  %v6172 = vadd.f32 %v6171, %v2299
  %v6173 = vadd.f32 %v6172, %v2301
  %v6174 = vadd.f32 %v6173, %v2304
  %v6175 = vadd.f32 %v6174, %v2306
  %v6176 = vadd.f32 %v6175, %v2309
  %v6177 = vadd.f32 %v6176, %v2311
  %v6178 = vadd.f32 %v6177, %v2314
  %v6179 = vadd.f32 %v6178, %v2316
  %v6180 = vadd.f32 %v6179, %v2319
  %v6181 = vadd.f32 %v6180, %v2321
  %v6182 = vadd.f32 %v6181, %v2324
  %v6183 = vadd.f32 %v6182, %v2326
  %v6184 = vadd.f32 %v6183, %v2329
  %v6185 = vadd.f32 %v6184, %v2331
  %v6186 = vadd.f32 %v6185, %v2334
  %v6187 = vadd.f32 %v6186, %v2336
  %v6188 = vadd.f32 %v6187, %v2339
  %v6189 = vadd.f32 %v6188, %v2341
  %v6190 = vadd.f32 %v6189, %v2344
  %v6191 = vadd.f32 %v6190, %v2346
  %v6192 = vadd.f32 %v6191, %v2349
  %v6193 = vadd.f32 %v6192, %v2351
  %v6194 = vadd.f32 %v6193, %v2354
  %v6195 = vadd.f32 %v6194, %v2356
  %v6196 = vadd.f32 %v6195, %v2359
  %v6197 = vadd.f32 %v6196, %v2361
  %v6198 = vadd.f32 %v6197, %v2364
  %v6199 = vadd.f32 %v6198, %v2366
  %v6200 = vrot.slane %v6199, 4
  %v6201 = vadd.f32 %v6199, %v6200
  %v6202 = vrot.slane %v6201, 2
  %v6203 = vadd.f32 %v6201, %v6202
  %v6204 = vrot.slane %v6203, 1
  %v6205 = vadd.f32 %v6203, %v6204
  %v6206 = vmul.f32 %v2209, %v2209
  %v6207 = vmul.f32 %v2211, %v2211
  %v6208 = vmul.f32 %v2214, %v2214
  %v6209 = vmul.f32 %v2216, %v2216
  %v6210 = vmul.f32 %v2219, %v2219
  %v6211 = vmul.f32 %v2221, %v2221
  %v6212 = vmul.f32 %v2224, %v2224
  %v6213 = vmul.f32 %v2226, %v2226
  %v6214 = vmul.f32 %v2229, %v2229
  %v6215 = vmul.f32 %v2231, %v2231
  %v6216 = vmul.f32 %v2234, %v2234
  %v6217 = vmul.f32 %v2236, %v2236
  %v6218 = vmul.f32 %v2239, %v2239
  %v6219 = vmul.f32 %v2241, %v2241
  %v6220 = vmul.f32 %v2244, %v2244
  %v6221 = vmul.f32 %v2246, %v2246
  %v6222 = vmul.f32 %v2249, %v2249
  %v6223 = vmul.f32 %v2251, %v2251
  %v6224 = vmul.f32 %v2254, %v2254
  %v6225 = vmul.f32 %v2256, %v2256
  %v6226 = vmul.f32 %v2259, %v2259
  %v6227 = vmul.f32 %v2261, %v2261
  %v6228 = vmul.f32 %v2264, %v2264
  %v6229 = vmul.f32 %v2266, %v2266
  %v6230 = vmul.f32 %v2269, %v2269
  %v6231 = vmul.f32 %v2271, %v2271
  %v6232 = vmul.f32 %v2274, %v2274
  %v6233 = vmul.f32 %v2276, %v2276
  %v6234 = vmul.f32 %v2279, %v2279
  %v6235 = vmul.f32 %v2281, %v2281
  %v6236 = vmul.f32 %v2284, %v2284
  %v6237 = vmul.f32 %v2286, %v2286
  %v6238 = vmul.f32 %v2289, %v2289
  %v6239 = vmul.f32 %v2291, %v2291
  %v6240 = vmul.f32 %v2294, %v2294
  %v6241 = vmul.f32 %v2296, %v2296
  %v6242 = vmul.f32 %v2299, %v2299
  %v6243 = vmul.f32 %v2301, %v2301
  %v6244 = vmul.f32 %v2304, %v2304
  %v6245 = vmul.f32 %v2306, %v2306
  %v6246 = vmul.f32 %v2309, %v2309
  %v6247 = vmul.f32 %v2311, %v2311
  %v6248 = vmul.f32 %v2314, %v2314
  %v6249 = vmul.f32 %v2316, %v2316
  %v6250 = vmul.f32 %v2319, %v2319
  %v6251 = vmul.f32 %v2321, %v2321
  %v6252 = vmul.f32 %v2324, %v2324
  %v6253 = vmul.f32 %v2326, %v2326
  %v6254 = vmul.f32 %v2329, %v2329
  %v6255 = vmul.f32 %v2331, %v2331
  %v6256 = vmul.f32 %v2334, %v2334
  %v6257 = vmul.f32 %v2336, %v2336
  %v6258 = vmul.f32 %v2339, %v2339
  %v6259 = vmul.f32 %v2341, %v2341
  %v6260 = vmul.f32 %v2344, %v2344
  %v6261 = vmul.f32 %v2346, %v2346
  %v6262 = vmul.f32 %v2349, %v2349
  %v6263 = vmul.f32 %v2351, %v2351
  %v6264 = vmul.f32 %v2354, %v2354
  %v6265 = vmul.f32 %v2356, %v2356
  %v6266 = vmul.f32 %v2359, %v2359
  %v6267 = vmul.f32 %v2361, %v2361
  %v6268 = vmul.f32 %v2364, %v2364
  %v6269 = vmul.f32 %v2366, %v2366
  %v6270 = vadd.f32 %v6206, %v6207
  %v6271 = vadd.f32 %v6270, %v6208
  %v6272 = vadd.f32 %v6271, %v6209
  %v6273 = vadd.f32 %v6272, %v6210
  %v6274 = vadd.f32 %v6273, %v6211
  %v6275 = vadd.f32 %v6274, %v6212
  %v6276 = vadd.f32 %v6275, %v6213
  %v6277 = vadd.f32 %v6276, %v6214
  %v6278 = vadd.f32 %v6277, %v6215
  %v6279 = vadd.f32 %v6278, %v6216
  %v6280 = vadd.f32 %v6279, %v6217
  %v6281 = vadd.f32 %v6280, %v6218
  %v6282 = vadd.f32 %v6281, %v6219
  %v6283 = vadd.f32 %v6282, %v6220
  %v6284 = vadd.f32 %v6283, %v6221
  %v6285 = vadd.f32 %v6284, %v6222
  %v6286 = vadd.f32 %v6285, %v6223
  %v6287 = vadd.f32 %v6286, %v6224
  %v6288 = vadd.f32 %v6287, %v6225
  %v6289 = vadd.f32 %v6288, %v6226
  %v6290 = vadd.f32 %v6289, %v6227
  %v6291 = vadd.f32 %v6290, %v6228
  %v6292 = vadd.f32 %v6291, %v6229
  %v6293 = vadd.f32 %v6292, %v6230
  %v6294 = vadd.f32 %v6293, %v6231
  %v6295 = vadd.f32 %v6294, %v6232
  %v6296 = vadd.f32 %v6295, %v6233
  %v6297 = vadd.f32 %v6296, %v6234
  %v6298 = vadd.f32 %v6297, %v6235
  %v6299 = vadd.f32 %v6298, %v6236
  %v6300 = vadd.f32 %v6299, %v6237
  %v6301 = vadd.f32 %v6300, %v6238
  %v6302 = vadd.f32 %v6301, %v6239
  %v6303 = vadd.f32 %v6302, %v6240
  %v6304 = vadd.f32 %v6303, %v6241
  %v6305 = vadd.f32 %v6304, %v6242
  %v6306 = vadd.f32 %v6305, %v6243
  %v6307 = vadd.f32 %v6306, %v6244
  %v6308 = vadd.f32 %v6307, %v6245
  %v6309 = vadd.f32 %v6308, %v6246
  %v6310 = vadd.f32 %v6309, %v6247
  %v6311 = vadd.f32 %v6310, %v6248
  %v6312 = vadd.f32 %v6311, %v6249
  %v6313 = vadd.f32 %v6312, %v6250
  %v6314 = vadd.f32 %v6313, %v6251
  %v6315 = vadd.f32 %v6314, %v6252
  %v6316 = vadd.f32 %v6315, %v6253
  %v6317 = vadd.f32 %v6316, %v6254
  %v6318 = vadd.f32 %v6317, %v6255
  %v6319 = vadd.f32 %v6318, %v6256
  %v6320 = vadd.f32 %v6319, %v6257
  %v6321 = vadd.f32 %v6320, %v6258
  %v6322 = vadd.f32 %v6321, %v6259
  %v6323 = vadd.f32 %v6322, %v6260
  %v6324 = vadd.f32 %v6323, %v6261
  %v6325 = vadd.f32 %v6324, %v6262
  %v6326 = vadd.f32 %v6325, %v6263
  %v6327 = vadd.f32 %v6326, %v6264
  %v6328 = vadd.f32 %v6327, %v6265
  %v6329 = vadd.f32 %v6328, %v6266
  %v6330 = vadd.f32 %v6329, %v6267
  %v6331 = vadd.f32 %v6330, %v6268
  %v6332 = vadd.f32 %v6331, %v6269
  %v6333 = vrot.slane %v6332, 4
  %v6334 = vadd.f32 %v6332, %v6333
  %v6335 = vrot.slane %v6334, 2
  %v6336 = vadd.f32 %v6334, %v6335
  %v6337 = vrot.slane %v6336, 1
  %v6338 = vadd.f32 %v6336, %v6337
  %v6339 = vmul.f32 %v6205, 0.001953125
  %v6340 = vmul.f32 %v6338, 0.001953125
  %v6341 = vmul.f32 %v6339, %v6339
  %v6342 = vsub.f32 %v6340, %v6341
  %v6343 = vadd.f32 %v6342, 1e-05
  %v6344 = vrsqrt.pop %v6343
  %v6345 = vmul.f32 %v6344, %v6343
  %v6346 = vmul.f32 %v6345, %v6344
  %v6347 = vmul.f32 0.5, %v6346
  %v6348 = vsub.f32 1.5, %v6347
  %v6349 = vmul.f32 %v6344, %v6348
  %vm6350 = vweird.f32 %v6343
  %vm6351 = vweird.f32 %v6344
  %vm6352 = vmor %vm6350, %vm6351
  %v6353 = vsel %vm6352, %v6344, %v6349
  %v6354 = vmul.f32 %v6135, %v6353
  %v6355 = vmul.f32 %v6339, %v6354
  %v6356 = vsub.f32 %v6136, %v6355
  %v6358 = vperm.slane %v6354, 0
  %v6360 = vmul.f32 %v2209, %v6358
  %v6361 = vmul.f32 %v2211, %v6358
  %v6362 = vmul.f32 %v2214, %v6358
  %v6363 = vmul.f32 %v2216, %v6358
  %v6364 = vmul.f32 %v2219, %v6358
  %v6365 = vmul.f32 %v2221, %v6358
  %v6366 = vmul.f32 %v2224, %v6358
  %v6367 = vmul.f32 %v2226, %v6358
  %v6368 = vmul.f32 %v2229, %v6358
  %v6369 = vmul.f32 %v2231, %v6358
  %v6370 = vmul.f32 %v2234, %v6358
  %v6371 = vmul.f32 %v2236, %v6358
  %v6372 = vmul.f32 %v2239, %v6358
  %v6373 = vmul.f32 %v2241, %v6358
  %v6374 = vmul.f32 %v2244, %v6358
  %v6375 = vmul.f32 %v2246, %v6358
  %v6376 = vmul.f32 %v2249, %v6358
  %v6377 = vmul.f32 %v2251, %v6358
  %v6378 = vmul.f32 %v2254, %v6358
  %v6379 = vmul.f32 %v2256, %v6358
  %v6380 = vmul.f32 %v2259, %v6358
  %v6381 = vmul.f32 %v2261, %v6358
  %v6382 = vmul.f32 %v2264, %v6358
  %v6383 = vmul.f32 %v2266, %v6358
  %v6384 = vmul.f32 %v2269, %v6358
  %v6385 = vmul.f32 %v2271, %v6358
  %v6386 = vmul.f32 %v2274, %v6358
  %v6387 = vmul.f32 %v2276, %v6358
  %v6388 = vmul.f32 %v2279, %v6358
  %v6389 = vmul.f32 %v2281, %v6358
  %v6390 = vmul.f32 %v2284, %v6358
  %v6391 = vmul.f32 %v2286, %v6358
  %v6392 = vmul.f32 %v2289, %v6358
  %v6393 = vmul.f32 %v2291, %v6358
  %v6394 = vmul.f32 %v2294, %v6358
  %v6395 = vmul.f32 %v2296, %v6358
  %v6396 = vmul.f32 %v2299, %v6358
  %v6397 = vmul.f32 %v2301, %v6358
  %v6398 = vmul.f32 %v2304, %v6358
  %v6399 = vmul.f32 %v2306, %v6358
  %v6400 = vmul.f32 %v2309, %v6358
  %v6401 = vmul.f32 %v2311, %v6358
  %v6402 = vmul.f32 %v2314, %v6358
  %v6403 = vmul.f32 %v2316, %v6358
  %v6404 = vmul.f32 %v2319, %v6358
  %v6405 = vmul.f32 %v2321, %v6358
  %v6406 = vmul.f32 %v2324, %v6358
  %v6407 = vmul.f32 %v2326, %v6358
  %v6408 = vmul.f32 %v2329, %v6358
  %v6409 = vmul.f32 %v2331, %v6358
  %v6410 = vmul.f32 %v2334, %v6358
  %v6411 = vmul.f32 %v2336, %v6358
  %v6412 = vmul.f32 %v2339, %v6358
  %v6413 = vmul.f32 %v2341, %v6358
  %v6414 = vmul.f32 %v2344, %v6358
  %v6415 = vmul.f32 %v2346, %v6358
  %v6416 = vmul.f32 %v2349, %v6358
  %v6417 = vmul.f32 %v2351, %v6358
  %v6418 = vmul.f32 %v2354, %v6358
  %v6419 = vmul.f32 %v2356, %v6358
  %v6420 = vmul.f32 %v2359, %v6358
  %v6421 = vmul.f32 %v2361, %v6358
  %v6422 = vmul.f32 %v2364, %v6358
  %v6423 = vmul.f32 %v2366, %v6358
  %v6425 = vperm.slane %v6356, 0
  %v6427 = vadd.f32 %v6360, %v6425
  %v6428 = vadd.f32 %v6361, %v6425
  %v6429 = vadd.f32 %v6362, %v6425
  %v6430 = vadd.f32 %v6363, %v6425
  %v6431 = vadd.f32 %v6364, %v6425
  %v6432 = vadd.f32 %v6365, %v6425
  %v6433 = vadd.f32 %v6366, %v6425
  %v6434 = vadd.f32 %v6367, %v6425
  %v6435 = vadd.f32 %v6368, %v6425
  %v6436 = vadd.f32 %v6369, %v6425
  %v6437 = vadd.f32 %v6370, %v6425
  %v6438 = vadd.f32 %v6371, %v6425
  %v6439 = vadd.f32 %v6372, %v6425
  %v6440 = vadd.f32 %v6373, %v6425
  %v6441 = vadd.f32 %v6374, %v6425
  %v6442 = vadd.f32 %v6375, %v6425
  %v6443 = vadd.f32 %v6376, %v6425
  %v6444 = vadd.f32 %v6377, %v6425
  %v6445 = vadd.f32 %v6378, %v6425
  %v6446 = vadd.f32 %v6379, %v6425
  %v6447 = vadd.f32 %v6380, %v6425
  %v6448 = vadd.f32 %v6381, %v6425
  %v6449 = vadd.f32 %v6382, %v6425
  %v6450 = vadd.f32 %v6383, %v6425
  %v6451 = vadd.f32 %v6384, %v6425
  %v6452 = vadd.f32 %v6385, %v6425
  %v6453 = vadd.f32 %v6386, %v6425
  %v6454 = vadd.f32 %v6387, %v6425
  %v6455 = vadd.f32 %v6388, %v6425
  %v6456 = vadd.f32 %v6389, %v6425
  %v6457 = vadd.f32 %v6390, %v6425
  %v6458 = vadd.f32 %v6391, %v6425
  %v6459 = vadd.f32 %v6392, %v6425
  %v6460 = vadd.f32 %v6393, %v6425
  %v6461 = vadd.f32 %v6394, %v6425
  %v6462 = vadd.f32 %v6395, %v6425
  %v6463 = vadd.f32 %v6396, %v6425
  %v6464 = vadd.f32 %v6397, %v6425
  %v6465 = vadd.f32 %v6398, %v6425
  %v6466 = vadd.f32 %v6399, %v6425
  %v6467 = vadd.f32 %v6400, %v6425
  %v6468 = vadd.f32 %v6401, %v6425
  %v6469 = vadd.f32 %v6402, %v6425
  %v6470 = vadd.f32 %v6403, %v6425
  %v6471 = vadd.f32 %v6404, %v6425
  %v6472 = vadd.f32 %v6405, %v6425
  %v6473 = vadd.f32 %v6406, %v6425
  %v6474 = vadd.f32 %v6407, %v6425
  %v6475 = vadd.f32 %v6408, %v6425
  %v6476 = vadd.f32 %v6409, %v6425
  %v6477 = vadd.f32 %v6410, %v6425
  %v6478 = vadd.f32 %v6411, %v6425
  %v6479 = vadd.f32 %v6412, %v6425
  %v6480 = vadd.f32 %v6413, %v6425
  %v6481 = vadd.f32 %v6414, %v6425
  %v6482 = vadd.f32 %v6415, %v6425
  %v6483 = vadd.f32 %v6416, %v6425
  %v6484 = vadd.f32 %v6417, %v6425
  %v6485 = vadd.f32 %v6418, %v6425
  %v6486 = vadd.f32 %v6419, %v6425
  %v6487 = vadd.f32 %v6420, %v6425
  %v6488 = vadd.f32 %v6421, %v6425
  %v6489 = vadd.f32 %v6422, %v6425
  %v6490 = vadd.f32 %v6423, %v6425
  %v6491 = vadd.f32 %v6071, %v6427
  %v6492 = vadd.f32 %v6072, %v6428
  %v6493 = vadd.f32 %v6073, %v6429
  %v6494 = vadd.f32 %v6074, %v6430
  %v6495 = vadd.f32 %v6075, %v6431
  %v6496 = vadd.f32 %v6076, %v6432
  %v6497 = vadd.f32 %v6077, %v6433
  %v6498 = vadd.f32 %v6078, %v6434
  %v6499 = vadd.f32 %v6079, %v6435
  %v6500 = vadd.f32 %v6080, %v6436
  %v6501 = vadd.f32 %v6081, %v6437
  %v6502 = vadd.f32 %v6082, %v6438
  %v6503 = vadd.f32 %v6083, %v6439
  %v6504 = vadd.f32 %v6084, %v6440
  %v6505 = vadd.f32 %v6085, %v6441
  %v6506 = vadd.f32 %v6086, %v6442
  %v6507 = vadd.f32 %v6087, %v6443
  %v6508 = vadd.f32 %v6088, %v6444
  %v6509 = vadd.f32 %v6089, %v6445
  %v6510 = vadd.f32 %v6090, %v6446
  %v6511 = vadd.f32 %v6091, %v6447
  %v6512 = vadd.f32 %v6092, %v6448
  %v6513 = vadd.f32 %v6093, %v6449
  %v6514 = vadd.f32 %v6094, %v6450
  %v6515 = vadd.f32 %v6095, %v6451
  %v6516 = vadd.f32 %v6096, %v6452
  %v6517 = vadd.f32 %v6097, %v6453
  %v6518 = vadd.f32 %v6098, %v6454
  %v6519 = vadd.f32 %v6099, %v6455
  %v6520 = vadd.f32 %v6100, %v6456
  %v6521 = vadd.f32 %v6101, %v6457
  %v6522 = vadd.f32 %v6102, %v6458
  %v6523 = vadd.f32 %v6103, %v6459
  %v6524 = vadd.f32 %v6104, %v6460
  %v6525 = vadd.f32 %v6105, %v6461
  %v6526 = vadd.f32 %v6106, %v6462
  %v6527 = vadd.f32 %v6107, %v6463
  %v6528 = vadd.f32 %v6108, %v6464
  %v6529 = vadd.f32 %v6109, %v6465
  %v6530 = vadd.f32 %v6110, %v6466
  %v6531 = vadd.f32 %v6111, %v6467
  %v6532 = vadd.f32 %v6112, %v6468
  %v6533 = vadd.f32 %v6113, %v6469
  %v6534 = vadd.f32 %v6114, %v6470
  %v6535 = vadd.f32 %v6115, %v6471
  %v6536 = vadd.f32 %v6116, %v6472
  %v6537 = vadd.f32 %v6117, %v6473
  %v6538 = vadd.f32 %v6118, %v6474
  %v6539 = vadd.f32 %v6119, %v6475
  %v6540 = vadd.f32 %v6120, %v6476
  %v6541 = vadd.f32 %v6121, %v6477
  %v6542 = vadd.f32 %v6122, %v6478
  %v6543 = vadd.f32 %v6123, %v6479
  %v6544 = vadd.f32 %v6124, %v6480
  %v6545 = vadd.f32 %v6125, %v6481
  %v6546 = vadd.f32 %v6126, %v6482
  %v6547 = vadd.f32 %v6127, %v6483
  %v6548 = vadd.f32 %v6128, %v6484
  %v6549 = vadd.f32 %v6129, %v6485
  %v6550 = vadd.f32 %v6130, %v6486
  %v6551 = vadd.f32 %v6131, %v6487
  %v6552 = vadd.f32 %v6132, %v6488
  %v6553 = vadd.f32 %v6133, %v6489
  %v6554 = vadd.f32 %v6134, %v6490
  %v6555 = vmax.f32 %v6491, 0.0
  %v6556 = vmax.f32 %v6492, 0.0
  %v6557 = vmax.f32 %v6493, 0.0
  %v6558 = vmax.f32 %v6494, 0.0
  %v6559 = vmax.f32 %v6495, 0.0
  %v6560 = vmax.f32 %v6496, 0.0
  %v6561 = vmax.f32 %v6497, 0.0
  %v6562 = vmax.f32 %v6498, 0.0
  %v6563 = vmax.f32 %v6499, 0.0
  %v6564 = vmax.f32 %v6500, 0.0
  %v6565 = vmax.f32 %v6501, 0.0
  %v6566 = vmax.f32 %v6502, 0.0
  %v6567 = vmax.f32 %v6503, 0.0
  %v6568 = vmax.f32 %v6504, 0.0
  %v6569 = vmax.f32 %v6505, 0.0
  %v6570 = vmax.f32 %v6506, 0.0
  %v6571 = vmax.f32 %v6507, 0.0
  %v6572 = vmax.f32 %v6508, 0.0
  %v6573 = vmax.f32 %v6509, 0.0
  %v6574 = vmax.f32 %v6510, 0.0
  %v6575 = vmax.f32 %v6511, 0.0
  %v6576 = vmax.f32 %v6512, 0.0
  %v6577 = vmax.f32 %v6513, 0.0
  %v6578 = vmax.f32 %v6514, 0.0
  %v6579 = vmax.f32 %v6515, 0.0
  %v6580 = vmax.f32 %v6516, 0.0
  %v6581 = vmax.f32 %v6517, 0.0
  %v6582 = vmax.f32 %v6518, 0.0
  %v6583 = vmax.f32 %v6519, 0.0
  %v6584 = vmax.f32 %v6520, 0.0
  %v6585 = vmax.f32 %v6521, 0.0
  %v6586 = vmax.f32 %v6522, 0.0
  %v6587 = vmax.f32 %v6523, 0.0
  %v6588 = vmax.f32 %v6524, 0.0
  %v6589 = vmax.f32 %v6525, 0.0
  %v6590 = vmax.f32 %v6526, 0.0
  %v6591 = vmax.f32 %v6527, 0.0
  %v6592 = vmax.f32 %v6528, 0.0
  %v6593 = vmax.f32 %v6529, 0.0
  %v6594 = vmax.f32 %v6530, 0.0
  %v6595 = vmax.f32 %v6531, 0.0
  %v6596 = vmax.f32 %v6532, 0.0
  %v6597 = vmax.f32 %v6533, 0.0
  %v6598 = vmax.f32 %v6534, 0.0
  %v6599 = vmax.f32 %v6535, 0.0
  %v6600 = vmax.f32 %v6536, 0.0
  %v6601 = vmax.f32 %v6537, 0.0
  %v6602 = vmax.f32 %v6538, 0.0
  %v6603 = vmax.f32 %v6539, 0.0
  %v6604 = vmax.f32 %v6540, 0.0
  %v6605 = vmax.f32 %v6541, 0.0
  %v6606 = vmax.f32 %v6542, 0.0
  %v6607 = vmax.f32 %v6543, 0.0
  %v6608 = vmax.f32 %v6544, 0.0
  %v6609 = vmax.f32 %v6545, 0.0
  %v6610 = vmax.f32 %v6546, 0.0
  %v6611 = vmax.f32 %v6547, 0.0
  %v6612 = vmax.f32 %v6548, 0.0
  %v6613 = vmax.f32 %v6549, 0.0
  %v6614 = vmax.f32 %v6550, 0.0
  %v6615 = vmax.f32 %v6551, 0.0
  %v6616 = vmax.f32 %v6552, 0.0
  %v6617 = vmax.f32 %v6553, 0.0
  %v6618 = vmax.f32 %v6554, 0.0
  %6619 = vst [vmem:[%s9] sm:$0xff] %v6555
  %6620 = vst [vmem:[%s9 + $0x8] sm:$0xff] %v6556
  %6621 = vst [vmem:[%s9 + $0x10] sm:$0xff] %v6557
  %6622 = vst [vmem:[%s9 + $0x18] sm:$0xff] %v6558
  %6623 = vst [vmem:[%s9 + $0x20] sm:$0xff] %v6559
  %6624 = vst [vmem:[%s9 + $0x28] sm:$0xff] %v6560
  %6625 = vst [vmem:[%s9 + $0x30] sm:$0xff] %v6561
  %6626 = vst [vmem:[%s9 + $0x38] sm:$0xff] %v6562
  %6627 = vst [vmem:[%s9 + $0x40] sm:$0xff] %v6563
  %6628 = vst [vmem:[%s9 + $0x48] sm:$0xff] %v6564
  %6629 = vst [vmem:[%s9 + $0x50] sm:$0xff] %v6565
  %6630 = vst [vmem:[%s9 + $0x58] sm:$0xff] %v6566
  %6631 = vst [vmem:[%s9 + $0x60] sm:$0xff] %v6567
  %6632 = vst [vmem:[%s9 + $0x68] sm:$0xff] %v6568
  %6633 = vst [vmem:[%s9 + $0x70] sm:$0xff] %v6569
  %6634 = vst [vmem:[%s9 + $0x78] sm:$0xff] %v6570
  %6635 = vst [vmem:[%s9 + $0x80] sm:$0xff] %v6571
  %6636 = vst [vmem:[%s9 + $0x88] sm:$0xff] %v6572
  %6637 = vst [vmem:[%s9 + $0x90] sm:$0xff] %v6573
  %6638 = vst [vmem:[%s9 + $0x98] sm:$0xff] %v6574
  %6639 = vst [vmem:[%s9 + $0xa0] sm:$0xff] %v6575
  %6640 = vst [vmem:[%s9 + $0xa8] sm:$0xff] %v6576
  %6641 = vst [vmem:[%s9 + $0xb0] sm:$0xff] %v6577
  %6642 = vst [vmem:[%s9 + $0xb8] sm:$0xff] %v6578
  %6643 = vst [vmem:[%s9 + $0xc0] sm:$0xff] %v6579
  %6644 = vst [vmem:[%s9 + $0xc8] sm:$0xff] %v6580
  %6645 = vst [vmem:[%s9 + $0xd0] sm:$0xff] %v6581
  %6646 = vst [vmem:[%s9 + $0xd8] sm:$0xff] %v6582
  %6647 = vst [vmem:[%s9 + $0xe0] sm:$0xff] %v6583
  %6648 = vst [vmem:[%s9 + $0xe8] sm:$0xff] %v6584
  %6649 = vst [vmem:[%s9 + $0xf0] sm:$0xff] %v6585
  %6650 = vst [vmem:[%s9 + $0xf8] sm:$0xff] %v6586
  %6651 = vst [vmem:[%s9 + $0x100] sm:$0xff] %v6587
  %6652 = vst [vmem:[%s9 + $0x108] sm:$0xff] %v6588
  %6653 = vst [vmem:[%s9 + $0x110] sm:$0xff] %v6589
  %6654 = vst [vmem:[%s9 + $0x118] sm:$0xff] %v6590
  %6655 = vst [vmem:[%s9 + $0x120] sm:$0xff] %v6591
  %6656 = vst [vmem:[%s9 + $0x128] sm:$0xff] %v6592
  %6657 = vst [vmem:[%s9 + $0x130] sm:$0xff] %v6593
  %6658 = vst [vmem:[%s9 + $0x138] sm:$0xff] %v6594
  %6659 = vst [vmem:[%s9 + $0x140] sm:$0xff] %v6595
  %6660 = vst [vmem:[%s9 + $0x148] sm:$0xff] %v6596
  %6661 = vst [vmem:[%s9 + $0x150] sm:$0xff] %v6597
  %6662 = vst [vmem:[%s9 + $0x158] sm:$0xff] %v6598
  %6663 = vst [vmem:[%s9 + $0x160] sm:$0xff] %v6599
  %6664 = vst [vmem:[%s9 + $0x168] sm:$0xff] %v6600
  %6665 = vst [vmem:[%s9 + $0x170] sm:$0xff] %v6601
  %6666 = vst [vmem:[%s9 + $0x178] sm:$0xff] %v6602
  %6667 = vst [vmem:[%s9 + $0x180] sm:$0xff] %v6603
  %6668 = vst [vmem:[%s9 + $0x188] sm:$0xff] %v6604
  %6669 = vst [vmem:[%s9 + $0x190] sm:$0xff] %v6605
  %6670 = vst [vmem:[%s9 + $0x198] sm:$0xff] %v6606
  %6671 = vst [vmem:[%s9 + $0x1a0] sm:$0xff] %v6607
  %6672 = vst [vmem:[%s9 + $0x1a8] sm:$0xff] %v6608
  %6673 = vst [vmem:[%s9 + $0x1b0] sm:$0xff] %v6609
  %6674 = vst [vmem:[%s9 + $0x1b8] sm:$0xff] %v6610
  %6675 = vst [vmem:[%s9 + $0x1c0] sm:$0xff] %v6611
  %6676 = vst [vmem:[%s9 + $0x1c8] sm:$0xff] %v6612
  %6677 = vst [vmem:[%s9 + $0x1d0] sm:$0xff] %v6613
  %6678 = vst [vmem:[%s9 + $0x1d8] sm:$0xff] %v6614
  %6679 = vst [vmem:[%s9 + $0x1e0] sm:$0xff] %v6615
  %6680 = vst [vmem:[%s9 + $0x1e8] sm:$0xff] %v6616
  %6681 = vst [vmem:[%s9 + $0x1f0] sm:$0xff] %v6617
  %6682 = vst [vmem:[%s9 + $0x1f8] sm:$0xff] %v6618
  // Predicated region
  $region38: #{basic_block_res_nhwc.1} parent=0 // pred_check
    _
  $region39: #{basic_block_res_nhwc.1} parent=0 // pred_check_branch
    %6684 = sbr.rel (0) target = $region41
  $region40: #{basic_block_res_nhwc.1} parent=0 // pred_region
    _
  $region41: #{basic_block_res_nhwc.1} parent=0 // pred_fallthru
    _
  // Predicated region
  $region42: #{basic_block_res_nhwc.1} parent=0 // pred_check
    _
  $region43: #{basic_block_res_nhwc.1} parent=0 // pred_check_branch
    %6686 = sbr.rel (0) target = $region45
  $region44: #{basic_block_res_nhwc.1} parent=0 // pred_region
    _
  $region45: #{basic_block_res_nhwc.1} parent=0 // pred_fallthru
    _

</llo_original>
